<compile_context>
chip_gen: v7x
topology: tpu7x:2x2x1
jax: 0.10.0
libtpu: 0.0.40
codegen_flags: <defaults>
</compile_context>

<pallas_src>
import functools

import jax
import jax.numpy as jnp
from jax import lax
from jax.experimental import pallas as pl
from jax.experimental.pallas import tpu as pltpu

_COL0 = 8  # left zero-margin inside every padded buffer (sublane-aligned interior)


# ----------------------------------------------------------------------------
# Fused Pallas kernel
# ----------------------------------------------------------------------------
def _im2col_patch(load_tap, nb, h, w):
    """(nb*h*w, 9*C) bf16 im2col patch for a 3x3 'same' conv.

    load_tap(kh, kw) -> (nb, h, w, C) window read from a zero-padded buffer.
    Each tap is cast to bf16 *before* the lane concat (halves concat traffic and
    the live-vreg footprint vs casting the concatenated f32 patch).
    """
    cols = []
    for kh in range(3):
        for kw in range(3):
            tap = load_tap(kh, kw)
            cols.append(tap.reshape(nb * h * w, tap.shape[-1]).astype(jnp.bfloat16))
    return jnp.concatenate(cols, axis=-1)


def _fused_net_kernel(xp_ref, w0_ref, b0_ref, w1_ref, b1_ref,
                      w2a_ref, w2b_ref, b2_ref, wl_ref, bl_ref,
                      y_ref, ck_ref, s1, s_sc, *, nb, h, w):
    """NB batch elements of the whole Network graph, VMEM-resident end-to-end.

    xp_ref      : (nb, h+2, wpad, Cin) zero-padded NHWC input, interior cols
                  [COL0, COL0+w)
    w0/w1       : (9*C, c1) bf16 im2col conv weights; w2a/w2b : (9*c1, c2) bf16
                  halves of conv2's weight (a_sc half / a0 half); b* : f32 biases
    wl_ref      : (c2, h*w, out) f32 head weight (NCHW flatten folded into layout)
    y_ref       : (nb, 1, out) output;  ck_ref : (nb*h*w, c1) checkpoint (conv0 out)
    s1, s_sc    : (nb, h+2, wpad, c1) f32 padded scratch for a0 / a_sc
    """
    col0 = _COL0
    c1 = w0_ref.shape[1]
    c2 = w2a_ref.shape[1]
    hw = h * w

    def tap(ref, kh, kw):
        return ref[:, kh:kh + h, col0 - 1 + kw:col0 - 1 + kw + w, :]

    # Zero ONLY the halo strips the 3x3 taps read (row 0, row h+1, col col0-1,
    # col col0+w).  Done every grid step: with dimension_semantics=("parallel",)
    # the grid may be split across TensorCores, each with its own scratch, so a
    # program_id==0-gated zero would leave the second core's halo uninitialised.
    # The interior [1:h+1, col0:col0+w) is fully overwritten below every step.
    zrow = jnp.zeros((nb, 1, s1.shape[2], c1), jnp.float32)
    zcol = jnp.zeros((nb, h, 1, c1), jnp.float32)
    for s in (s1, s_sc):
        s[:, 0:1, :, :] = zrow
        s[:, h + 1:h + 2, :, :] = zrow
        s[:, 1:h + 1, col0 - 1:col0, :] = zcol
        s[:, 1:h + 1, col0 + w:col0 + w + 1, :] = zcol

    # ---- layer 0: convolutional (Cin -> c1, 3x3 same, ReLU) ------------------
    p_x = _im2col_patch(lambda kh, kw: tap(xp_ref, kh, kw), nb, h, w)
    a0 = jnp.maximum(
        jnp.dot(p_x, w0_ref[...], preferred_element_type=jnp.float32) + b0_ref[...],
        0.0)                                                        # (nb*hw, c1)

    # ---- layer 1: checkpoint (self.checkpoints.append(x)) --------------------
    ck_ref[...] = a0

    # ---- layer 2: convolutional (c1 -> c1, ReLU) ------------------------------
    s1[:, 1:h + 1, col0:col0 + w, :] = a0.reshape(nb, h, w, c1)
    p_a0 = _im2col_patch(lambda kh, kw: tap(s1, kh, kw), nb, h, w)  # reused below
    a1 = jnp.maximum(
        jnp.dot(p_a0, w1_ref[...], preferred_element_type=jnp.float32) + b1_ref[...],
        0.0)                                                        # (nb*hw, c1)

    # ---- layer 3: shortcut (x = x + checkpoints[0]) ---------------------------
    a_sc = a1 + a0

    # ---- layers 4+5: concatenate + conv (2*c1 -> c2, ReLU), concat-free -------
    # conv2(cat(a_sc, a0)) == im2col(a_sc) @ w2a + im2col(a0) @ w2b ; p_a0 is
    # already built, so no channel concat and no second a0 scratch are needed.
    s_sc[:, 1:h + 1, col0:col0 + w, :] = a_sc.reshape(nb, h, w, c1)
    p_sc = _im2col_patch(lambda kh, kw: tap(s_sc, kh, kw), nb, h, w)
    a2 = jnp.maximum(
        jnp.dot(p_sc, w2a_ref[...], preferred_element_type=jnp.float32)
        + jnp.dot(p_a0, w2b_ref[...], preferred_element_type=jnp.float32)
        + b2_ref[...],
        0.0)                                                        # (nb*hw, c2)

    # ---- layers 6 + 7: flatten (NCHW order) + linear head ---------------------
    # wl_ref[c, p, o] == wl_canonical[c*h*w + p, o], so the NCHW flatten is folded
    # into the weight layout.  Kept as a small c2-step VPU loop (see file header).
    out_dim = wl_ref.shape[2]
    a2r = a2.reshape(nb, hw, c2)
    m = jnp.zeros((nb, hw, out_dim), jnp.float32)
    for c in range(c2):
        m = m + a2r[:, :, c:c + 1] * wl_ref[c][None, :, :]
    y_ref[:, 0, :] = jnp.sum(m, axis=1) + bl_ref[...]


def _grid_steps(n):
    """Grid steps: one per available TensorCore (capped at the batch size)."""
    try:
        kind = jax.devices()[0].device_kind.lower()
    except Exception:  # pragma: no cover - defensive
        kind = ""
    single_tc = any(t in kind for t in ("v2", "v3", "v5 lite", "v5e", "v6 lite", "v6e"))
    steps = 1 if single_tc else min(n, 2)   # megacore (v4/v5p/v7x/unknown): 2 steps
    while steps > 1 and n % steps:
        steps -= 1
    return max(steps, 1)


def _fused_network_call(xp, w0r, b0, w1r, b1, w2a, w2b, b2, wl3, bl, *,
                        H, W, out_dim):
    N, hpad, wpad, Cin = xp.shape
    c1 = w0r.shape[1]
    c2 = w2a.shape[1]
    hw = H * W
    steps = _grid_steps(N)
    nb = N // steps

    flops = (2 * N * hw * 9 * (Cin * c1 + c1 * c1 + 2 * c1 * c2)
             + 2 * N * hw * c2 * out_dim)
    bytes_accessed = int(xp.size * 4
                         + (w0r.size + w1r.size + w2a.size + w2b.size) * 2
                         + (wl3.size + bl.size + b0.size + b1.size + b2.size) * 4
                         + N * out_dim * 4 + N * hw * c1 * 4)

    kernel = functools.partial(_fused_net_kernel, nb=nb, h=H, w=W)
    y, ck = pl.pallas_call(
        kernel,
        out_shape=(jax.ShapeDtypeStruct((N, 1, out_dim), jnp.float32),
                   jax.ShapeDtypeStruct((N * hw, c1), jnp.float32)),
        grid=(steps,),
        in_specs=[
            pl.BlockSpec((nb, hpad, wpad, Cin), lambda g: (g, 0, 0, 0)),
            pl.BlockSpec((9 * Cin, c1), lambda g: (0, 0)),
            pl.BlockSpec((1, c1), lambda g: (0, 0)),
            pl.BlockSpec((9 * c1, c1), lambda g: (0, 0)),
            pl.BlockSpec((1, c1), lambda g: (0, 0)),
            pl.BlockSpec((9 * c1, c2), lambda g: (0, 0)),
            pl.BlockSpec((9 * c1, c2), lambda g: (0, 0)),
            pl.BlockSpec((1, c2), lambda g: (0, 0)),
            pl.BlockSpec((c2, hw, out_dim), lambda g: (0, 0, 0)),
            pl.BlockSpec((1, out_dim), lambda g: (0, 0)),
        ],
        out_specs=(pl.BlockSpec((nb, 1, out_dim), lambda g: (g, 0, 0)),
                   pl.BlockSpec((nb * hw, c1), lambda g: (g, 0))),
        scratch_shapes=[pltpu.VMEM((nb, H + 2, wpad, c1), jnp.float32),
                        pltpu.VMEM((nb, H + 2, wpad, c1), jnp.float32)],
        compiler_params=pltpu.CompilerParams(dimension_semantics=("parallel",)),
        cost_estimate=pl.CostEstimate(flops=int(flops), transcendentals=0,
                                      bytes_accessed=bytes_accessed),
    )(xp, w0r, b0, w1r, b1, w2a, w2b, b2, wl3, bl)
    return y[:, 0, :], ck


@functools.partial(jax.jit, static_argnames=("H", "W", "out_dim"))
def _fused_forward(x_nchw, kparams, *, H, W, out_dim):
    """Host glue (one transpose + one pad) + the fused kernel, compiled together."""
    w0r, b0, w1r, b1, w2a, w2b, b2, wl3, bl = kparams
    x_nhwc = jnp.transpose(x_nchw, (0, 2, 3, 1))
    xp = jnp.pad(x_nhwc, ((0, 0), (1, 1), (_COL0, _COL0), (0, 0)))
    y, ck = _fused_network_call(xp, w0r, b0, w1r, b1, w2a, w2b, b2, wl3, bl,
                                H=H, W=W, out_dim=out_dim)
    c1 = w0r.shape[1]
    ck_nchw = jnp.transpose(ck.reshape(-1, H, W, c1), (0, 3, 1, 2))
    return y, ck_nchw


# ----------------------------------------------------------------------------
# Reference (pure-JAX) per-layer ops, mirroring the PyTorch modules
# ----------------------------------------------------------------------------
def _conv3x3_ref(x_nchw, w_hwio, b, relu=True):
    y = lax.conv_general_dilated(
        x_nchw.astype(jnp.bfloat16), w_hwio.astype(jnp.bfloat16),
        window_strides=(1, 1), padding=((1, 1), (1, 1)),
        dimension_numbers=('NCHW', 'HWIO', 'NCHW'),
        preferred_element_type=jnp.float32)
    y = y + b.reshape(1, -1, 1, 1)
    return jnp.maximum(y, 0.0) if relu else y


def _concatenate(layer, x, outputs):
    """Same dim convention as netloader._concatenate (dim>=0 skips batch)."""
    if 'dim' in layer and layer['dim'] >= 0:
        dim = layer['dim'] + 1
    elif 'dim' in layer:
        dim = layer['dim']
    else:
        dim = 1
    return jnp.concatenate((x, outputs[layer['layer']]), axis=dim)


# ----------------------------------------------------------------------------
# Network (mirror of netloader Network)
# ----------------------------------------------------------------------------
class Network:
    """JAX/Pallas re-implementation of netloader Network.

    The config file is replaced by an in-script synthetic layer list with the same
    layer-dict schema the PyTorch forward() consumes.  forward() runs the whole graph
    as ONE fused Pallas TPU kernel; forward_reference() is the literal per-layer loop.
    """

    def __init__(self, in_shape, out_shape, key):
        self.layer_num = None
        self.group = 0
        self.latent_mse_weight = 1e-2
        self.kl_loss_weight = 1e-1
        self.kl_loss = jnp.float32(0.0)
        self.checkpoints = []
        self._checkpoints = False  # outputs of every layer are kept

        C, H, W = in_shape
        out_dim = out_shape[0]
        c1, c2 = 8, 4
        self._dims = (C, H, W, c1, c2, out_dim)
        keys = jax.random.split(key, 8)

        def winit(k, shape, scale=0.1):
            return scale * jax.random.normal(k, shape, dtype=jnp.float32)

        # Canonical (PyTorch-convention) parameters.
        w0 = winit(keys[0], (3, 3, C, c1));       b0 = winit(keys[1], (1, c1))
        w1 = winit(keys[2], (3, 3, c1, c1));      b1 = winit(keys[3], (1, c1))
        w2 = winit(keys[4], (3, 3, 2 * c1, c2));  b2 = winit(keys[5], (1, c2))
        k_flat = c2 * H * W
        wl = winit(keys[6], (k_flat, out_dim));   bl = winit(keys[7], (1, out_dim))

        # Kernel-format parameters:
        #  - HWIO conv weights flattened to (9*Cin, Cout) bf16 for one-matmul im2col.
        #  - conv2's weight pre-split into its a_sc half ([:c1]) and a0 half ([c1:])
        #    so the channel concat is never materialised in-kernel.
        #  - head weight reshaped to (c2, H*W, out) so the NCHW flatten ordering is
        #    folded into the weight instead of reshaping the activation in-kernel.
        self._kparams = (
            w0.reshape(9 * C, c1).astype(jnp.bfloat16), b0,
            w1.reshape(9 * c1, c1).astype(jnp.bfloat16), b1,
            w2[:, :, :c1, :].reshape(9 * c1, c2).astype(jnp.bfloat16),
            w2[:, :, c1:, :].reshape(9 * c1, c2).astype(jnp.bfloat16), b2,
            wl.reshape(c2, H * W, out_dim), bl)

        # Layer dicts — same schema Network.forward() inspects.
        self.layers = [
            {'type': 'convolutional'},                            # 0
            {'type': 'checkpoint'},                               # 1
            {'type': 'convolutional'},                            # 2
            {'type': 'shortcut', 'layer': 0, 'checkpoint': 1},    # 3  x += checkpoints[0]
            {'type': 'concatenate', 'layer': 1, 'dim': 0},        # 4  cat(x, outputs[1]) on channels
            {'type': 'convolutional'},                            # 5
            {'type': 'reshape'},                                  # 6  flatten
            {'type': 'linear'},                                   # 7
        ]
        # "ModuleList" for the literal executor (None == empty Sequential).
        self.network = [
            lambda x: _conv3x3_ref(x, w0, b0),
            None,
            lambda x: _conv3x3_ref(x, w1, b1),
            None,
            None,
            lambda x: _conv3x3_ref(x, w2, b2),
            lambda x: x.reshape(x.shape[0], -1),
            lambda x: x @ wl + bl,
        ]
        self.shapes = [list(in_shape), [c1, H, W], [c1, H, W], [c1, H, W],
                       [c1, H, W], [2 * c1, H, W], [c2, H, W], [k_flat],
                       list(out_shape)]
        # TODO(synk): Adam optimiser / ReduceLROnPlateau scheduler are training
        # infrastructure with no Pallas-forward equivalent; omitted.

    # -- fused fast path ------------------------------------------------------
    def forward(self, x):
        # Non-default layer_num / group fall back to the literal executor.
        if self.layer_num is not None or self.group != 0:
            return self.forward_reference(x)
        _, H, W, _, _, out_dim = self._dims
        y, ck_nchw = _fused_forward(x, self._kparams, H=H, W=W, out_dim=out_dim)
        self.checkpoints = [ck_nchw]
        self.kl_loss = jnp.float32(0.0)
        return y

    # -- literal per-layer executor (mirror of netloader Network.forward) -----
    def forward_reference(self, x):
        self.checkpoints = []
        if not self._checkpoints:
            outputs = [x]
        for i, layer in enumerate(self.layers[:self.layer_num]):
            if 'group' in layer and layer['group'] != self.group:
                continue
            if layer['type'] == 'checkpoint':
                self.checkpoints.append(x)
            elif layer['type'] == 'concatenate':
                if ('checkpoint' in layer and layer['checkpoint']) or self._checkpoints:
                    x = _concatenate(layer, x, self.checkpoints)
                else:
                    x = _concatenate(layer, x, outputs)
            elif layer['type'] == 'sample':
                # TODO(synk): no sample (VAE reparameterisation) layer in the
                # synthetic config; branch kept for structural fidelity.
                x, self.kl_loss = self.network[i](x)
                self.kl_loss = self.kl_loss * self.kl_loss_weight
            elif layer['type'] == 'shortcut':
                if ('checkpoint' in layer and layer['checkpoint']) or self._checkpoints:
                    x = x + self.checkpoints[layer['layer']]
                else:
                    x = x + outputs[layer['layer']]
            elif layer['type'] == 'skip':
                if ('checkpoint' in layer and layer['checkpoint']) or self._checkpoints:
                    x = self.checkpoints[layer['layer']]
                else:
                    x = outputs[layer['layer']]
            else:
                x = self.network[i](x)
            if not self._checkpoints:
                outputs.append(x)
        return x

    __call__ = forward


if __name__ == "__main__":
    key = jax.random.PRNGKey(0)
    k_in, k_net = jax.random.split(key)

    in_shape = [4, 16, 16]   # C, H, W (excluding batch)
    out_shape = [8]
    batch = 2

    x = jax.random.normal(k_in, (batch, *in_shape), dtype=jnp.float32)  # NCHW

    net = Network(in_shape, out_shape, k_net)

    y = jax.block_until_ready(net(x))                         # fused Pallas kernel
    y_ref = jax.block_until_ready(net.forward_reference(x))   # literal layer loop

    assert y.shape == (batch, out_shape[0]), y.shape
    assert y.dtype == jnp.float32
    assert bool(jnp.all(jnp.isfinite(y)))
    max_err = float(jnp.max(jnp.abs(y - y_ref)))
    assert bool(jnp.allclose(y, y_ref, atol=5e-3, rtol=5e-3)), max_err
    assert net.checkpoints[0].shape == (batch, 8, in_shape[1], in_shape[2])
    print("KERNEL_OK")
</pallas_src>

<mosaic_0001>
module attributes {stable_mosaic.version = 11 : i64} {
  func.func @_fused_net_kernel(%arg0: i32, %arg1: memref<1x18x32x4xf32, #tpu.memory_space<vmem>>, %arg2: memref<36x8xbf16, #tpu.memory_space<vmem>>, %arg3: memref<1x8xf32, #tpu.memory_space<vmem>>, %arg4: memref<72x8xbf16, #tpu.memory_space<vmem>>, %arg5: memref<1x8xf32, #tpu.memory_space<vmem>>, %arg6: memref<72x4xbf16, #tpu.memory_space<vmem>>, %arg7: memref<72x4xbf16, #tpu.memory_space<vmem>>, %arg8: memref<1x4xf32, #tpu.memory_space<vmem>>, %arg9: memref<4x256x8xf32, #tpu.memory_space<vmem>>, %arg10: memref<1x8xf32, #tpu.memory_space<vmem>>, %arg11: memref<1x1x8xf32, #tpu.memory_space<vmem>>, %arg12: memref<256x8xf32, #tpu.memory_space<vmem>>, %arg13: memref<1x18x32x8xf32, #tpu.memory_space<vmem>>, %arg14: memref<1x18x32x8xf32, #tpu.memory_space<vmem>>) attributes {dimension_semantics = [#tpu.dimension_semantics<parallel>], iteration_bounds = array<i64: 2>, scalar_prefetch = 0 : i64, scratch_operands = 2 : i64, tpu.core_type = #tpu.core_type<tc>, window_params = [{transform_indices = @transform_0, window_bounds = array<i64: 1, 18, 32, 4>}, {pipeline_mode = #tpu.pipeline_mode<synchronous>, transform_indices = @transform_1, window_bounds = array<i64: 36, 8>}, {pipeline_mode = #tpu.pipeline_mode<synchronous>, transform_indices = @transform_2, window_bounds = array<i64: 1, 8>}, {pipeline_mode = #tpu.pipeline_mode<synchronous>, transform_indices = @transform_3, window_bounds = array<i64: 72, 8>}, {pipeline_mode = #tpu.pipeline_mode<synchronous>, transform_indices = @transform_4, window_bounds = array<i64: 1, 8>}, {pipeline_mode = #tpu.pipeline_mode<synchronous>, transform_indices = @transform_5, window_bounds = array<i64: 72, 4>}, {pipeline_mode = #tpu.pipeline_mode<synchronous>, transform_indices = @transform_6, window_bounds = array<i64: 72, 4>}, {pipeline_mode = #tpu.pipeline_mode<synchronous>, transform_indices = @transform_7, window_bounds = array<i64: 1, 4>}, {pipeline_mode = #tpu.pipeline_mode<synchronous>, transform_indices = @transform_8, window_bounds = array<i64: 4, 256, 8>}, {pipeline_mode = #tpu.pipeline_mode<synchronous>, transform_indices = @transform_9, window_bounds = array<i64: 1, 8>}, {transform_indices = @transform_10, window_bounds = array<i64: 1, 1, 8>}, {transform_indices = @transform_11, window_bounds = array<i64: 256, 8>}]} {
    %cst = arith.constant 0.000000e+00 : f32
    %0 = vector.broadcast %cst : f32 to vector<1x1x32x8xf32>
    %cst_0 = arith.constant 0.000000e+00 : f32
    %1 = vector.broadcast %cst_0 : f32 to vector<1x16x1x8xf32>
    %c0 = arith.constant 0 : index
    %c0_1 = arith.constant 0 : index
    %c0_2 = arith.constant 0 : index
    %c0_3 = arith.constant 0 : index
    %2 = vector.load %arg13[%c0, %c0_1, %c0_2, %c0_3] : memref<1x18x32x8xf32, #tpu.memory_space<vmem>>, vector<1x1x32x8xf32>
    tpu.vector_store %arg13[%c0, %c0_1, %c0_2, %c0_3], %0 {strides = array<i32>} : memref<1x18x32x8xf32, #tpu.memory_space<vmem>>, vector<1x1x32x8xf32>,
    %c0_4 = arith.constant 0 : index
    %c17 = arith.constant 17 : index
    %c0_5 = arith.constant 0 : index
    %c0_6 = arith.constant 0 : index
    %3 = vector.load %arg13[%c0_4, %c17, %c0_5, %c0_6] : memref<1x18x32x8xf32, #tpu.memory_space<vmem>>, vector<1x1x32x8xf32>
    tpu.vector_store %arg13[%c0_4, %c17, %c0_5, %c0_6], %0 {strides = array<i32>} : memref<1x18x32x8xf32, #tpu.memory_space<vmem>>, vector<1x1x32x8xf32>,
    %c0_7 = arith.constant 0 : index
    %c1 = arith.constant 1 : index
    %c7 = arith.constant 7 : index
    %c0_8 = arith.constant 0 : index
    %4 = vector.load %arg13[%c0_7, %c1, %c7, %c0_8] : memref<1x18x32x8xf32, #tpu.memory_space<vmem>>, vector<1x16x1x8xf32>
    tpu.vector_store %arg13[%c0_7, %c1, %c7, %c0_8], %1 {strides = array<i32>} : memref<1x18x32x8xf32, #tpu.memory_space<vmem>>, vector<1x16x1x8xf32>,
    %c0_9 = arith.constant 0 : index
    %c1_10 = arith.constant 1 : index
    %c24 = arith.constant 24 : index
    %c0_11 = arith.constant 0 : index
    %5 = vector.load %arg13[%c0_9, %c1_10, %c24, %c0_11] : memref<1x18x32x8xf32, #tpu.memory_space<vmem>>, vector<1x16x1x8xf32>
    tpu.vector_store %arg13[%c0_9, %c1_10, %c24, %c0_11], %1 {strides = array<i32>} : memref<1x18x32x8xf32, #tpu.memory_space<vmem>>, vector<1x16x1x8xf32>,
    %c0_12 = arith.constant 0 : index
    %c0_13 = arith.constant 0 : index
    %c0_14 = arith.constant 0 : index
    %c0_15 = arith.constant 0 : index
    %6 = vector.load %arg14[%c0_12, %c0_13, %c0_14, %c0_15] : memref<1x18x32x8xf32, #tpu.memory_space<vmem>>, vector<1x1x32x8xf32>
    tpu.vector_store %arg14[%c0_12, %c0_13, %c0_14, %c0_15], %0 {strides = array<i32>} : memref<1x18x32x8xf32, #tpu.memory_space<vmem>>, vector<1x1x32x8xf32>,
    %c0_16 = arith.constant 0 : index
    %c17_17 = arith.constant 17 : index
    %c0_18 = arith.constant 0 : index
    %c0_19 = arith.constant 0 : index
    %7 = vector.load %arg14[%c0_16, %c17_17, %c0_18, %c0_19] : memref<1x18x32x8xf32, #tpu.memory_space<vmem>>, vector<1x1x32x8xf32>
    tpu.vector_store %arg14[%c0_16, %c17_17, %c0_18, %c0_19], %0 {strides = array<i32>} : memref<1x18x32x8xf32, #tpu.memory_space<vmem>>, vector<1x1x32x8xf32>,
    %c0_20 = arith.constant 0 : index
    %c1_21 = arith.constant 1 : index
    %c7_22 = arith.constant 7 : index
    %c0_23 = arith.constant 0 : index
    %8 = vector.load %arg14[%c0_20, %c1_21, %c7_22, %c0_23] : memref<1x18x32x8xf32, #tpu.memory_space<vmem>>, vector<1x16x1x8xf32>
    tpu.vector_store %arg14[%c0_20, %c1_21, %c7_22, %c0_23], %1 {strides = array<i32>} : memref<1x18x32x8xf32, #tpu.memory_space<vmem>>, vector<1x16x1x8xf32>,
    %c0_24 = arith.constant 0 : index
    %c1_25 = arith.constant 1 : index
    %c24_26 = arith.constant 24 : index
    %c0_27 = arith.constant 0 : index
    %9 = vector.load %arg14[%c0_24, %c1_25, %c24_26, %c0_27] : memref<1x18x32x8xf32, #tpu.memory_space<vmem>>, vector<1x16x1x8xf32>
    tpu.vector_store %arg14[%c0_24, %c1_25, %c24_26, %c0_27], %1 {strides = array<i32>} : memref<1x18x32x8xf32, #tpu.memory_space<vmem>>, vector<1x16x1x8xf32>,
    %c0_28 = arith.constant 0 : index
    %c0_29 = arith.constant 0 : index
    %c7_30 = arith.constant 7 : index
    %c0_31 = arith.constant 0 : index
    %10 = vector.load %arg1[%c0_28, %c0_29, %c7_30, %c0_31] : memref<1x18x32x4xf32, #tpu.memory_space<vmem>>, vector<1x16x16x4xf32>
    %11 = vector.shape_cast %10 : vector<1x16x16x4xf32> to vector<256x4xf32>
    %12 = arith.truncf %11 : vector<256x4xf32> to vector<256x4xbf16>
    %c0_32 = arith.constant 0 : index
    %c0_33 = arith.constant 0 : index
    %c8 = arith.constant 8 : index
    %c0_34 = arith.constant 0 : index
    %13 = vector.load %arg1[%c0_32, %c0_33, %c8, %c0_34] : memref<1x18x32x4xf32, #tpu.memory_space<vmem>>, vector<1x16x16x4xf32>
    %14 = vector.shape_cast %13 : vector<1x16x16x4xf32> to vector<256x4xf32>
    %15 = arith.truncf %14 : vector<256x4xf32> to vector<256x4xbf16>
    %c0_35 = arith.constant 0 : index
    %c0_36 = arith.constant 0 : index
    %c9 = arith.constant 9 : index
    %c0_37 = arith.constant 0 : index
    %16 = vector.load %arg1[%c0_35, %c0_36, %c9, %c0_37] : memref<1x18x32x4xf32, #tpu.memory_space<vmem>>, vector<1x16x16x4xf32>
    %17 = vector.shape_cast %16 : vector<1x16x16x4xf32> to vector<256x4xf32>
    %18 = arith.truncf %17 : vector<256x4xf32> to vector<256x4xbf16>
    %c0_38 = arith.constant 0 : index
    %c1_39 = arith.constant 1 : index
    %c7_40 = arith.constant 7 : index
    %c0_41 = arith.constant 0 : index
    %19 = vector.load %arg1[%c0_38, %c1_39, %c7_40, %c0_41] : memref<1x18x32x4xf32, #tpu.memory_space<vmem>>, vector<1x16x16x4xf32>
    %20 = vector.shape_cast %19 : vector<1x16x16x4xf32> to vector<256x4xf32>
    %21 = arith.truncf %20 : vector<256x4xf32> to vector<256x4xbf16>
    %c0_42 = arith.constant 0 : index
    %c1_43 = arith.constant 1 : index
    %c8_44 = arith.constant 8 : index
    %c0_45 = arith.constant 0 : index
    %22 = vector.load %arg1[%c0_42, %c1_43, %c8_44, %c0_45] : memref<1x18x32x4xf32, #tpu.memory_space<vmem>>, vector<1x16x16x4xf32>
    %23 = vector.shape_cast %22 : vector<1x16x16x4xf32> to vector<256x4xf32>
    %24 = arith.truncf %23 : vector<256x4xf32> to vector<256x4xbf16>
    %c0_46 = arith.constant 0 : index
    %c1_47 = arith.constant 1 : index
    %c9_48 = arith.constant 9 : index
    %c0_49 = arith.constant 0 : index
    %25 = vector.load %arg1[%c0_46, %c1_47, %c9_48, %c0_49] : memref<1x18x32x4xf32, #tpu.memory_space<vmem>>, vector<1x16x16x4xf32>
    %26 = vector.shape_cast %25 : vector<1x16x16x4xf32> to vector<256x4xf32>
    %27 = arith.truncf %26 : vector<256x4xf32> to vector<256x4xbf16>
    %c0_50 = arith.constant 0 : index
    %c2 = arith.constant 2 : index
    %c7_51 = arith.constant 7 : index
    %c0_52 = arith.constant 0 : index
    %28 = vector.load %arg1[%c0_50, %c2, %c7_51, %c0_52] : memref<1x18x32x4xf32, #tpu.memory_space<vmem>>, vector<1x16x16x4xf32>
    %29 = vector.shape_cast %28 : vector<1x16x16x4xf32> to vector<256x4xf32>
    %30 = arith.truncf %29 : vector<256x4xf32> to vector<256x4xbf16>
    %c0_53 = arith.constant 0 : index
    %c2_54 = arith.constant 2 : index
    %c8_55 = arith.constant 8 : index
    %c0_56 = arith.constant 0 : index
    %31 = vector.load %arg1[%c0_53, %c2_54, %c8_55, %c0_56] : memref<1x18x32x4xf32, #tpu.memory_space<vmem>>, vector<1x16x16x4xf32>
    %32 = vector.shape_cast %31 : vector<1x16x16x4xf32> to vector<256x4xf32>
    %33 = arith.truncf %32 : vector<256x4xf32> to vector<256x4xbf16>
    %c0_57 = arith.constant 0 : index
    %c2_58 = arith.constant 2 : index
    %c9_59 = arith.constant 9 : index
    %c0_60 = arith.constant 0 : index
    %34 = vector.load %arg1[%c0_57, %c2_58, %c9_59, %c0_60] : memref<1x18x32x4xf32, #tpu.memory_space<vmem>>, vector<1x16x16x4xf32>
    %35 = vector.shape_cast %34 : vector<1x16x16x4xf32> to vector<256x4xf32>
    %36 = arith.truncf %35 : vector<256x4xf32> to vector<256x4xbf16>
    %37 = tpu.concatenate %12, %15, %18, %21, %24, %27, %30, %33, %36 in 1 : vector<256x4xbf16>, vector<256x4xbf16>, vector<256x4xbf16>, vector<256x4xbf16>, vector<256x4xbf16>, vector<256x4xbf16>, vector<256x4xbf16>, vector<256x4xbf16>, vector<256x4xbf16> -> vector<256x36xbf16>
    %c0_61 = arith.constant 0 : index
    %c0_62 = arith.constant 0 : index
    %38 = vector.load %arg2[%c0_61, %c0_62] : memref<36x8xbf16, #tpu.memory_space<vmem>>, vector<36x8xbf16>
    %cst_63 = arith.constant dense<0.000000e+00> : vector<256x8xf32>
    %39 = tpu.matmul %37, %38, %cst_63 {dimension_numbers = #tpu.dot_dimension_numbers<[1], [0], [0], [1], [0, 0, 1, 1], [], []>} : vector<256x36xbf16>, vector<36x8xbf16>, vector<256x8xf32> -> vector<256x8xf32>
    %c0_64 = arith.constant 0 : index
    %c0_65 = arith.constant 0 : index
    %40 = vector.load %arg3[%c0_64, %c0_65] : memref<1x8xf32, #tpu.memory_space<vmem>>, vector<1x8xf32>
    %41 = vector.broadcast %40 : vector<1x8xf32> to vector<256x8xf32>
    %42 = arith.addf %39, %41 : vector<256x8xf32>
    %cst_66 = arith.constant 0.000000e+00 : f32
    %43 = vector.broadcast %cst_66 : f32 to vector<256x8xf32>
    %44 = arith.maximumf %42, %43 : vector<256x8xf32>
    %c0_67 = arith.constant 0 : index
    %c0_68 = arith.constant 0 : index
    %45 = vector.load %arg12[%c0_67, %c0_68] : memref<256x8xf32, #tpu.memory_space<vmem>>, vector<256x8xf32>
    tpu.vector_store %arg12[%c0_67, %c0_68], %44 {strides = array<i32>} : memref<256x8xf32, #tpu.memory_space<vmem>>, vector<256x8xf32>,
    %46 = vector.shape_cast %44 : vector<256x8xf32> to vector<1x16x16x8xf32>
    %c0_69 = arith.constant 0 : index
    %c1_70 = arith.constant 1 : index
    %c8_71 = arith.constant 8 : index
    %c0_72 = arith.constant 0 : index
    %47 = vector.load %arg13[%c0_69, %c1_70, %c8_71, %c0_72] : memref<1x18x32x8xf32, #tpu.memory_space<vmem>>, vector<1x16x16x8xf32>
    tpu.vector_store %arg13[%c0_69, %c1_70, %c8_71, %c0_72], %46 {strides = array<i32>} : memref<1x18x32x8xf32, #tpu.memory_space<vmem>>, vector<1x16x16x8xf32>,
    %c0_73 = arith.constant 0 : index
    %c0_74 = arith.constant 0 : index
    %c7_75 = arith.constant 7 : index
    %c0_76 = arith.constant 0 : index
    %48 = vector.load %arg13[%c0_73, %c0_74, %c7_75, %c0_76] : memref<1x18x32x8xf32, #tpu.memory_space<vmem>>, vector<1x16x16x8xf32>
    %49 = vector.shape_cast %48 : vector<1x16x16x8xf32> to vector<256x8xf32>
    %50 = arith.truncf %49 : vector<256x8xf32> to vector<256x8xbf16>
    %c0_77 = arith.constant 0 : index
    %c0_78 = arith.constant 0 : index
    %c8_79 = arith.constant 8 : index
    %c0_80 = arith.constant 0 : index
    %51 = vector.load %arg13[%c0_77, %c0_78, %c8_79, %c0_80] : memref<1x18x32x8xf32, #tpu.memory_space<vmem>>, vector<1x16x16x8xf32>
    %52 = vector.shape_cast %51 : vector<1x16x16x8xf32> to vector<256x8xf32>
    %53 = arith.truncf %52 : vector<256x8xf32> to vector<256x8xbf16>
    %c0_81 = arith.constant 0 : index
    %c0_82 = arith.constant 0 : index
    %c9_83 = arith.constant 9 : index
    %c0_84 = arith.constant 0 : index
    %54 = vector.load %arg13[%c0_81, %c0_82, %c9_83, %c0_84] : memref<1x18x32x8xf32, #tpu.memory_space<vmem>>, vector<1x16x16x8xf32>
    %55 = vector.shape_cast %54 : vector<1x16x16x8xf32> to vector<256x8xf32>
    %56 = arith.truncf %55 : vector<256x8xf32> to vector<256x8xbf16>
    %c0_85 = arith.constant 0 : index
    %c1_86 = arith.constant 1 : index
    %c7_87 = arith.constant 7 : index
    %c0_88 = arith.constant 0 : index
    %57 = vector.load %arg13[%c0_85, %c1_86, %c7_87, %c0_88] : memref<1x18x32x8xf32, #tpu.memory_space<vmem>>, vector<1x16x16x8xf32>
    %58 = vector.shape_cast %57 : vector<1x16x16x8xf32> to vector<256x8xf32>
    %59 = arith.truncf %58 : vector<256x8xf32> to vector<256x8xbf16>
    %c0_89 = arith.constant 0 : index
    %c1_90 = arith.constant 1 : index
    %c8_91 = arith.constant 8 : index
    %c0_92 = arith.constant 0 : index
    %60 = vector.load %arg13[%c0_89, %c1_90, %c8_91, %c0_92] : memref<1x18x32x8xf32, #tpu.memory_space<vmem>>, vector<1x16x16x8xf32>
    %61 = vector.shape_cast %60 : vector<1x16x16x8xf32> to vector<256x8xf32>
    %62 = arith.truncf %61 : vector<256x8xf32> to vector<256x8xbf16>
    %c0_93 = arith.constant 0 : index
    %c1_94 = arith.constant 1 : index
    %c9_95 = arith.constant 9 : index
    %c0_96 = arith.constant 0 : index
    %63 = vector.load %arg13[%c0_93, %c1_94, %c9_95, %c0_96] : memref<1x18x32x8xf32, #tpu.memory_space<vmem>>, vector<1x16x16x8xf32>
    %64 = vector.shape_cast %63 : vector<1x16x16x8xf32> to vector<256x8xf32>
    %65 = arith.truncf %64 : vector<256x8xf32> to vector<256x8xbf16>
    %c0_97 = arith.constant 0 : index
    %c2_98 = arith.constant 2 : index
    %c7_99 = arith.constant 7 : index
    %c0_100 = arith.constant 0 : index
    %66 = vector.load %arg13[%c0_97, %c2_98, %c7_99, %c0_100] : memref<1x18x32x8xf32, #tpu.memory_space<vmem>>, vector<1x16x16x8xf32>
    %67 = vector.shape_cast %66 : vector<1x16x16x8xf32> to vector<256x8xf32>
    %68 = arith.truncf %67 : vector<256x8xf32> to vector<256x8xbf16>
    %c0_101 = arith.constant 0 : index
    %c2_102 = arith.constant 2 : index
    %c8_103 = arith.constant 8 : index
    %c0_104 = arith.constant 0 : index
    %69 = vector.load %arg13[%c0_101, %c2_102, %c8_103, %c0_104] : memref<1x18x32x8xf32, #tpu.memory_space<vmem>>, vector<1x16x16x8xf32>
    %70 = vector.shape_cast %69 : vector<1x16x16x8xf32> to vector<256x8xf32>
    %71 = arith.truncf %70 : vector<256x8xf32> to vector<256x8xbf16>
    %c0_105 = arith.constant 0 : index
    %c2_106 = arith.constant 2 : index
    %c9_107 = arith.constant 9 : index
    %c0_108 = arith.constant 0 : index
    %72 = vector.load %arg13[%c0_105, %c2_106, %c9_107, %c0_108] : memref<1x18x32x8xf32, #tpu.memory_space<vmem>>, vector<1x16x16x8xf32>
    %73 = vector.shape_cast %72 : vector<1x16x16x8xf32> to vector<256x8xf32>
    %74 = arith.truncf %73 : vector<256x8xf32> to vector<256x8xbf16>
    %75 = tpu.concatenate %50, %53, %56, %59, %62, %65, %68, %71, %74 in 1 : vector<256x8xbf16>, vector<256x8xbf16>, vector<256x8xbf16>, vector<256x8xbf16>, vector<256x8xbf16>, vector<256x8xbf16>, vector<256x8xbf16>, vector<256x8xbf16>, vector<256x8xbf16> -> vector<256x72xbf16>
    %c0_109 = arith.constant 0 : index
    %c0_110 = arith.constant 0 : index
    %76 = vector.load %arg4[%c0_109, %c0_110] : memref<72x8xbf16, #tpu.memory_space<vmem>>, vector<72x8xbf16>
    %cst_111 = arith.constant dense<0.000000e+00> : vector<256x8xf32>
    %77 = tpu.matmul %75, %76, %cst_111 {dimension_numbers = #tpu.dot_dimension_numbers<[1], [0], [0], [1], [0, 0, 1, 1], [], []>} : vector<256x72xbf16>, vector<72x8xbf16>, vector<256x8xf32> -> vector<256x8xf32>
    %c0_112 = arith.constant 0 : index
    %c0_113 = arith.constant 0 : index
    %78 = vector.load %arg5[%c0_112, %c0_113] : memref<1x8xf32, #tpu.memory_space<vmem>>, vector<1x8xf32>
    %79 = vector.broadcast %78 : vector<1x8xf32> to vector<256x8xf32>
    %80 = arith.addf %77, %79 : vector<256x8xf32>
    %cst_114 = arith.constant 0.000000e+00 : f32
    %81 = vector.broadcast %cst_114 : f32 to vector<256x8xf32>
    %82 = arith.maximumf %80, %81 : vector<256x8xf32>
    %83 = arith.addf %82, %44 : vector<256x8xf32>
    %84 = vector.shape_cast %83 : vector<256x8xf32> to vector<1x16x16x8xf32>
    %c0_115 = arith.constant 0 : index
    %c1_116 = arith.constant 1 : index
    %c8_117 = arith.constant 8 : index
    %c0_118 = arith.constant 0 : index
    %85 = vector.load %arg14[%c0_115, %c1_116, %c8_117, %c0_118] : memref<1x18x32x8xf32, #tpu.memory_space<vmem>>, vector<1x16x16x8xf32>
    tpu.vector_store %arg14[%c0_115, %c1_116, %c8_117, %c0_118], %84 {strides = array<i32>} : memref<1x18x32x8xf32, #tpu.memory_space<vmem>>, vector<1x16x16x8xf32>,
    %c0_119 = arith.constant 0 : index
    %c0_120 = arith.constant 0 : index
    %c7_121 = arith.constant 7 : index
    %c0_122 = arith.constant 0 : index
    %86 = vector.load %arg14[%c0_119, %c0_120, %c7_121, %c0_122] : memref<1x18x32x8xf32, #tpu.memory_space<vmem>>, vector<1x16x16x8xf32>
    %87 = vector.shape_cast %86 : vector<1x16x16x8xf32> to vector<256x8xf32>
    %88 = arith.truncf %87 : vector<256x8xf32> to vector<256x8xbf16>
    %c0_123 = arith.constant 0 : index
    %c0_124 = arith.constant 0 : index
    %c8_125 = arith.constant 8 : index
    %c0_126 = arith.constant 0 : index
    %89 = vector.load %arg14[%c0_123, %c0_124, %c8_125, %c0_126] : memref<1x18x32x8xf32, #tpu.memory_space<vmem>>, vector<1x16x16x8xf32>
    %90 = vector.shape_cast %89 : vector<1x16x16x8xf32> to vector<256x8xf32>
    %91 = arith.truncf %90 : vector<256x8xf32> to vector<256x8xbf16>
    %c0_127 = arith.constant 0 : index
    %c0_128 = arith.constant 0 : index
    %c9_129 = arith.constant 9 : index
    %c0_130 = arith.constant 0 : index
    %92 = vector.load %arg14[%c0_127, %c0_128, %c9_129, %c0_130] : memref<1x18x32x8xf32, #tpu.memory_space<vmem>>, vector<1x16x16x8xf32>
    %93 = vector.shape_cast %92 : vector<1x16x16x8xf32> to vector<256x8xf32>
    %94 = arith.truncf %93 : vector<256x8xf32> to vector<256x8xbf16>
    %c0_131 = arith.constant 0 : index
    %c1_132 = arith.constant 1 : index
    %c7_133 = arith.constant 7 : index
    %c0_134 = arith.constant 0 : index
    %95 = vector.load %arg14[%c0_131, %c1_132, %c7_133, %c0_134] : memref<1x18x32x8xf32, #tpu.memory_space<vmem>>, vector<1x16x16x8xf32>
    %96 = vector.shape_cast %95 : vector<1x16x16x8xf32> to vector<256x8xf32>
    %97 = arith.truncf %96 : vector<256x8xf32> to vector<256x8xbf16>
    %c0_135 = arith.constant 0 : index
    %c1_136 = arith.constant 1 : index
    %c8_137 = arith.constant 8 : index
    %c0_138 = arith.constant 0 : index
    %98 = vector.load %arg14[%c0_135, %c1_136, %c8_137, %c0_138] : memref<1x18x32x8xf32, #tpu.memory_space<vmem>>, vector<1x16x16x8xf32>
    %99 = vector.shape_cast %98 : vector<1x16x16x8xf32> to vector<256x8xf32>
    %100 = arith.truncf %99 : vector<256x8xf32> to vector<256x8xbf16>
    %c0_139 = arith.constant 0 : index
    %c1_140 = arith.constant 1 : index
    %c9_141 = arith.constant 9 : index
    %c0_142 = arith.constant 0 : index
    %101 = vector.load %arg14[%c0_139, %c1_140, %c9_141, %c0_142] : memref<1x18x32x8xf32, #tpu.memory_space<vmem>>, vector<1x16x16x8xf32>
    %102 = vector.shape_cast %101 : vector<1x16x16x8xf32> to vector<256x8xf32>
    %103 = arith.truncf %102 : vector<256x8xf32> to vector<256x8xbf16>
    %c0_143 = arith.constant 0 : index
    %c2_144 = arith.constant 2 : index
    %c7_145 = arith.constant 7 : index
    %c0_146 = arith.constant 0 : index
    %104 = vector.load %arg14[%c0_143, %c2_144, %c7_145, %c0_146] : memref<1x18x32x8xf32, #tpu.memory_space<vmem>>, vector<1x16x16x8xf32>
    %105 = vector.shape_cast %104 : vector<1x16x16x8xf32> to vector<256x8xf32>
    %106 = arith.truncf %105 : vector<256x8xf32> to vector<256x8xbf16>
    %c0_147 = arith.constant 0 : index
    %c2_148 = arith.constant 2 : index
    %c8_149 = arith.constant 8 : index
    %c0_150 = arith.constant 0 : index
    %107 = vector.load %arg14[%c0_147, %c2_148, %c8_149, %c0_150] : memref<1x18x32x8xf32, #tpu.memory_space<vmem>>, vector<1x16x16x8xf32>
    %108 = vector.shape_cast %107 : vector<1x16x16x8xf32> to vector<256x8xf32>
    %109 = arith.truncf %108 : vector<256x8xf32> to vector<256x8xbf16>
    %c0_151 = arith.constant 0 : index
    %c2_152 = arith.constant 2 : index
    %c9_153 = arith.constant 9 : index
    %c0_154 = arith.constant 0 : index
    %110 = vector.load %arg14[%c0_151, %c2_152, %c9_153, %c0_154] : memref<1x18x32x8xf32, #tpu.memory_space<vmem>>, vector<1x16x16x8xf32>
    %111 = vector.shape_cast %110 : vector<1x16x16x8xf32> to vector<256x8xf32>
    %112 = arith.truncf %111 : vector<256x8xf32> to vector<256x8xbf16>
    %113 = tpu.concatenate %88, %91, %94, %97, %100, %103, %106, %109, %112 in 1 : vector<256x8xbf16>, vector<256x8xbf16>, vector<256x8xbf16>, vector<256x8xbf16>, vector<256x8xbf16>, vector<256x8xbf16>, vector<256x8xbf16>, vector<256x8xbf16>, vector<256x8xbf16> -> vector<256x72xbf16>
    %c0_155 = arith.constant 0 : index
    %c0_156 = arith.constant 0 : index
    %114 = vector.load %arg6[%c0_155, %c0_156] : memref<72x4xbf16, #tpu.memory_space<vmem>>, vector<72x4xbf16>
    %cst_157 = arith.constant dense<0.000000e+00> : vector<256x4xf32>
    %115 = tpu.matmul %113, %114, %cst_157 {dimension_numbers = #tpu.dot_dimension_numbers<[1], [0], [0], [1], [0, 0, 1, 1], [], []>} : vector<256x72xbf16>, vector<72x4xbf16>, vector<256x4xf32> -> vector<256x4xf32>
    %c0_158 = arith.constant 0 : index
    %c0_159 = arith.constant 0 : index
    %116 = vector.load %arg7[%c0_158, %c0_159] : memref<72x4xbf16, #tpu.memory_space<vmem>>, vector<72x4xbf16>
    %cst_160 = arith.constant dense<0.000000e+00> : vector<256x4xf32>
    %117 = tpu.matmul %75, %116, %cst_160 {dimension_numbers = #tpu.dot_dimension_numbers<[1], [0], [0], [1], [0, 0, 1, 1], [], []>} : vector<256x72xbf16>, vector<72x4xbf16>, vector<256x4xf32> -> vector<256x4xf32>
    %118 = arith.addf %115, %117 : vector<256x4xf32>
    %c0_161 = arith.constant 0 : index
    %c0_162 = arith.constant 0 : index
    %119 = vector.load %arg8[%c0_161, %c0_162] : memref<1x4xf32, #tpu.memory_space<vmem>>, vector<1x4xf32>
    %120 = vector.broadcast %119 : vector<1x4xf32> to vector<256x4xf32>
    %121 = arith.addf %118, %120 : vector<256x4xf32>
    %cst_163 = arith.constant 0.000000e+00 : f32
    %122 = vector.broadcast %cst_163 : f32 to vector<256x4xf32>
    %123 = arith.maximumf %121, %122 : vector<256x4xf32>
    %124 = vector.shape_cast %123 : vector<256x4xf32> to vector<1x256x4xf32>
    %cst_164 = arith.constant 0.000000e+00 : f32
    %125 = vector.broadcast %cst_164 : f32 to vector<1x256x8xf32>
    %126 = vector.extract_strided_slice %124 {offsets = [0, 0, 0], sizes = [1, 256, 1], strides = [1, 1, 1]} : vector<1x256x4xf32> to vector<1x256x1xf32>
    %c0_165 = arith.constant 0 : index
    %c0_166 = arith.constant 0 : index
    %c0_167 = arith.constant 0 : index
    %127 = vector.load %arg9[%c0_165, %c0_166, %c0_167] : memref<4x256x8xf32, #tpu.memory_space<vmem>>, vector<1x256x8xf32>
    %128 = vector.shape_cast %127 : vector<1x256x8xf32> to vector<256x8xf32>
    %129 = vector.shape_cast %128 : vector<256x8xf32> to vector<1x256x8xf32>
    %130 = vector.broadcast %126 : vector<1x256x1xf32> to vector<1x256x8xf32>
    %131 = arith.mulf %130, %129 : vector<1x256x8xf32>
    %132 = arith.addf %125, %131 : vector<1x256x8xf32>
    %133 = vector.extract_strided_slice %124 {offsets = [0, 0, 1], sizes = [1, 256, 1], strides = [1, 1, 1]} : vector<1x256x4xf32> to vector<1x256x1xf32>
    %c1_168 = arith.constant 1 : index
    %c0_169 = arith.constant 0 : index
    %c0_170 = arith.constant 0 : index
    %134 = vector.load %arg9[%c1_168, %c0_169, %c0_170] : memref<4x256x8xf32, #tpu.memory_space<vmem>>, vector<1x256x8xf32>
    %135 = vector.shape_cast %134 : vector<1x256x8xf32> to vector<256x8xf32>
    %136 = vector.shape_cast %135 : vector<256x8xf32> to vector<1x256x8xf32>
    %137 = vector.broadcast %133 : vector<1x256x1xf32> to vector<1x256x8xf32>
    %138 = arith.mulf %137, %136 : vector<1x256x8xf32>
    %139 = arith.addf %132, %138 : vector<1x256x8xf32>
    %140 = vector.extract_strided_slice %124 {offsets = [0, 0, 2], sizes = [1, 256, 1], strides = [1, 1, 1]} : vector<1x256x4xf32> to vector<1x256x1xf32>
    %c2_171 = arith.constant 2 : index
    %c0_172 = arith.constant 0 : index
    %c0_173 = arith.constant 0 : index
    %141 = vector.load %arg9[%c2_171, %c0_172, %c0_173] : memref<4x256x8xf32, #tpu.memory_space<vmem>>, vector<1x256x8xf32>
    %142 = vector.shape_cast %141 : vector<1x256x8xf32> to vector<256x8xf32>
    %143 = vector.shape_cast %142 : vector<256x8xf32> to vector<1x256x8xf32>
    %144 = vector.broadcast %140 : vector<1x256x1xf32> to vector<1x256x8xf32>
    %145 = arith.mulf %144, %143 : vector<1x256x8xf32>
    %146 = arith.addf %139, %145 : vector<1x256x8xf32>
    %147 = vector.extract_strided_slice %124 {offsets = [0, 0, 3], sizes = [1, 256, 1], strides = [1, 1, 1]} : vector<1x256x4xf32> to vector<1x256x1xf32>
    %c3 = arith.constant 3 : index
    %c0_174 = arith.constant 0 : index
    %c0_175 = arith.constant 0 : index
    %148 = vector.load %arg9[%c3, %c0_174, %c0_175] : memref<4x256x8xf32, #tpu.memory_space<vmem>>, vector<1x256x8xf32>
    %149 = vector.shape_cast %148 : vector<1x256x8xf32> to vector<256x8xf32>
    %150 = vector.shape_cast %149 : vector<256x8xf32> to vector<1x256x8xf32>
    %151 = vector.broadcast %147 : vector<1x256x1xf32> to vector<1x256x8xf32>
    %152 = arith.mulf %151, %150 : vector<1x256x8xf32>
    %153 = arith.addf %146, %152 : vector<1x256x8xf32>
    %cst_176 = arith.constant dense<0.000000e+00> : vector<1x8xf32>
    %154 = vector.multi_reduction <add>, %153, %cst_176 [1] : vector<1x256x8xf32> to vector<1x8xf32>
    %c0_177 = arith.constant 0 : index
    %c0_178 = arith.constant 0 : index
    %155 = vector.load %arg10[%c0_177, %c0_178] : memref<1x8xf32, #tpu.memory_space<vmem>>, vector<1x8xf32>
    %156 = arith.addf %154, %155 : vector<1x8xf32>
    %c0_179 = arith.constant 0 : index
    %c0_180 = arith.constant 0 : index
    %c0_181 = arith.constant 0 : index
    %157 = vector.load %arg11[%c0_179, %c0_180, %c0_181] : memref<1x1x8xf32, #tpu.memory_space<vmem>>, vector<1x1x8xf32>
    %158 = vector.shape_cast %157 : vector<1x1x8xf32> to vector<1x8xf32>
    %159 = vector.shape_cast %156 : vector<1x8xf32> to vector<1x1x8xf32>
    tpu.vector_store %arg11[%c0_179, %c0_180, %c0_181], %159 {strides = array<i32>} : memref<1x1x8xf32, #tpu.memory_space<vmem>>, vector<1x1x8xf32>,
    return
  }
  func.func @transform_0(%arg0: i32) -> (i32, i32, i32, i32) {
    %c0_i32 = arith.constant 0 : i32
    %c0_i32_0 = arith.constant 0 : i32
    %c0_i32_1 = arith.constant 0 : i32
    %c0_i32_2 = arith.constant 0 : i32
    return %arg0, %c0_i32, %c0_i32_0, %c0_i32_1 : i32, i32, i32, i32
  }
  func.func @transform_1(%arg0: i32) -> (i32, i32) {
    %c0_i32 = arith.constant 0 : i32
    %c0_i32_0 = arith.constant 0 : i32
    %c0_i32_1 = arith.constant 0 : i32
    return %c0_i32, %c0_i32_0 : i32, i32
  }
  func.func @transform_2(%arg0: i32) -> (i32, i32) {
    %c0_i32 = arith.constant 0 : i32
    %c0_i32_0 = arith.constant 0 : i32
    %c0_i32_1 = arith.constant 0 : i32
    return %c0_i32, %c0_i32_0 : i32, i32
  }
  func.func @transform_3(%arg0: i32) -> (i32, i32) {
    %c0_i32 = arith.constant 0 : i32
    %c0_i32_0 = arith.constant 0 : i32
    %c0_i32_1 = arith.constant 0 : i32
    return %c0_i32, %c0_i32_0 : i32, i32
  }
  func.func @transform_4(%arg0: i32) -> (i32, i32) {
    %c0_i32 = arith.constant 0 : i32
    %c0_i32_0 = arith.constant 0 : i32
    %c0_i32_1 = arith.constant 0 : i32
    return %c0_i32, %c0_i32_0 : i32, i32
  }
  func.func @transform_5(%arg0: i32) -> (i32, i32) {
    %c0_i32 = arith.constant 0 : i32
    %c0_i32_0 = arith.constant 0 : i32
    %c0_i32_1 = arith.constant 0 : i32
    return %c0_i32, %c0_i32_0 : i32, i32
  }
  func.func @transform_6(%arg0: i32) -> (i32, i32) {
    %c0_i32 = arith.constant 0 : i32
    %c0_i32_0 = arith.constant 0 : i32
    %c0_i32_1 = arith.constant 0 : i32
    return %c0_i32, %c0_i32_0 : i32, i32
  }
  func.func @transform_7(%arg0: i32) -> (i32, i32) {
    %c0_i32 = arith.constant 0 : i32
    %c0_i32_0 = arith.constant 0 : i32
    %c0_i32_1 = arith.constant 0 : i32
    return %c0_i32, %c0_i32_0 : i32, i32
  }
  func.func @transform_8(%arg0: i32) -> (i32, i32, i32) {
    %c0_i32 = arith.constant 0 : i32
    %c0_i32_0 = arith.constant 0 : i32
    %c0_i32_1 = arith.constant 0 : i32
    %c0_i32_2 = arith.constant 0 : i32
    return %c0_i32, %c0_i32_0, %c0_i32_1 : i32, i32, i32
  }
  func.func @transform_9(%arg0: i32) -> (i32, i32) {
    %c0_i32 = arith.constant 0 : i32
    %c0_i32_0 = arith.constant 0 : i32
    %c0_i32_1 = arith.constant 0 : i32
    return %c0_i32, %c0_i32_0 : i32, i32
  }
  func.func @transform_10(%arg0: i32) -> (i32, i32, i32) {
    %c0_i32 = arith.constant 0 : i32
    %c0_i32_0 = arith.constant 0 : i32
    %c0_i32_1 = arith.constant 0 : i32
    return %arg0, %c0_i32, %c0_i32_0 : i32, i32, i32
  }
  func.func @transform_11(%arg0: i32) -> (i32, i32) {
    %c0_i32 = arith.constant 0 : i32
    %c0_i32_0 = arith.constant 0 : i32
    return %arg0, %c0_i32 : i32, i32
  }
}

</mosaic_0001>

<llo_original>
// kernel: _fused_forward.1
$region0: #{_fused_forward.1}
  #allocation0 [shape = 'u32[]', space=smem, size = 0x4, offset = 0x4, fixed_abs, tag = 'smem constant byte address 0x4 - core index']
  #allocation1 [shape = 'u32[144,128]{1,0:T(1,128)}', space=vmem, size = 0x12000, scoped, tag = 'internal scratch']
  #allocation2 [shape = 'f32[1,18,32,8]{3,2,1,0:T(8,128)}', space=vmem, size = 0x48000, scoped, tag = 'scratch operand']
  #allocation3 [shape = 'f32[1,18,32,8]{3,2,1,0:T(8,128)}', space=vmem, size = 0x48000, scoped, tag = 'scratch operand']
  %s0 = inlined_call_operand.vmem [shape: f32[2,18,32,4], index: 0, kind: input, shape index: {}]
  %s1 = inlined_call_operand.vmem [shape: bf16[36,8], index: 1, kind: input, shape index: {}]
  %s2 = inlined_call_operand.vmem [shape: f32[1,8], index: 2, kind: input, shape index: {}]
  %s3 = inlined_call_operand.vmem [shape: bf16[72,8], index: 3, kind: input, shape index: {}]
  %s4 = inlined_call_operand.vmem [shape: f32[1,8], index: 4, kind: input, shape index: {}]
  %s5 = inlined_call_operand.vmem [shape: bf16[72,4], index: 5, kind: input, shape index: {}]
  %s6 = inlined_call_operand.vmem [shape: bf16[72,4], index: 6, kind: input, shape index: {}]
  %s7 = inlined_call_operand.vmem [shape: f32[1,4], index: 7, kind: input, shape index: {}]
  %s8 = inlined_call_operand.vmem [shape: f32[4,256,8], index: 8, kind: input, shape index: {}]
  %s9 = inlined_call_operand.vmem [shape: f32[1,8], index: 9, kind: input, shape index: {}]
  %s10 = inlined_call_operand.hbm [shape: f32[2,1,8], index: 10, kind: output, shape index: {0}]
  %s11 = inlined_call_operand.vmem [shape: f32[512,8], index: 11, kind: output, shape index: {1}]
  %12 = xla_tuple %s10, %s11
  %s13 = sld [smem:[#allocation0]]
  $region81: #{_fused_forward.1} parent=0
    _
  %s15 = ssub.s32 1, %s13
  %s16 = scalar_select 0, %s15, %s13
  $region1: #{_fused_forward.1} parent=0
    #allocation4 [shape = 'u8[1024]{0}', space=vmem, size = 0x400, scoped, tag = 'output window, operand 0']
    #allocation5 [shape = 's32[2]{0}', space=sflag, size = 0x8, scoped, tag = 'scoped memory for _fused_forward.1']
    %17 = vsyncpa [#allocation5], 0
    %s18 = scalar_lea.sflag [#allocation5], 1
    %19 = vsyncpa %s18, 0
    loop: start=0, step=1, limit=4
    $region2: #{_fused_forward.1} parent=1 // loop_pre_header
      _
    $region3: #{_fused_forward.1} parent=1 // loop_header
      %s21 = sphi 0, %s25
      %p22 = scmp.ge.s32.totalorder %s21, 4
      %s31 = sphi 0, %s33
      %s34 = sphi 0, %s31
      %s35 = sphi 0, %s34
      %s51 = sphi 0, %s35
      %s55 = sphi 0, %s55
      %s57 = sphi 0, %s55
      %s58 = sphi 0, %s57
      %s72 = sphi 0, %s58
      %s76 = sphi 0, %s76
      %s78 = sphi 0, %s76
      %s79 = sphi 0, %s78
      %s93 = sphi 0, %s79
      %s97 = sphi 0, %s97
      %s99 = sphi 0, %s97
      %s100 = sphi 0, %s99
      %s114 = sphi 0, %s100
      %s118 = sphi 0, %s118
      %s120 = sphi 0, %s118
      %s121 = sphi 0, %s120
      %s135 = sphi 0, %s121
      %s139 = sphi 0, %s139
      %s141 = sphi 0, %s139
      %s142 = sphi 0, %s141
      %s156 = sphi 0, %s142
      %s160 = sphi 0, %s160
      %s162 = sphi 0, %s160
      %s163 = sphi 0, %s162
      %s177 = sphi 0, %s163
      %s181 = sphi 0, %s181
      %s183 = sphi 0, %s181
      %s184 = sphi 0, %s183
      %s198 = sphi 0, %s184
      %s202 = sphi 0, %s202
      %s204 = sphi 0, %s202
      %s205 = sphi 0, %s204
      %s219 = sphi 0, %s205
      %s223 = sphi 0, %s223
      %s225 = sphi 0, %s223
      %s226 = sphi 0, %s225
      %s240 = sphi 0, %s226
      %s246 = sphi 0, %s248
      %s249 = sphi 0, %s246
      %s250 = sphi 0, %s249
      %s266 = sphi 0, %s250
      %s272 = sphi 0, %s274
      %s275 = sphi 0, %s272
      %s276 = sphi 0, %s275
      %s292 = sphi 0, %s276
    $region4: #{_fused_forward.1} parent=1 // loop_header_branch
      %24 = sbr.rel (%p22) target = $region8
    $region5: #{_fused_forward.1} parent=1 // loop_body
      %s26 = ssub.s32 %s21, 1
      %s27 = ssub.s32 %s21, 2
      %s28 = sadd.s32 %s21, 1
      %s29 = ssub.s32 %s21, %s28
      %p30 = scmp.eq.s32.totalorder %s29, 0
      %s32 = sadd.s32 %s31, 1
      %s33 = scalar_select %p30, %s31, %s32
      %p36 = pneg %p30
      %p37 = scmp.eq.s32.totalorder %s21, 1
      %p38 = por %p36, %p37
      %p39 = scmp.ne.s32.totalorder %s31, %s34
      %p40 = scmp.eq.s32.totalorder %s21, 0
      %p41 = por %p39, %p40
      %p42 = scmp.ne.s32.totalorder %s31, %s34
      %p43 = scmp.eq.s32.totalorder %s26, 1
      %p44 = por %p42, %p43
      %p45 = scmp.ne.s32.totalorder %s34, %s35
      %p46 = scmp.eq.s32.totalorder %s26, 0
      %p47 = por %p45, %p46
      %p48 = scmp.ne.s32.totalorder %s34, %s35
      %p49 = scmp.eq.s32.totalorder %s27, 1
      %p50 = por %p48, %p49
      %p52 = scmp.ne.s32.totalorder %s35, %s51
      %p53 = scmp.eq.s32.totalorder %s27, 0
      %p54 = por %p52, %p53
      %s56 = sadd.s32 %s55, 1
      %p59 = scmp.eq.s32.totalorder %s21, 1
      %p60 = scmp.ne.s32.totalorder %s55, %s57
      %p61 = scmp.eq.s32.totalorder %s21, 0
      %p62 = por %p60, %p61
      %p63 = scmp.ne.s32.totalorder %s55, %s57
      %p64 = scmp.eq.s32.totalorder %s26, 1
      %p65 = por %p63, %p64
      %p66 = scmp.ne.s32.totalorder %s57, %s58
      %p67 = scmp.eq.s32.totalorder %s26, 0
      %p68 = por %p66, %p67
      %p69 = scmp.ne.s32.totalorder %s57, %s58
      %p70 = scmp.eq.s32.totalorder %s27, 1
      %p71 = por %p69, %p70
      %p73 = scmp.ne.s32.totalorder %s58, %s72
      %p74 = scmp.eq.s32.totalorder %s27, 0
      %p75 = por %p73, %p74
      %s77 = sadd.s32 %s76, 1
      %p80 = scmp.eq.s32.totalorder %s21, 1
      %p81 = scmp.ne.s32.totalorder %s76, %s78
      %p82 = scmp.eq.s32.totalorder %s21, 0
      %p83 = por %p81, %p82
      %p84 = scmp.ne.s32.totalorder %s76, %s78
      %p85 = scmp.eq.s32.totalorder %s26, 1
      %p86 = por %p84, %p85
      %p87 = scmp.ne.s32.totalorder %s78, %s79
      %p88 = scmp.eq.s32.totalorder %s26, 0
      %p89 = por %p87, %p88
      %p90 = scmp.ne.s32.totalorder %s78, %s79
      %p91 = scmp.eq.s32.totalorder %s27, 1
      %p92 = por %p90, %p91
      %p94 = scmp.ne.s32.totalorder %s79, %s93
      %p95 = scmp.eq.s32.totalorder %s27, 0
      %p96 = por %p94, %p95
      %s98 = sadd.s32 %s97, 1
      %p101 = scmp.eq.s32.totalorder %s21, 1
      %p102 = scmp.ne.s32.totalorder %s97, %s99
      %p103 = scmp.eq.s32.totalorder %s21, 0
      %p104 = por %p102, %p103
      %p105 = scmp.ne.s32.totalorder %s97, %s99
      %p106 = scmp.eq.s32.totalorder %s26, 1
      %p107 = por %p105, %p106
      %p108 = scmp.ne.s32.totalorder %s99, %s100
      %p109 = scmp.eq.s32.totalorder %s26, 0
      %p110 = por %p108, %p109
      %p111 = scmp.ne.s32.totalorder %s99, %s100
      %p112 = scmp.eq.s32.totalorder %s27, 1
      %p113 = por %p111, %p112
      %p115 = scmp.ne.s32.totalorder %s100, %s114
      %p116 = scmp.eq.s32.totalorder %s27, 0
      %p117 = por %p115, %p116
      %s119 = sadd.s32 %s118, 1
      %p122 = scmp.eq.s32.totalorder %s21, 1
      %p123 = scmp.ne.s32.totalorder %s118, %s120
      %p124 = scmp.eq.s32.totalorder %s21, 0
      %p125 = por %p123, %p124
      %p126 = scmp.ne.s32.totalorder %s118, %s120
      %p127 = scmp.eq.s32.totalorder %s26, 1
      %p128 = por %p126, %p127
      %p129 = scmp.ne.s32.totalorder %s120, %s121
      %p130 = scmp.eq.s32.totalorder %s26, 0
      %p131 = por %p129, %p130
      %p132 = scmp.ne.s32.totalorder %s120, %s121
      %p133 = scmp.eq.s32.totalorder %s27, 1
      %p134 = por %p132, %p133
      %p136 = scmp.ne.s32.totalorder %s121, %s135
      %p137 = scmp.eq.s32.totalorder %s27, 0
      %p138 = por %p136, %p137
      %s140 = sadd.s32 %s139, 1
      %p143 = scmp.eq.s32.totalorder %s21, 1
      %p144 = scmp.ne.s32.totalorder %s139, %s141
      %p145 = scmp.eq.s32.totalorder %s21, 0
      %p146 = por %p144, %p145
      %p147 = scmp.ne.s32.totalorder %s139, %s141
      %p148 = scmp.eq.s32.totalorder %s26, 1
      %p149 = por %p147, %p148
      %p150 = scmp.ne.s32.totalorder %s141, %s142
      %p151 = scmp.eq.s32.totalorder %s26, 0
      %p152 = por %p150, %p151
      %p153 = scmp.ne.s32.totalorder %s141, %s142
      %p154 = scmp.eq.s32.totalorder %s27, 1
      %p155 = por %p153, %p154
      %p157 = scmp.ne.s32.totalorder %s142, %s156
      %p158 = scmp.eq.s32.totalorder %s27, 0
      %p159 = por %p157, %p158
      %s161 = sadd.s32 %s160, 1
      %p164 = scmp.eq.s32.totalorder %s21, 1
      %p165 = scmp.ne.s32.totalorder %s160, %s162
      %p166 = scmp.eq.s32.totalorder %s21, 0
      %p167 = por %p165, %p166
      %p168 = scmp.ne.s32.totalorder %s160, %s162
      %p169 = scmp.eq.s32.totalorder %s26, 1
      %p170 = por %p168, %p169
      %p171 = scmp.ne.s32.totalorder %s162, %s163
      %p172 = scmp.eq.s32.totalorder %s26, 0
      %p173 = por %p171, %p172
      %p174 = scmp.ne.s32.totalorder %s162, %s163
      %p175 = scmp.eq.s32.totalorder %s27, 1
      %p176 = por %p174, %p175
      %p178 = scmp.ne.s32.totalorder %s163, %s177
      %p179 = scmp.eq.s32.totalorder %s27, 0
      %p180 = por %p178, %p179
      %s182 = sadd.s32 %s181, 1
      %p185 = scmp.eq.s32.totalorder %s21, 1
      %p186 = scmp.ne.s32.totalorder %s181, %s183
      %p187 = scmp.eq.s32.totalorder %s21, 0
      %p188 = por %p186, %p187
      %p189 = scmp.ne.s32.totalorder %s181, %s183
      %p190 = scmp.eq.s32.totalorder %s26, 1
      %p191 = por %p189, %p190
      %p192 = scmp.ne.s32.totalorder %s183, %s184
      %p193 = scmp.eq.s32.totalorder %s26, 0
      %p194 = por %p192, %p193
      %p195 = scmp.ne.s32.totalorder %s183, %s184
      %p196 = scmp.eq.s32.totalorder %s27, 1
      %p197 = por %p195, %p196
      %p199 = scmp.ne.s32.totalorder %s184, %s198
      %p200 = scmp.eq.s32.totalorder %s27, 0
      %p201 = por %p199, %p200
      %s203 = sadd.s32 %s202, 1
      %p206 = scmp.eq.s32.totalorder %s21, 1
      %p207 = scmp.ne.s32.totalorder %s202, %s204
      %p208 = scmp.eq.s32.totalorder %s21, 0
      %p209 = por %p207, %p208
      %p210 = scmp.ne.s32.totalorder %s202, %s204
      %p211 = scmp.eq.s32.totalorder %s26, 1
      %p212 = por %p210, %p211
      %p213 = scmp.ne.s32.totalorder %s204, %s205
      %p214 = scmp.eq.s32.totalorder %s26, 0
      %p215 = por %p213, %p214
      %p216 = scmp.ne.s32.totalorder %s204, %s205
      %p217 = scmp.eq.s32.totalorder %s27, 1
      %p218 = por %p216, %p217
      %p220 = scmp.ne.s32.totalorder %s205, %s219
      %p221 = scmp.eq.s32.totalorder %s27, 0
      %p222 = por %p220, %p221
      %s224 = sadd.s32 %s223, 1
      %p227 = scmp.eq.s32.totalorder %s21, 1
      %p228 = scmp.ne.s32.totalorder %s223, %s225
      %p229 = scmp.eq.s32.totalorder %s21, 0
      %p230 = por %p228, %p229
      %p231 = scmp.ne.s32.totalorder %s223, %s225
      %p232 = scmp.eq.s32.totalorder %s26, 1
      %p233 = por %p231, %p232
      %p234 = scmp.ne.s32.totalorder %s225, %s226
      %p235 = scmp.eq.s32.totalorder %s26, 0
      %p236 = por %p234, %p235
      %p237 = scmp.ne.s32.totalorder %s225, %s226
      %p238 = scmp.eq.s32.totalorder %s27, 1
      %p239 = por %p237, %p238
      %p241 = scmp.ne.s32.totalorder %s226, %s240
      %p242 = scmp.eq.s32.totalorder %s27, 0
      %p243 = por %p241, %p242
      %s244 = ssub.s32 %s21, %s28
      %p245 = scmp.eq.s32.totalorder %s244, 0
      %s247 = sadd.s32 %s246, 1
      %s248 = scalar_select %p245, %s246, %s247
      %p251 = pneg %p245
      %p252 = scmp.eq.s32.totalorder %s21, 1
      %p253 = por %p251, %p252
      %p254 = scmp.ne.s32.totalorder %s246, %s249
      %p255 = scmp.eq.s32.totalorder %s21, 0
      %p256 = por %p254, %p255
      %p257 = scmp.ne.s32.totalorder %s246, %s249
      %p258 = scmp.eq.s32.totalorder %s26, 1
      %p259 = por %p257, %p258
      %p260 = scmp.ne.s32.totalorder %s249, %s250
      %p261 = scmp.eq.s32.totalorder %s26, 0
      %p262 = por %p260, %p261
      %p263 = scmp.ne.s32.totalorder %s249, %s250
      %p264 = scmp.eq.s32.totalorder %s27, 1
      %p265 = por %p263, %p264
      %p267 = scmp.ne.s32.totalorder %s250, %s266
      %p268 = scmp.eq.s32.totalorder %s27, 0
      %p269 = por %p267, %p268
      %s270 = ssub.s32 %s21, %s28
      %p271 = scmp.eq.s32.totalorder %s270, 0
      %s273 = sadd.s32 %s272, 1
      %s274 = scalar_select %p271, %s272, %s273
      %p277 = pneg %p271
      %p278 = scmp.eq.s32.totalorder %s21, 1
      %p279 = por %p277, %p278
      %p280 = scmp.ne.s32.totalorder %s272, %s275
      %p281 = scmp.eq.s32.totalorder %s21, 0
      %p282 = por %p280, %p281
      %p283 = scmp.ne.s32.totalorder %s272, %s275
      %p284 = scmp.eq.s32.totalorder %s26, 1
      %p285 = por %p283, %p284
      %p286 = scmp.ne.s32.totalorder %s275, %s276
      %p287 = scmp.eq.s32.totalorder %s26, 0
      %p288 = por %p286, %p287
      %p289 = scmp.ne.s32.totalorder %s275, %s276
      %p290 = scmp.eq.s32.totalorder %s27, 1
      %p291 = por %p289, %p290
      %p293 = scmp.ne.s32.totalorder %s276, %s292
      %p294 = scmp.eq.s32.totalorder %s27, 0
      %p295 = por %p293, %p294
      %p296 = scmp.le.s32.totalorder 1, %s21
      %p297 = scmp.lt.s32.totalorder %s21, 3
      %p298 = pnand %p296, %p297
      %p299 = pneg %p298
      // Predicated region
      $region9: #{_fused_forward.1} parent=5 // pred_check
        _
      $region10: #{_fused_forward.1} parent=5 // pred_check_branch
        %301 = sbr.rel (%p298) target = $region12
      $region11: #{_fused_forward.1} parent=5 // pred_region
        %s302 = ssub.s32 %s21, 1
        // Predicated region
        $region13: #{_fused_forward.1} parent=11 // pred_check
          %p303 = pneg %p68
        $region14: #{_fused_forward.1} parent=11 // pred_check_branch
          %305 = sbr.rel (%p303) target = $region16
        $region15: #{_fused_forward.1} parent=11 // pred_region
          _
        $region16: #{_fused_forward.1} parent=11 // pred_fallthru
          _
        // Predicated region
        $region17: #{_fused_forward.1} parent=11 // pred_check
          %p306 = pneg %p89
        $region18: #{_fused_forward.1} parent=11 // pred_check_branch
          %308 = sbr.rel (%p306) target = $region20
        $region19: #{_fused_forward.1} parent=11 // pred_region
          _
        $region20: #{_fused_forward.1} parent=11 // pred_fallthru
          _
        // Predicated region
        $region21: #{_fused_forward.1} parent=11 // pred_check
          %p309 = pneg %p110
        $region22: #{_fused_forward.1} parent=11 // pred_check_branch
          %311 = sbr.rel (%p309) target = $region24
        $region23: #{_fused_forward.1} parent=11 // pred_region
          _
        $region24: #{_fused_forward.1} parent=11 // pred_fallthru
          _
        // Predicated region
        $region25: #{_fused_forward.1} parent=11 // pred_check
          %p312 = pneg %p131
        $region26: #{_fused_forward.1} parent=11 // pred_check_branch
          %314 = sbr.rel (%p312) target = $region28
        $region27: #{_fused_forward.1} parent=11 // pred_region
          _
        $region28: #{_fused_forward.1} parent=11 // pred_fallthru
          _
        // Predicated region
        $region29: #{_fused_forward.1} parent=11 // pred_check
          %p315 = pneg %p152
        $region30: #{_fused_forward.1} parent=11 // pred_check_branch
          %317 = sbr.rel (%p315) target = $region32
        $region31: #{_fused_forward.1} parent=11 // pred_region
          _
        $region32: #{_fused_forward.1} parent=11 // pred_fallthru
          _
        // Predicated region
        $region33: #{_fused_forward.1} parent=11 // pred_check
          %p318 = pneg %p173
        $region34: #{_fused_forward.1} parent=11 // pred_check_branch
          %320 = sbr.rel (%p318) target = $region36
        $region35: #{_fused_forward.1} parent=11 // pred_region
          _
        $region36: #{_fused_forward.1} parent=11 // pred_fallthru
          _
        // Predicated region
        $region37: #{_fused_forward.1} parent=11 // pred_check
          %p321 = pneg %p194
        $region38: #{_fused_forward.1} parent=11 // pred_check_branch
          %323 = sbr.rel (%p321) target = $region40
        $region39: #{_fused_forward.1} parent=11 // pred_region
          _
        $region40: #{_fused_forward.1} parent=11 // pred_fallthru
          _
        // Predicated region
        $region41: #{_fused_forward.1} parent=11 // pred_check
          %p324 = pneg %p215
        $region42: #{_fused_forward.1} parent=11 // pred_check_branch
          %326 = sbr.rel (%p324) target = $region44
        $region43: #{_fused_forward.1} parent=11 // pred_region
          _
        $region44: #{_fused_forward.1} parent=11 // pred_fallthru
          _
        // Predicated region
        $region45: #{_fused_forward.1} parent=11 // pred_check
          %p327 = pneg %p236
        $region46: #{_fused_forward.1} parent=11 // pred_check_branch
          %329 = sbr.rel (%p327) target = $region48
        $region47: #{_fused_forward.1} parent=11 // pred_region
          _
        $region48: #{_fused_forward.1} parent=11 // pred_fallthru
          _
      $region12: #{_fused_forward.1} parent=5 // pred_fallthru
        _
      %p330 = scmp.lt.s32.totalorder %s21, 2
      // Predicated region
      $region49: #{_fused_forward.1} parent=5 // pred_check
        %p331 = pneg %p330
      $region50: #{_fused_forward.1} parent=5 // pred_check_branch
        %333 = sbr.rel (%p331) target = $region52
      $region51: #{_fused_forward.1} parent=5 // pred_region
        // Predicated region
        $region53: #{_fused_forward.1} parent=51 // pred_check
          %p334 = pneg %p41
        $region54: #{_fused_forward.1} parent=51 // pred_check_branch
          %336 = sbr.rel (%p334) target = $region56
        $region55: #{_fused_forward.1} parent=51 // pred_region
          %p337 = scmp.lt.s32.totalorder %s21, 1
          %s338 = scalar_select %p337, %s21, 1
          %s339 = smul.addr %s338, 72
          %s340 = smul.addr %s339, 8
          %s341 = scalar_lea.vmem %s0, %s340
        $region56: #{_fused_forward.1} parent=51 // pred_fallthru
          _
      $region52: #{_fused_forward.1} parent=5 // pred_fallthru
        _
      %p342 = scmp.le.s32.totalorder 1, %s21
      %p343 = scmp.lt.s32.totalorder %s21, 3
      %p344 = pnand %p342, %p343
      %p345 = pneg %p344
      // Predicated region
      $region57: #{_fused_forward.1} parent=5 // pred_check
        _
      $region58: #{_fused_forward.1} parent=5 // pred_check_branch
        %347 = sbr.rel (%p344) target = $region60
      $region59: #{_fused_forward.1} parent=5 // pred_region
        %s348 = ssub.s32 %s21, 1
        %p349 = scmp.lt.s32.totalorder %s26, 1
        %s350 = scalar_select %p349, %s26, 1
        %s351 = smul.addr %s350, 72
        %s352 = smul.addr %s351, 8
        %s353 = scalar_lea.vmem %s0, %s352
        %p354 = pneg %p47
        %p355 = pneg %p44
        %p356 = pneg %p68
        %p357 = pneg %p65
        %p358 = pneg %p89
        %p359 = pneg %p86
        %p360 = pneg %p110
        %p361 = pneg %p107
        %p362 = pneg %p131
        %p363 = pneg %p128
        %p364 = pneg %p152
        %p365 = pneg %p149
        %p366 = pneg %p173
        %p367 = pneg %p170
        %p368 = pneg %p194
        %p369 = pneg %p191
        %p370 = pneg %p215
        %p371 = pneg %p212
        %p372 = pneg %p236
        %p373 = pneg %p233
        %p374 = pneg %p262
        %p375 = pneg %p259
        %s376 = sand.u32 %s249, 1
        %s377 = scalar_lea.sflag [#allocation5], %s376
        %s378 = sand.u32 %s249, 1
        %s379 = scalar_lea.vmem [#allocation4], %s378
        %p380 = pneg %p288
        %p381 = pneg %p285
        %s382 = smul.u32 32, %s26
        %p383 = scmp.lt.s32.totalorder %s382, 63
        %s384 = scalar_select %p383, %s382, 63
        %s385 = smul.addr %s384, 8
        %s386 = scalar_lea.vmem %s11, %s385
        %p387 = scmp.lt.s32.totalorder %s26, 1
        %s388 = scalar_select %p387, %s26, 1
        %s389 = smul.addr %s388, 72
        %s390 = smul.addr %s389, 8
        %s391 = scalar_lea.vmem %s0, %s390
        %s392 = smul.u32 32, %s26
        %p393 = scmp.lt.s32.totalorder %s392, 63
        %s394 = scalar_select %p393, %s392, 63
        %s395 = smul.addr %s394, 8
        %s396 = scalar_lea.vmem %s11, %s395
        %s397 = smul.u32 32, %s26
        %vm399 = vcmask 64512
        %400 = vst.msk [vmem:[#allocation2] sm:$0xff] %vm399, 0.0
        %401 = vst.msk [vmem:[#allocation2 + $0x8] sm:$0xff] %vm399, 0.0
        %402 = vst.msk [vmem:[#allocation2 + $0x10] sm:$0xff] %vm399, 0.0
        %403 = vst.msk [vmem:[#allocation2 + $0x18] sm:$0xff] %vm399, 0.0
        %s404 = scalar_lea.vmem [#allocation2], 544
        %405 = vst.msk [vmem:[%s404] sm:$0xff] %vm399, 0.0
        %406 = vst.msk [vmem:[%s404 + $0x8] sm:$0xff] %vm399, 0.0
        %407 = vst.msk [vmem:[%s404 + $0x10] sm:$0xff] %vm399, 0.0
        %408 = vst.msk [vmem:[%s404 + $0x18] sm:$0xff] %vm399, 0.0
        %s409 = scalar_lea.vmem [#allocation2], 32
        %vm410 = vcmask 57344
        %411 = vst.msk [vmem:[%s409 + $0x7] sm:$0x1] %vm410, 0.0
        %412 = vst.msk [vmem:[%s409 + $0x27] sm:$0x1] %vm410, 0.0
        %413 = vst.msk [vmem:[%s409 + $0x47] sm:$0x1] %vm410, 0.0
        %414 = vst.msk [vmem:[%s409 + $0x67] sm:$0x1] %vm410, 0.0
        %415 = vst.msk [vmem:[%s409 + $0x87] sm:$0x1] %vm410, 0.0
        %416 = vst.msk [vmem:[%s409 + $0xa7] sm:$0x1] %vm410, 0.0
        %417 = vst.msk [vmem:[%s409 + $0xc7] sm:$0x1] %vm410, 0.0
        %418 = vst.msk [vmem:[%s409 + $0xe7] sm:$0x1] %vm410, 0.0
        %419 = vst.msk [vmem:[%s409 + $0x107] sm:$0x1] %vm410, 0.0
        %420 = vst.msk [vmem:[%s409 + $0x127] sm:$0x1] %vm410, 0.0
        %421 = vst.msk [vmem:[%s409 + $0x147] sm:$0x1] %vm410, 0.0
        %422 = vst.msk [vmem:[%s409 + $0x167] sm:$0x1] %vm410, 0.0
        %423 = vst.msk [vmem:[%s409 + $0x187] sm:$0x1] %vm410, 0.0
        %424 = vst.msk [vmem:[%s409 + $0x1a7] sm:$0x1] %vm410, 0.0
        %425 = vst.msk [vmem:[%s409 + $0x1c7] sm:$0x1] %vm410, 0.0
        %426 = vst.msk [vmem:[%s409 + $0x1e7] sm:$0x1] %vm410, 0.0
        %427 = vst.msk [vmem:[%s409 + $0x18] sm:$0x1] %vm410, 0.0
        %428 = vst.msk [vmem:[%s409 + $0x38] sm:$0x1] %vm410, 0.0
        %429 = vst.msk [vmem:[%s409 + $0x58] sm:$0x1] %vm410, 0.0
        %430 = vst.msk [vmem:[%s409 + $0x78] sm:$0x1] %vm410, 0.0
        %431 = vst.msk [vmem:[%s409 + $0x98] sm:$0x1] %vm410, 0.0
        %432 = vst.msk [vmem:[%s409 + $0xb8] sm:$0x1] %vm410, 0.0
        %433 = vst.msk [vmem:[%s409 + $0xd8] sm:$0x1] %vm410, 0.0
        %434 = vst.msk [vmem:[%s409 + $0xf8] sm:$0x1] %vm410, 0.0
        %435 = vst.msk [vmem:[%s409 + $0x118] sm:$0x1] %vm410, 0.0
        %436 = vst.msk [vmem:[%s409 + $0x138] sm:$0x1] %vm410, 0.0
        %437 = vst.msk [vmem:[%s409 + $0x158] sm:$0x1] %vm410, 0.0
        %438 = vst.msk [vmem:[%s409 + $0x178] sm:$0x1] %vm410, 0.0
        %439 = vst.msk [vmem:[%s409 + $0x198] sm:$0x1] %vm410, 0.0
        %440 = vst.msk [vmem:[%s409 + $0x1b8] sm:$0x1] %vm410, 0.0
        %441 = vst.msk [vmem:[%s409 + $0x1d8] sm:$0x1] %vm410, 0.0
        %442 = vst.msk [vmem:[%s409 + $0x1f8] sm:$0x1] %vm410, 0.0
        %443 = vst.msk [vmem:[#allocation3] sm:$0xff] %vm399, 0.0
        %444 = vst.msk [vmem:[#allocation3 + $0x8] sm:$0xff] %vm399, 0.0
        %445 = vst.msk [vmem:[#allocation3 + $0x10] sm:$0xff] %vm399, 0.0
        %446 = vst.msk [vmem:[#allocation3 + $0x18] sm:$0xff] %vm399, 0.0
        %s447 = scalar_lea.vmem [#allocation3], 544
        %448 = vst.msk [vmem:[%s447] sm:$0xff] %vm399, 0.0
        %449 = vst.msk [vmem:[%s447 + $0x8] sm:$0xff] %vm399, 0.0
        %450 = vst.msk [vmem:[%s447 + $0x10] sm:$0xff] %vm399, 0.0
        %451 = vst.msk [vmem:[%s447 + $0x18] sm:$0xff] %vm399, 0.0
        %s452 = scalar_lea.vmem [#allocation3], 32
        %453 = vst.msk [vmem:[%s452 + $0x7] sm:$0x1] %vm410, 0.0
        %454 = vst.msk [vmem:[%s452 + $0x27] sm:$0x1] %vm410, 0.0
        %455 = vst.msk [vmem:[%s452 + $0x47] sm:$0x1] %vm410, 0.0
        %456 = vst.msk [vmem:[%s452 + $0x67] sm:$0x1] %vm410, 0.0
        %457 = vst.msk [vmem:[%s452 + $0x87] sm:$0x1] %vm410, 0.0
        %458 = vst.msk [vmem:[%s452 + $0xa7] sm:$0x1] %vm410, 0.0
        %459 = vst.msk [vmem:[%s452 + $0xc7] sm:$0x1] %vm410, 0.0
        %460 = vst.msk [vmem:[%s452 + $0xe7] sm:$0x1] %vm410, 0.0
        %461 = vst.msk [vmem:[%s452 + $0x107] sm:$0x1] %vm410, 0.0
        %462 = vst.msk [vmem:[%s452 + $0x127] sm:$0x1] %vm410, 0.0
        %463 = vst.msk [vmem:[%s452 + $0x147] sm:$0x1] %vm410, 0.0
        %464 = vst.msk [vmem:[%s452 + $0x167] sm:$0x1] %vm410, 0.0
        %465 = vst.msk [vmem:[%s452 + $0x187] sm:$0x1] %vm410, 0.0
        %466 = vst.msk [vmem:[%s452 + $0x1a7] sm:$0x1] %vm410, 0.0
        %467 = vst.msk [vmem:[%s452 + $0x1c7] sm:$0x1] %vm410, 0.0
        %468 = vst.msk [vmem:[%s452 + $0x1e7] sm:$0x1] %vm410, 0.0
        %469 = vst.msk [vmem:[%s452 + $0x18] sm:$0x1] %vm410, 0.0
        %470 = vst.msk [vmem:[%s452 + $0x38] sm:$0x1] %vm410, 0.0
        %471 = vst.msk [vmem:[%s452 + $0x58] sm:$0x1] %vm410, 0.0
        %472 = vst.msk [vmem:[%s452 + $0x78] sm:$0x1] %vm410, 0.0
        %473 = vst.msk [vmem:[%s452 + $0x98] sm:$0x1] %vm410, 0.0
        %474 = vst.msk [vmem:[%s452 + $0xb8] sm:$0x1] %vm410, 0.0
        %475 = vst.msk [vmem:[%s452 + $0xd8] sm:$0x1] %vm410, 0.0
        %476 = vst.msk [vmem:[%s452 + $0xf8] sm:$0x1] %vm410, 0.0
        %477 = vst.msk [vmem:[%s452 + $0x118] sm:$0x1] %vm410, 0.0
        %478 = vst.msk [vmem:[%s452 + $0x138] sm:$0x1] %vm410, 0.0
        %479 = vst.msk [vmem:[%s452 + $0x158] sm:$0x1] %vm410, 0.0
        %480 = vst.msk [vmem:[%s452 + $0x178] sm:$0x1] %vm410, 0.0
        %481 = vst.msk [vmem:[%s452 + $0x198] sm:$0x1] %vm410, 0.0
        %482 = vst.msk [vmem:[%s452 + $0x1b8] sm:$0x1] %vm410, 0.0
        %483 = vst.msk [vmem:[%s452 + $0x1d8] sm:$0x1] %vm410, 0.0
        %484 = vst.msk [vmem:[%s452 + $0x1f8] sm:$0x1] %vm410, 0.0
        %v485 = vld [vmem:[%s391 + $0x7] sm:$0xff]
        %v486 = vld [vmem:[%s391 + $0xf] sm:$0xff]
        %v487 = vld [vmem:[%s391 + $0x27] sm:$0xff]
        %v488 = vld [vmem:[%s391 + $0x2f] sm:$0xff]
        %v489 = vld [vmem:[%s391 + $0x47] sm:$0xff]
        %v490 = vld [vmem:[%s391 + $0x4f] sm:$0xff]
        %v491 = vld [vmem:[%s391 + $0x67] sm:$0xff]
        %v492 = vld [vmem:[%s391 + $0x6f] sm:$0xff]
        %v493 = vld [vmem:[%s391 + $0x87] sm:$0xff]
        %v494 = vld [vmem:[%s391 + $0x8f] sm:$0xff]
        %v495 = vld [vmem:[%s391 + $0xa7] sm:$0xff]
        %v496 = vld [vmem:[%s391 + $0xaf] sm:$0xff]
        %v497 = vld [vmem:[%s391 + $0xc7] sm:$0xff]
        %v498 = vld [vmem:[%s391 + $0xcf] sm:$0xff]
        %v499 = vld [vmem:[%s391 + $0xe7] sm:$0xff]
        %v500 = vld [vmem:[%s391 + $0xef] sm:$0xff]
        %v501 = vld [vmem:[%s391 + $0x107] sm:$0xff]
        %v502 = vld [vmem:[%s391 + $0x10f] sm:$0xff]
        %v503 = vld [vmem:[%s391 + $0x127] sm:$0xff]
        %v504 = vld [vmem:[%s391 + $0x12f] sm:$0xff]
        %v505 = vld [vmem:[%s391 + $0x147] sm:$0xff]
        %v506 = vld [vmem:[%s391 + $0x14f] sm:$0xff]
        %v507 = vld [vmem:[%s391 + $0x167] sm:$0xff]
        %v508 = vld [vmem:[%s391 + $0x16f] sm:$0xff]
        %v509 = vld [vmem:[%s391 + $0x187] sm:$0xff]
        %v510 = vld [vmem:[%s391 + $0x18f] sm:$0xff]
        %v511 = vld [vmem:[%s391 + $0x1a7] sm:$0xff]
        %v512 = vld [vmem:[%s391 + $0x1af] sm:$0xff]
        %v513 = vld [vmem:[%s391 + $0x1c7] sm:$0xff]
        %v514 = vld [vmem:[%s391 + $0x1cf] sm:$0xff]
        %v515 = vld [vmem:[%s391 + $0x1e7] sm:$0xff]
        %v516 = vld [vmem:[%s391 + $0x1ef] sm:$0xff]
        %v517 = vpack.c.bf16 %v486, %v485
        %v518 = vpack.c.bf16 %v488, %v487
        %v519 = vpack.c.bf16 %v490, %v489
        %v520 = vpack.c.bf16 %v492, %v491
        %v521 = vpack.c.bf16 %v494, %v493
        %v522 = vpack.c.bf16 %v496, %v495
        %v523 = vpack.c.bf16 %v498, %v497
        %v524 = vpack.c.bf16 %v500, %v499
        %v525 = vpack.c.bf16 %v502, %v501
        %v526 = vpack.c.bf16 %v504, %v503
        %v527 = vpack.c.bf16 %v506, %v505
        %v528 = vpack.c.bf16 %v508, %v507
        %v529 = vpack.c.bf16 %v510, %v509
        %v530 = vpack.c.bf16 %v512, %v511
        %v531 = vpack.c.bf16 %v514, %v513
        %v532 = vpack.c.bf16 %v516, %v515
        %v533 = vld [vmem:[%s391 + $0x8] sm:$0xff]
        %v534 = vld [vmem:[%s391 + $0x10] sm:$0xff]
        %v535 = vld [vmem:[%s391 + $0x28] sm:$0xff]
        %v536 = vld [vmem:[%s391 + $0x30] sm:$0xff]
        %v537 = vld [vmem:[%s391 + $0x48] sm:$0xff]
        %v538 = vld [vmem:[%s391 + $0x50] sm:$0xff]
        %v539 = vld [vmem:[%s391 + $0x68] sm:$0xff]
        %v540 = vld [vmem:[%s391 + $0x70] sm:$0xff]
        %v541 = vld [vmem:[%s391 + $0x88] sm:$0xff]
        %v542 = vld [vmem:[%s391 + $0x90] sm:$0xff]
        %v543 = vld [vmem:[%s391 + $0xa8] sm:$0xff]
        %v544 = vld [vmem:[%s391 + $0xb0] sm:$0xff]
        %v545 = vld [vmem:[%s391 + $0xc8] sm:$0xff]
        %v546 = vld [vmem:[%s391 + $0xd0] sm:$0xff]
        %v547 = vld [vmem:[%s391 + $0xe8] sm:$0xff]
        %v548 = vld [vmem:[%s391 + $0xf0] sm:$0xff]
        %v549 = vld [vmem:[%s391 + $0x108] sm:$0xff]
        %v550 = vld [vmem:[%s391 + $0x110] sm:$0xff]
        %v551 = vld [vmem:[%s391 + $0x128] sm:$0xff]
        %v552 = vld [vmem:[%s391 + $0x130] sm:$0xff]
        %v553 = vld [vmem:[%s391 + $0x148] sm:$0xff]
        %v554 = vld [vmem:[%s391 + $0x150] sm:$0xff]
        %v555 = vld [vmem:[%s391 + $0x168] sm:$0xff]
        %v556 = vld [vmem:[%s391 + $0x170] sm:$0xff]
        %v557 = vld [vmem:[%s391 + $0x188] sm:$0xff]
        %v558 = vld [vmem:[%s391 + $0x190] sm:$0xff]
        %v559 = vld [vmem:[%s391 + $0x1a8] sm:$0xff]
        %v560 = vld [vmem:[%s391 + $0x1b0] sm:$0xff]
        %v561 = vld [vmem:[%s391 + $0x1c8] sm:$0xff]
        %v562 = vld [vmem:[%s391 + $0x1d0] sm:$0xff]
        %v563 = vld [vmem:[%s391 + $0x1e8] sm:$0xff]
        %v564 = vld [vmem:[%s391 + $0x1f0] sm:$0xff]
        %v565 = vpack.c.bf16 %v534, %v533
        %v566 = vpack.c.bf16 %v536, %v535
        %v567 = vpack.c.bf16 %v538, %v537
        %v568 = vpack.c.bf16 %v540, %v539
        %v569 = vpack.c.bf16 %v542, %v541
        %v570 = vpack.c.bf16 %v544, %v543
        %v571 = vpack.c.bf16 %v546, %v545
        %v572 = vpack.c.bf16 %v548, %v547
        %v573 = vpack.c.bf16 %v550, %v549
        %v574 = vpack.c.bf16 %v552, %v551
        %v575 = vpack.c.bf16 %v554, %v553
        %v576 = vpack.c.bf16 %v556, %v555
        %v577 = vpack.c.bf16 %v558, %v557
        %v578 = vpack.c.bf16 %v560, %v559
        %v579 = vpack.c.bf16 %v562, %v561
        %v580 = vpack.c.bf16 %v564, %v563
        %v581 = vld [vmem:[%s391 + $0x9] sm:$0xff]
        %v582 = vld [vmem:[%s391 + $0x11] sm:$0xff]
        %v583 = vld [vmem:[%s391 + $0x29] sm:$0xff]
        %v584 = vld [vmem:[%s391 + $0x31] sm:$0xff]
        %v585 = vld [vmem:[%s391 + $0x49] sm:$0xff]
        %v586 = vld [vmem:[%s391 + $0x51] sm:$0xff]
        %v587 = vld [vmem:[%s391 + $0x69] sm:$0xff]
        %v588 = vld [vmem:[%s391 + $0x71] sm:$0xff]
        %v589 = vld [vmem:[%s391 + $0x89] sm:$0xff]
        %v590 = vld [vmem:[%s391 + $0x91] sm:$0xff]
        %v591 = vld [vmem:[%s391 + $0xa9] sm:$0xff]
        %v592 = vld [vmem:[%s391 + $0xb1] sm:$0xff]
        %v593 = vld [vmem:[%s391 + $0xc9] sm:$0xff]
        %v594 = vld [vmem:[%s391 + $0xd1] sm:$0xff]
        %v595 = vld [vmem:[%s391 + $0xe9] sm:$0xff]
        %v596 = vld [vmem:[%s391 + $0xf1] sm:$0xff]
        %v597 = vld [vmem:[%s391 + $0x109] sm:$0xff]
        %v598 = vld [vmem:[%s391 + $0x111] sm:$0xff]
        %v599 = vld [vmem:[%s391 + $0x129] sm:$0xff]
        %v600 = vld [vmem:[%s391 + $0x131] sm:$0xff]
        %v601 = vld [vmem:[%s391 + $0x149] sm:$0xff]
        %v602 = vld [vmem:[%s391 + $0x151] sm:$0xff]
        %v603 = vld [vmem:[%s391 + $0x169] sm:$0xff]
        %v604 = vld [vmem:[%s391 + $0x171] sm:$0xff]
        %v605 = vld [vmem:[%s391 + $0x189] sm:$0xff]
        %v606 = vld [vmem:[%s391 + $0x191] sm:$0xff]
        %v607 = vld [vmem:[%s391 + $0x1a9] sm:$0xff]
        %v608 = vld [vmem:[%s391 + $0x1b1] sm:$0xff]
        %v609 = vld [vmem:[%s391 + $0x1c9] sm:$0xff]
        %v610 = vld [vmem:[%s391 + $0x1d1] sm:$0xff]
        %v611 = vld [vmem:[%s391 + $0x1e9] sm:$0xff]
        %v612 = vld [vmem:[%s391 + $0x1f1] sm:$0xff]
        %v613 = vpack.c.bf16 %v582, %v581
        %v614 = vpack.c.bf16 %v584, %v583
        %v615 = vpack.c.bf16 %v586, %v585
        %v616 = vpack.c.bf16 %v588, %v587
        %v617 = vpack.c.bf16 %v590, %v589
        %v618 = vpack.c.bf16 %v592, %v591
        %v619 = vpack.c.bf16 %v594, %v593
        %v620 = vpack.c.bf16 %v596, %v595
        %v621 = vpack.c.bf16 %v598, %v597
        %v622 = vpack.c.bf16 %v600, %v599
        %v623 = vpack.c.bf16 %v602, %v601
        %v624 = vpack.c.bf16 %v604, %v603
        %v625 = vpack.c.bf16 %v606, %v605
        %v626 = vpack.c.bf16 %v608, %v607
        %v627 = vpack.c.bf16 %v610, %v609
        %v628 = vpack.c.bf16 %v612, %v611
        %s629 = scalar_lea.vmem %s391, 32
        %v630 = vld [vmem:[%s629 + $0x7] sm:$0xff]
        %v631 = vld [vmem:[%s629 + $0xf] sm:$0xff]
        %v632 = vld [vmem:[%s629 + $0x27] sm:$0xff]
        %v633 = vld [vmem:[%s629 + $0x2f] sm:$0xff]
        %v634 = vld [vmem:[%s629 + $0x47] sm:$0xff]
        %v635 = vld [vmem:[%s629 + $0x4f] sm:$0xff]
        %v636 = vld [vmem:[%s629 + $0x67] sm:$0xff]
        %v637 = vld [vmem:[%s629 + $0x6f] sm:$0xff]
        %v638 = vld [vmem:[%s629 + $0x87] sm:$0xff]
        %v639 = vld [vmem:[%s629 + $0x8f] sm:$0xff]
        %v640 = vld [vmem:[%s629 + $0xa7] sm:$0xff]
        %v641 = vld [vmem:[%s629 + $0xaf] sm:$0xff]
        %v642 = vld [vmem:[%s629 + $0xc7] sm:$0xff]
        %v643 = vld [vmem:[%s629 + $0xcf] sm:$0xff]
        %v644 = vld [vmem:[%s629 + $0xe7] sm:$0xff]
        %v645 = vld [vmem:[%s629 + $0xef] sm:$0xff]
        %v646 = vld [vmem:[%s629 + $0x107] sm:$0xff]
        %v647 = vld [vmem:[%s629 + $0x10f] sm:$0xff]
        %v648 = vld [vmem:[%s629 + $0x127] sm:$0xff]
        %v649 = vld [vmem:[%s629 + $0x12f] sm:$0xff]
        %v650 = vld [vmem:[%s629 + $0x147] sm:$0xff]
        %v651 = vld [vmem:[%s629 + $0x14f] sm:$0xff]
        %v652 = vld [vmem:[%s629 + $0x167] sm:$0xff]
        %v653 = vld [vmem:[%s629 + $0x16f] sm:$0xff]
        %v654 = vld [vmem:[%s629 + $0x187] sm:$0xff]
        %v655 = vld [vmem:[%s629 + $0x18f] sm:$0xff]
        %v656 = vld [vmem:[%s629 + $0x1a7] sm:$0xff]
        %v657 = vld [vmem:[%s629 + $0x1af] sm:$0xff]
        %v658 = vld [vmem:[%s629 + $0x1c7] sm:$0xff]
        %v659 = vld [vmem:[%s629 + $0x1cf] sm:$0xff]
        %v660 = vld [vmem:[%s629 + $0x1e7] sm:$0xff]
        %v661 = vld [vmem:[%s629 + $0x1ef] sm:$0xff]
        %v662 = vpack.c.bf16 %v631, %v630
        %v663 = vpack.c.bf16 %v633, %v632
        %v664 = vpack.c.bf16 %v635, %v634
        %v665 = vpack.c.bf16 %v637, %v636
        %v666 = vpack.c.bf16 %v639, %v638
        %v667 = vpack.c.bf16 %v641, %v640
        %v668 = vpack.c.bf16 %v643, %v642
        %v669 = vpack.c.bf16 %v645, %v644
        %v670 = vpack.c.bf16 %v647, %v646
        %v671 = vpack.c.bf16 %v649, %v648
        %v672 = vpack.c.bf16 %v651, %v650
        %v673 = vpack.c.bf16 %v653, %v652
        %v674 = vpack.c.bf16 %v655, %v654
        %v675 = vpack.c.bf16 %v657, %v656
        %v676 = vpack.c.bf16 %v659, %v658
        %v677 = vpack.c.bf16 %v661, %v660
        %v678 = vld [vmem:[%s629 + $0x8] sm:$0xff]
        %v679 = vld [vmem:[%s629 + $0x10] sm:$0xff]
        %v680 = vld [vmem:[%s629 + $0x28] sm:$0xff]
        %v681 = vld [vmem:[%s629 + $0x30] sm:$0xff]
        %v682 = vld [vmem:[%s629 + $0x48] sm:$0xff]
        %v683 = vld [vmem:[%s629 + $0x50] sm:$0xff]
        %v684 = vld [vmem:[%s629 + $0x68] sm:$0xff]
        %v685 = vld [vmem:[%s629 + $0x70] sm:$0xff]
        %v686 = vld [vmem:[%s629 + $0x88] sm:$0xff]
        %v687 = vld [vmem:[%s629 + $0x90] sm:$0xff]
        %v688 = vld [vmem:[%s629 + $0xa8] sm:$0xff]
        %v689 = vld [vmem:[%s629 + $0xb0] sm:$0xff]
        %v690 = vld [vmem:[%s629 + $0xc8] sm:$0xff]
        %v691 = vld [vmem:[%s629 + $0xd0] sm:$0xff]
        %v692 = vld [vmem:[%s629 + $0xe8] sm:$0xff]
        %v693 = vld [vmem:[%s629 + $0xf0] sm:$0xff]
        %v694 = vld [vmem:[%s629 + $0x108] sm:$0xff]
        %v695 = vld [vmem:[%s629 + $0x110] sm:$0xff]
        %v696 = vld [vmem:[%s629 + $0x128] sm:$0xff]
        %v697 = vld [vmem:[%s629 + $0x130] sm:$0xff]
        %v698 = vld [vmem:[%s629 + $0x148] sm:$0xff]
        %v699 = vld [vmem:[%s629 + $0x150] sm:$0xff]
        %v700 = vld [vmem:[%s629 + $0x168] sm:$0xff]
        %v701 = vld [vmem:[%s629 + $0x170] sm:$0xff]
        %v702 = vld [vmem:[%s629 + $0x188] sm:$0xff]
        %v703 = vld [vmem:[%s629 + $0x190] sm:$0xff]
        %v704 = vld [vmem:[%s629 + $0x1a8] sm:$0xff]
        %v705 = vld [vmem:[%s629 + $0x1b0] sm:$0xff]
        %v706 = vld [vmem:[%s629 + $0x1c8] sm:$0xff]
        %v707 = vld [vmem:[%s629 + $0x1d0] sm:$0xff]
        %v708 = vld [vmem:[%s629 + $0x1e8] sm:$0xff]
        %v709 = vld [vmem:[%s629 + $0x1f0] sm:$0xff]
        %v710 = vpack.c.bf16 %v679, %v678
        %v711 = vpack.c.bf16 %v681, %v680
        %v712 = vpack.c.bf16 %v683, %v682
        %v713 = vpack.c.bf16 %v685, %v684
        %v714 = vpack.c.bf16 %v687, %v686
        %v715 = vpack.c.bf16 %v689, %v688
        %v716 = vpack.c.bf16 %v691, %v690
        %v717 = vpack.c.bf16 %v693, %v692
        %v718 = vpack.c.bf16 %v695, %v694
        %v719 = vpack.c.bf16 %v697, %v696
        %v720 = vpack.c.bf16 %v699, %v698
        %v721 = vpack.c.bf16 %v701, %v700
        %v722 = vpack.c.bf16 %v703, %v702
        %v723 = vpack.c.bf16 %v705, %v704
        %v724 = vpack.c.bf16 %v707, %v706
        %v725 = vpack.c.bf16 %v709, %v708
        %v726 = vld [vmem:[%s629 + $0x9] sm:$0xff]
        %v727 = vld [vmem:[%s629 + $0x11] sm:$0xff]
        %v728 = vld [vmem:[%s629 + $0x29] sm:$0xff]
        %v729 = vld [vmem:[%s629 + $0x31] sm:$0xff]
        %v730 = vld [vmem:[%s629 + $0x49] sm:$0xff]
        %v731 = vld [vmem:[%s629 + $0x51] sm:$0xff]
        %v732 = vld [vmem:[%s629 + $0x69] sm:$0xff]
        %v733 = vld [vmem:[%s629 + $0x71] sm:$0xff]
        %v734 = vld [vmem:[%s629 + $0x89] sm:$0xff]
        %v735 = vld [vmem:[%s629 + $0x91] sm:$0xff]
        %v736 = vld [vmem:[%s629 + $0xa9] sm:$0xff]
        %v737 = vld [vmem:[%s629 + $0xb1] sm:$0xff]
        %v738 = vld [vmem:[%s629 + $0xc9] sm:$0xff]
        %v739 = vld [vmem:[%s629 + $0xd1] sm:$0xff]
        %v740 = vld [vmem:[%s629 + $0xe9] sm:$0xff]
        %v741 = vld [vmem:[%s629 + $0xf1] sm:$0xff]
        %v742 = vld [vmem:[%s629 + $0x109] sm:$0xff]
        %v743 = vld [vmem:[%s629 + $0x111] sm:$0xff]
        %v744 = vld [vmem:[%s629 + $0x129] sm:$0xff]
        %v745 = vld [vmem:[%s629 + $0x131] sm:$0xff]
        %v746 = vld [vmem:[%s629 + $0x149] sm:$0xff]
        %v747 = vld [vmem:[%s629 + $0x151] sm:$0xff]
        %v748 = vld [vmem:[%s629 + $0x169] sm:$0xff]
        %v749 = vld [vmem:[%s629 + $0x171] sm:$0xff]
        %v750 = vld [vmem:[%s629 + $0x189] sm:$0xff]
        %v751 = vld [vmem:[%s629 + $0x191] sm:$0xff]
        %v752 = vld [vmem:[%s629 + $0x1a9] sm:$0xff]
        %v753 = vld [vmem:[%s629 + $0x1b1] sm:$0xff]
        %v754 = vld [vmem:[%s629 + $0x1c9] sm:$0xff]
        %v755 = vld [vmem:[%s629 + $0x1d1] sm:$0xff]
        %v756 = vld [vmem:[%s629 + $0x1e9] sm:$0xff]
        %v757 = vld [vmem:[%s629 + $0x1f1] sm:$0xff]
        %v758 = vpack.c.bf16 %v727, %v726
        %v759 = vpack.c.bf16 %v729, %v728
        %v760 = vpack.c.bf16 %v731, %v730
        %v761 = vpack.c.bf16 %v733, %v732
        %v762 = vpack.c.bf16 %v735, %v734
        %v763 = vpack.c.bf16 %v737, %v736
        %v764 = vpack.c.bf16 %v739, %v738
        %v765 = vpack.c.bf16 %v741, %v740
        %v766 = vpack.c.bf16 %v743, %v742
        %v767 = vpack.c.bf16 %v745, %v744
        %v768 = vpack.c.bf16 %v747, %v746
        %v769 = vpack.c.bf16 %v749, %v748
        %v770 = vpack.c.bf16 %v751, %v750
        %v771 = vpack.c.bf16 %v753, %v752
        %v772 = vpack.c.bf16 %v755, %v754
        %v773 = vpack.c.bf16 %v757, %v756
        %s774 = scalar_lea.vmem %s391, 64
        %v775 = vld [vmem:[%s774 + $0x7] sm:$0xff]
        %v776 = vld [vmem:[%s774 + $0xf] sm:$0xff]
        %v777 = vld [vmem:[%s774 + $0x27] sm:$0xff]
        %v778 = vld [vmem:[%s774 + $0x2f] sm:$0xff]
        %v779 = vld [vmem:[%s774 + $0x47] sm:$0xff]
        %v780 = vld [vmem:[%s774 + $0x4f] sm:$0xff]
        %v781 = vld [vmem:[%s774 + $0x67] sm:$0xff]
        %v782 = vld [vmem:[%s774 + $0x6f] sm:$0xff]
        %v783 = vld [vmem:[%s774 + $0x87] sm:$0xff]
        %v784 = vld [vmem:[%s774 + $0x8f] sm:$0xff]
        %v785 = vld [vmem:[%s774 + $0xa7] sm:$0xff]
        %v786 = vld [vmem:[%s774 + $0xaf] sm:$0xff]
        %v787 = vld [vmem:[%s774 + $0xc7] sm:$0xff]
        %v788 = vld [vmem:[%s774 + $0xcf] sm:$0xff]
        %v789 = vld [vmem:[%s774 + $0xe7] sm:$0xff]
        %v790 = vld [vmem:[%s774 + $0xef] sm:$0xff]
        %v791 = vld [vmem:[%s774 + $0x107] sm:$0xff]
        %v792 = vld [vmem:[%s774 + $0x10f] sm:$0xff]
        %v793 = vld [vmem:[%s774 + $0x127] sm:$0xff]
        %v794 = vld [vmem:[%s774 + $0x12f] sm:$0xff]
        %v795 = vld [vmem:[%s774 + $0x147] sm:$0xff]
        %v796 = vld [vmem:[%s774 + $0x14f] sm:$0xff]
        %v797 = vld [vmem:[%s774 + $0x167] sm:$0xff]
        %v798 = vld [vmem:[%s774 + $0x16f] sm:$0xff]
        %v799 = vld [vmem:[%s774 + $0x187] sm:$0xff]
        %v800 = vld [vmem:[%s774 + $0x18f] sm:$0xff]
        %v801 = vld [vmem:[%s774 + $0x1a7] sm:$0xff]
        %v802 = vld [vmem:[%s774 + $0x1af] sm:$0xff]
        %v803 = vld [vmem:[%s774 + $0x1c7] sm:$0xff]
        %v804 = vld [vmem:[%s774 + $0x1cf] sm:$0xff]
        %v805 = vld [vmem:[%s774 + $0x1e7] sm:$0xff]
        %v806 = vld [vmem:[%s774 + $0x1ef] sm:$0xff]
        %v807 = vpack.c.bf16 %v776, %v775
        %v808 = vpack.c.bf16 %v778, %v777
        %v809 = vpack.c.bf16 %v780, %v779
        %v810 = vpack.c.bf16 %v782, %v781
        %v811 = vpack.c.bf16 %v784, %v783
        %v812 = vpack.c.bf16 %v786, %v785
        %v813 = vpack.c.bf16 %v788, %v787
        %v814 = vpack.c.bf16 %v790, %v789
        %v815 = vpack.c.bf16 %v792, %v791
        %v816 = vpack.c.bf16 %v794, %v793
        %v817 = vpack.c.bf16 %v796, %v795
        %v818 = vpack.c.bf16 %v798, %v797
        %v819 = vpack.c.bf16 %v800, %v799
        %v820 = vpack.c.bf16 %v802, %v801
        %v821 = vpack.c.bf16 %v804, %v803
        %v822 = vpack.c.bf16 %v806, %v805
        %v823 = vld [vmem:[%s774 + $0x8] sm:$0xff]
        %v824 = vld [vmem:[%s774 + $0x10] sm:$0xff]
        %v825 = vld [vmem:[%s774 + $0x28] sm:$0xff]
        %v826 = vld [vmem:[%s774 + $0x30] sm:$0xff]
        %v827 = vld [vmem:[%s774 + $0x48] sm:$0xff]
        %v828 = vld [vmem:[%s774 + $0x50] sm:$0xff]
        %v829 = vld [vmem:[%s774 + $0x68] sm:$0xff]
        %v830 = vld [vmem:[%s774 + $0x70] sm:$0xff]
        %v831 = vld [vmem:[%s774 + $0x88] sm:$0xff]
        %v832 = vld [vmem:[%s774 + $0x90] sm:$0xff]
        %v833 = vld [vmem:[%s774 + $0xa8] sm:$0xff]
        %v834 = vld [vmem:[%s774 + $0xb0] sm:$0xff]
        %v835 = vld [vmem:[%s774 + $0xc8] sm:$0xff]
        %v836 = vld [vmem:[%s774 + $0xd0] sm:$0xff]
        %v837 = vld [vmem:[%s774 + $0xe8] sm:$0xff]
        %v838 = vld [vmem:[%s774 + $0xf0] sm:$0xff]
        %v839 = vld [vmem:[%s774 + $0x108] sm:$0xff]
        %v840 = vld [vmem:[%s774 + $0x110] sm:$0xff]
        %v841 = vld [vmem:[%s774 + $0x128] sm:$0xff]
        %v842 = vld [vmem:[%s774 + $0x130] sm:$0xff]
        %v843 = vld [vmem:[%s774 + $0x148] sm:$0xff]
        %v844 = vld [vmem:[%s774 + $0x150] sm:$0xff]
        %v845 = vld [vmem:[%s774 + $0x168] sm:$0xff]
        %v846 = vld [vmem:[%s774 + $0x170] sm:$0xff]
        %v847 = vld [vmem:[%s774 + $0x188] sm:$0xff]
        %v848 = vld [vmem:[%s774 + $0x190] sm:$0xff]
        %v849 = vld [vmem:[%s774 + $0x1a8] sm:$0xff]
        %v850 = vld [vmem:[%s774 + $0x1b0] sm:$0xff]
        %v851 = vld [vmem:[%s774 + $0x1c8] sm:$0xff]
        %v852 = vld [vmem:[%s774 + $0x1d0] sm:$0xff]
        %v853 = vld [vmem:[%s774 + $0x1e8] sm:$0xff]
        %v854 = vld [vmem:[%s774 + $0x1f0] sm:$0xff]
        %v855 = vpack.c.bf16 %v824, %v823
        %v856 = vpack.c.bf16 %v826, %v825
        %v857 = vpack.c.bf16 %v828, %v827
        %v858 = vpack.c.bf16 %v830, %v829
        %v859 = vpack.c.bf16 %v832, %v831
        %v860 = vpack.c.bf16 %v834, %v833
        %v861 = vpack.c.bf16 %v836, %v835
        %v862 = vpack.c.bf16 %v838, %v837
        %v863 = vpack.c.bf16 %v840, %v839
        %v864 = vpack.c.bf16 %v842, %v841
        %v865 = vpack.c.bf16 %v844, %v843
        %v866 = vpack.c.bf16 %v846, %v845
        %v867 = vpack.c.bf16 %v848, %v847
        %v868 = vpack.c.bf16 %v850, %v849
        %v869 = vpack.c.bf16 %v852, %v851
        %v870 = vpack.c.bf16 %v854, %v853
        %v871 = vld [vmem:[%s774 + $0x9] sm:$0xff]
        %v872 = vld [vmem:[%s774 + $0x11] sm:$0xff]
        %v873 = vld [vmem:[%s774 + $0x29] sm:$0xff]
        %v874 = vld [vmem:[%s774 + $0x31] sm:$0xff]
        %v875 = vld [vmem:[%s774 + $0x49] sm:$0xff]
        %v876 = vld [vmem:[%s774 + $0x51] sm:$0xff]
        %v877 = vld [vmem:[%s774 + $0x69] sm:$0xff]
        %v878 = vld [vmem:[%s774 + $0x71] sm:$0xff]
        %v879 = vld [vmem:[%s774 + $0x89] sm:$0xff]
        %v880 = vld [vmem:[%s774 + $0x91] sm:$0xff]
        %v881 = vld [vmem:[%s774 + $0xa9] sm:$0xff]
        %v882 = vld [vmem:[%s774 + $0xb1] sm:$0xff]
        %v883 = vld [vmem:[%s774 + $0xc9] sm:$0xff]
        %v884 = vld [vmem:[%s774 + $0xd1] sm:$0xff]
        %v885 = vld [vmem:[%s774 + $0xe9] sm:$0xff]
        %v886 = vld [vmem:[%s774 + $0xf1] sm:$0xff]
        %v887 = vld [vmem:[%s774 + $0x109] sm:$0xff]
        %v888 = vld [vmem:[%s774 + $0x111] sm:$0xff]
        %v889 = vld [vmem:[%s774 + $0x129] sm:$0xff]
        %v890 = vld [vmem:[%s774 + $0x131] sm:$0xff]
        %v891 = vld [vmem:[%s774 + $0x149] sm:$0xff]
        %v892 = vld [vmem:[%s774 + $0x151] sm:$0xff]
        %v893 = vld [vmem:[%s774 + $0x169] sm:$0xff]
        %v894 = vld [vmem:[%s774 + $0x171] sm:$0xff]
        %v895 = vld [vmem:[%s774 + $0x189] sm:$0xff]
        %v896 = vld [vmem:[%s774 + $0x191] sm:$0xff]
        %v897 = vld [vmem:[%s774 + $0x1a9] sm:$0xff]
        %v898 = vld [vmem:[%s774 + $0x1b1] sm:$0xff]
        %v899 = vld [vmem:[%s774 + $0x1c9] sm:$0xff]
        %v900 = vld [vmem:[%s774 + $0x1d1] sm:$0xff]
        %v901 = vld [vmem:[%s774 + $0x1e9] sm:$0xff]
        %v902 = vld [vmem:[%s774 + $0x1f1] sm:$0xff]
        %v903 = vpack.c.bf16 %v872, %v871
        %v904 = vpack.c.bf16 %v874, %v873
        %v905 = vpack.c.bf16 %v876, %v875
        %v906 = vpack.c.bf16 %v878, %v877
        %v907 = vpack.c.bf16 %v880, %v879
        %v908 = vpack.c.bf16 %v882, %v881
        %v909 = vpack.c.bf16 %v884, %v883
        %v910 = vpack.c.bf16 %v886, %v885
        %v911 = vpack.c.bf16 %v888, %v887
        %v912 = vpack.c.bf16 %v890, %v889
        %v913 = vpack.c.bf16 %v892, %v891
        %v914 = vpack.c.bf16 %v894, %v893
        %v915 = vpack.c.bf16 %v896, %v895
        %v916 = vpack.c.bf16 %v898, %v897
        %v917 = vpack.c.bf16 %v900, %v899
        %v918 = vpack.c.bf16 %v902, %v901
        %935 = vrot.lane.b32.xlu0 %v565, 4
        %v936 = vpop.permute.xlu0 %935
        %937 = vrot.lane.b32.xlu0 %v566, 4
        %v938 = vpop.permute.xlu0 %937
        %939 = vrot.lane.b32.xlu0 %v567, 4
        %v940 = vpop.permute.xlu0 %939
        %941 = vrot.lane.b32.xlu0 %v568, 4
        %v942 = vpop.permute.xlu0 %941
        %943 = vrot.lane.b32.xlu0 %v569, 4
        %v944 = vpop.permute.xlu0 %943
        %945 = vrot.lane.b32.xlu0 %v570, 4
        %v946 = vpop.permute.xlu0 %945
        %947 = vrot.lane.b32.xlu0 %v571, 4
        %v948 = vpop.permute.xlu0 %947
        %949 = vrot.lane.b32.xlu0 %v572, 4
        %v950 = vpop.permute.xlu0 %949
        %951 = vrot.lane.b32.xlu0 %v573, 4
        %v952 = vpop.permute.xlu0 %951
        %953 = vrot.lane.b32.xlu0 %v574, 4
        %v954 = vpop.permute.xlu0 %953
        %955 = vrot.lane.b32.xlu0 %v575, 4
        %v956 = vpop.permute.xlu0 %955
        %957 = vrot.lane.b32.xlu0 %v576, 4
        %v958 = vpop.permute.xlu0 %957
        %959 = vrot.lane.b32.xlu0 %v577, 4
        %v960 = vpop.permute.xlu0 %959
        %961 = vrot.lane.b32.xlu0 %v578, 4
        %v962 = vpop.permute.xlu0 %961
        %963 = vrot.lane.b32.xlu0 %v579, 4
        %v964 = vpop.permute.xlu0 %963
        %965 = vrot.lane.b32.xlu0 %v580, 4
        %v966 = vpop.permute.xlu0 %965
        %983 = vrot.lane.b32.xlu0 %v613, 8
        %v984 = vpop.permute.xlu0 %983
        %985 = vrot.lane.b32.xlu0 %v614, 8
        %v986 = vpop.permute.xlu0 %985
        %987 = vrot.lane.b32.xlu0 %v615, 8
        %v988 = vpop.permute.xlu0 %987
        %989 = vrot.lane.b32.xlu0 %v616, 8
        %v990 = vpop.permute.xlu0 %989
        %991 = vrot.lane.b32.xlu0 %v617, 8
        %v992 = vpop.permute.xlu0 %991
        %993 = vrot.lane.b32.xlu0 %v618, 8
        %v994 = vpop.permute.xlu0 %993
        %995 = vrot.lane.b32.xlu0 %v619, 8
        %v996 = vpop.permute.xlu0 %995
        %997 = vrot.lane.b32.xlu0 %v620, 8
        %v998 = vpop.permute.xlu0 %997
        %999 = vrot.lane.b32.xlu0 %v621, 8
        %v1000 = vpop.permute.xlu0 %999
        %1001 = vrot.lane.b32.xlu0 %v622, 8
        %v1002 = vpop.permute.xlu0 %1001
        %1003 = vrot.lane.b32.xlu0 %v623, 8
        %v1004 = vpop.permute.xlu0 %1003
        %1005 = vrot.lane.b32.xlu0 %v624, 8
        %v1006 = vpop.permute.xlu0 %1005
        %1007 = vrot.lane.b32.xlu0 %v625, 8
        %v1008 = vpop.permute.xlu0 %1007
        %1009 = vrot.lane.b32.xlu0 %v626, 8
        %v1010 = vpop.permute.xlu0 %1009
        %1011 = vrot.lane.b32.xlu0 %v627, 8
        %v1012 = vpop.permute.xlu0 %1011
        %1013 = vrot.lane.b32.xlu0 %v628, 8
        %v1014 = vpop.permute.xlu0 %1013
        %1031 = vrot.lane.b32.xlu0 %v662, 12
        %v1032 = vpop.permute.xlu0 %1031
        %1033 = vrot.lane.b32.xlu0 %v663, 12
        %v1034 = vpop.permute.xlu0 %1033
        %1035 = vrot.lane.b32.xlu0 %v664, 12
        %v1036 = vpop.permute.xlu0 %1035
        %1037 = vrot.lane.b32.xlu0 %v665, 12
        %v1038 = vpop.permute.xlu0 %1037
        %1039 = vrot.lane.b32.xlu0 %v666, 12
        %v1040 = vpop.permute.xlu0 %1039
        %1041 = vrot.lane.b32.xlu0 %v667, 12
        %v1042 = vpop.permute.xlu0 %1041
        %1043 = vrot.lane.b32.xlu0 %v668, 12
        %v1044 = vpop.permute.xlu0 %1043
        %1045 = vrot.lane.b32.xlu0 %v669, 12
        %v1046 = vpop.permute.xlu0 %1045
        %1047 = vrot.lane.b32.xlu0 %v670, 12
        %v1048 = vpop.permute.xlu0 %1047
        %1049 = vrot.lane.b32.xlu0 %v671, 12
        %v1050 = vpop.permute.xlu0 %1049
        %1051 = vrot.lane.b32.xlu0 %v672, 12
        %v1052 = vpop.permute.xlu0 %1051
        %1053 = vrot.lane.b32.xlu0 %v673, 12
        %v1054 = vpop.permute.xlu0 %1053
        %1055 = vrot.lane.b32.xlu0 %v674, 12
        %v1056 = vpop.permute.xlu0 %1055
        %1057 = vrot.lane.b32.xlu0 %v675, 12
        %v1058 = vpop.permute.xlu0 %1057
        %1059 = vrot.lane.b32.xlu0 %v676, 12
        %v1060 = vpop.permute.xlu0 %1059
        %1061 = vrot.lane.b32.xlu0 %v677, 12
        %v1062 = vpop.permute.xlu0 %1061
        %1079 = vrot.lane.b32.xlu0 %v710, 16
        %v1080 = vpop.permute.xlu0 %1079
        %1081 = vrot.lane.b32.xlu0 %v711, 16
        %v1082 = vpop.permute.xlu0 %1081
        %1083 = vrot.lane.b32.xlu0 %v712, 16
        %v1084 = vpop.permute.xlu0 %1083
        %1085 = vrot.lane.b32.xlu0 %v713, 16
        %v1086 = vpop.permute.xlu0 %1085
        %1087 = vrot.lane.b32.xlu0 %v714, 16
        %v1088 = vpop.permute.xlu0 %1087
        %1089 = vrot.lane.b32.xlu0 %v715, 16
        %v1090 = vpop.permute.xlu0 %1089
        %1091 = vrot.lane.b32.xlu0 %v716, 16
        %v1092 = vpop.permute.xlu0 %1091
        %1093 = vrot.lane.b32.xlu0 %v717, 16
        %v1094 = vpop.permute.xlu0 %1093
        %1095 = vrot.lane.b32.xlu0 %v718, 16
        %v1096 = vpop.permute.xlu0 %1095
        %1097 = vrot.lane.b32.xlu0 %v719, 16
        %v1098 = vpop.permute.xlu0 %1097
        %1099 = vrot.lane.b32.xlu0 %v720, 16
        %v1100 = vpop.permute.xlu0 %1099
        %1101 = vrot.lane.b32.xlu0 %v721, 16
        %v1102 = vpop.permute.xlu0 %1101
        %1103 = vrot.lane.b32.xlu0 %v722, 16
        %v1104 = vpop.permute.xlu0 %1103
        %1105 = vrot.lane.b32.xlu0 %v723, 16
        %v1106 = vpop.permute.xlu0 %1105
        %1107 = vrot.lane.b32.xlu0 %v724, 16
        %v1108 = vpop.permute.xlu0 %1107
        %1109 = vrot.lane.b32.xlu0 %v725, 16
        %v1110 = vpop.permute.xlu0 %1109
        %1127 = vrot.lane.b32.xlu0 %v758, 20
        %v1128 = vpop.permute.xlu0 %1127
        %1129 = vrot.lane.b32.xlu0 %v759, 20
        %v1130 = vpop.permute.xlu0 %1129
        %1131 = vrot.lane.b32.xlu0 %v760, 20
        %v1132 = vpop.permute.xlu0 %1131
        %1133 = vrot.lane.b32.xlu0 %v761, 20
        %v1134 = vpop.permute.xlu0 %1133
        %1135 = vrot.lane.b32.xlu0 %v762, 20
        %v1136 = vpop.permute.xlu0 %1135
        %1137 = vrot.lane.b32.xlu0 %v763, 20
        %v1138 = vpop.permute.xlu0 %1137
        %1139 = vrot.lane.b32.xlu0 %v764, 20
        %v1140 = vpop.permute.xlu0 %1139
        %1141 = vrot.lane.b32.xlu0 %v765, 20
        %v1142 = vpop.permute.xlu0 %1141
        %1143 = vrot.lane.b32.xlu0 %v766, 20
        %v1144 = vpop.permute.xlu0 %1143
        %1145 = vrot.lane.b32.xlu0 %v767, 20
        %v1146 = vpop.permute.xlu0 %1145
        %1147 = vrot.lane.b32.xlu0 %v768, 20
        %v1148 = vpop.permute.xlu0 %1147
        %1149 = vrot.lane.b32.xlu0 %v769, 20
        %v1150 = vpop.permute.xlu0 %1149
        %1151 = vrot.lane.b32.xlu0 %v770, 20
        %v1152 = vpop.permute.xlu0 %1151
        %1153 = vrot.lane.b32.xlu0 %v771, 20
        %v1154 = vpop.permute.xlu0 %1153
        %1155 = vrot.lane.b32.xlu0 %v772, 20
        %v1156 = vpop.permute.xlu0 %1155
        %1157 = vrot.lane.b32.xlu0 %v773, 20
        %v1158 = vpop.permute.xlu0 %1157
        %1175 = vrot.lane.b32.xlu0 %v807, 24
        %v1176 = vpop.permute.xlu0 %1175
        %1177 = vrot.lane.b32.xlu0 %v808, 24
        %v1178 = vpop.permute.xlu0 %1177
        %1179 = vrot.lane.b32.xlu0 %v809, 24
        %v1180 = vpop.permute.xlu0 %1179
        %1181 = vrot.lane.b32.xlu0 %v810, 24
        %v1182 = vpop.permute.xlu0 %1181
        %1183 = vrot.lane.b32.xlu0 %v811, 24
        %v1184 = vpop.permute.xlu0 %1183
        %1185 = vrot.lane.b32.xlu0 %v812, 24
        %v1186 = vpop.permute.xlu0 %1185
        %1187 = vrot.lane.b32.xlu0 %v813, 24
        %v1188 = vpop.permute.xlu0 %1187
        %1189 = vrot.lane.b32.xlu0 %v814, 24
        %v1190 = vpop.permute.xlu0 %1189
        %1191 = vrot.lane.b32.xlu0 %v815, 24
        %v1192 = vpop.permute.xlu0 %1191
        %1193 = vrot.lane.b32.xlu0 %v816, 24
        %v1194 = vpop.permute.xlu0 %1193
        %1195 = vrot.lane.b32.xlu0 %v817, 24
        %v1196 = vpop.permute.xlu0 %1195
        %1197 = vrot.lane.b32.xlu0 %v818, 24
        %v1198 = vpop.permute.xlu0 %1197
        %1199 = vrot.lane.b32.xlu0 %v819, 24
        %v1200 = vpop.permute.xlu0 %1199
        %1201 = vrot.lane.b32.xlu0 %v820, 24
        %v1202 = vpop.permute.xlu0 %1201
        %1203 = vrot.lane.b32.xlu0 %v821, 24
        %v1204 = vpop.permute.xlu0 %1203
        %1205 = vrot.lane.b32.xlu0 %v822, 24
        %v1206 = vpop.permute.xlu0 %1205
        %1223 = vrot.lane.b32.xlu0 %v855, 28
        %v1224 = vpop.permute.xlu0 %1223
        %1225 = vrot.lane.b32.xlu0 %v856, 28
        %v1226 = vpop.permute.xlu0 %1225
        %1227 = vrot.lane.b32.xlu0 %v857, 28
        %v1228 = vpop.permute.xlu0 %1227
        %1229 = vrot.lane.b32.xlu0 %v858, 28
        %v1230 = vpop.permute.xlu0 %1229
        %1231 = vrot.lane.b32.xlu0 %v859, 28
        %v1232 = vpop.permute.xlu0 %1231
        %1233 = vrot.lane.b32.xlu0 %v860, 28
        %v1234 = vpop.permute.xlu0 %1233
        %1235 = vrot.lane.b32.xlu0 %v861, 28
        %v1236 = vpop.permute.xlu0 %1235
        %1237 = vrot.lane.b32.xlu0 %v862, 28
        %v1238 = vpop.permute.xlu0 %1237
        %1239 = vrot.lane.b32.xlu0 %v863, 28
        %v1240 = vpop.permute.xlu0 %1239
        %1241 = vrot.lane.b32.xlu0 %v864, 28
        %v1242 = vpop.permute.xlu0 %1241
        %1243 = vrot.lane.b32.xlu0 %v865, 28
        %v1244 = vpop.permute.xlu0 %1243
        %1245 = vrot.lane.b32.xlu0 %v866, 28
        %v1246 = vpop.permute.xlu0 %1245
        %1247 = vrot.lane.b32.xlu0 %v867, 28
        %v1248 = vpop.permute.xlu0 %1247
        %1249 = vrot.lane.b32.xlu0 %v868, 28
        %v1250 = vpop.permute.xlu0 %1249
        %1251 = vrot.lane.b32.xlu0 %v869, 28
        %v1252 = vpop.permute.xlu0 %1251
        %1253 = vrot.lane.b32.xlu0 %v870, 28
        %v1254 = vpop.permute.xlu0 %1253
        %1271 = vrot.lane.b32.xlu0 %v903, 32
        %v1272 = vpop.permute.xlu0 %1271
        %1273 = vrot.lane.b32.xlu0 %v904, 32
        %v1274 = vpop.permute.xlu0 %1273
        %1275 = vrot.lane.b32.xlu0 %v905, 32
        %v1276 = vpop.permute.xlu0 %1275
        %1277 = vrot.lane.b32.xlu0 %v906, 32
        %v1278 = vpop.permute.xlu0 %1277
        %1279 = vrot.lane.b32.xlu0 %v907, 32
        %v1280 = vpop.permute.xlu0 %1279
        %1281 = vrot.lane.b32.xlu0 %v908, 32
        %v1282 = vpop.permute.xlu0 %1281
        %1283 = vrot.lane.b32.xlu0 %v909, 32
        %v1284 = vpop.permute.xlu0 %1283
        %1285 = vrot.lane.b32.xlu0 %v910, 32
        %v1286 = vpop.permute.xlu0 %1285
        %1287 = vrot.lane.b32.xlu0 %v911, 32
        %v1288 = vpop.permute.xlu0 %1287
        %1289 = vrot.lane.b32.xlu0 %v912, 32
        %v1290 = vpop.permute.xlu0 %1289
        %1291 = vrot.lane.b32.xlu0 %v913, 32
        %v1292 = vpop.permute.xlu0 %1291
        %1293 = vrot.lane.b32.xlu0 %v914, 32
        %v1294 = vpop.permute.xlu0 %1293
        %1295 = vrot.lane.b32.xlu0 %v915, 32
        %v1296 = vpop.permute.xlu0 %1295
        %1297 = vrot.lane.b32.xlu0 %v916, 32
        %v1298 = vpop.permute.xlu0 %1297
        %1299 = vrot.lane.b32.xlu0 %v917, 32
        %v1300 = vpop.permute.xlu0 %1299
        %1301 = vrot.lane.b32.xlu0 %v918, 32
        %v1302 = vpop.permute.xlu0 %1301
        %vm1303 = vcmask 31744
        %v1306 = vsel %vm1303, %v517, %v936
        %v1309 = vsel %vm1303, %v518, %v938
        %v1312 = vsel %vm1303, %v519, %v940
        %v1315 = vsel %vm1303, %v520, %v942
        %v1318 = vsel %vm1303, %v521, %v944
        %v1321 = vsel %vm1303, %v522, %v946
        %v1324 = vsel %vm1303, %v523, %v948
        %v1327 = vsel %vm1303, %v524, %v950
        %v1330 = vsel %vm1303, %v525, %v952
        %v1333 = vsel %vm1303, %v526, %v954
        %v1336 = vsel %vm1303, %v527, %v956
        %v1339 = vsel %vm1303, %v528, %v958
        %v1342 = vsel %vm1303, %v529, %v960
        %v1345 = vsel %vm1303, %v530, %v962
        %v1348 = vsel %vm1303, %v531, %v964
        %v1351 = vsel %vm1303, %v532, %v966
        %v1353 = vsel %vm399, %v1306, %v984
        %v1355 = vsel %vm399, %v1309, %v986
        %v1357 = vsel %vm399, %v1312, %v988
        %v1359 = vsel %vm399, %v1315, %v990
        %v1361 = vsel %vm399, %v1318, %v992
        %v1363 = vsel %vm399, %v1321, %v994
        %v1365 = vsel %vm399, %v1324, %v996
        %v1367 = vsel %vm399, %v1327, %v998
        %v1369 = vsel %vm399, %v1330, %v1000
        %v1371 = vsel %vm399, %v1333, %v1002
        %v1373 = vsel %vm399, %v1336, %v1004
        %v1375 = vsel %vm399, %v1339, %v1006
        %v1377 = vsel %vm399, %v1342, %v1008
        %v1379 = vsel %vm399, %v1345, %v1010
        %v1381 = vsel %vm399, %v1348, %v1012
        %v1383 = vsel %vm399, %v1351, %v1014
        %vm1384 = vcmask 97280
        %v1386 = vsel %vm1384, %v1353, %v1032
        %v1388 = vsel %vm1384, %v1355, %v1034
        %v1390 = vsel %vm1384, %v1357, %v1036
        %v1392 = vsel %vm1384, %v1359, %v1038
        %v1394 = vsel %vm1384, %v1361, %v1040
        %v1396 = vsel %vm1384, %v1363, %v1042
        %v1398 = vsel %vm1384, %v1365, %v1044
        %v1400 = vsel %vm1384, %v1367, %v1046
        %v1402 = vsel %vm1384, %v1369, %v1048
        %v1404 = vsel %vm1384, %v1371, %v1050
        %v1406 = vsel %vm1384, %v1373, %v1052
        %v1408 = vsel %vm1384, %v1375, %v1054
        %v1410 = vsel %vm1384, %v1377, %v1056
        %v1412 = vsel %vm1384, %v1379, %v1058
        %v1414 = vsel %vm1384, %v1381, %v1060
        %v1416 = vsel %vm1384, %v1383, %v1062
        %vm1417 = vcmask 130048
        %v1419 = vsel %vm1417, %v1386, %v1080
        %v1421 = vsel %vm1417, %v1388, %v1082
        %v1423 = vsel %vm1417, %v1390, %v1084
        %v1425 = vsel %vm1417, %v1392, %v1086
        %v1427 = vsel %vm1417, %v1394, %v1088
        %v1429 = vsel %vm1417, %v1396, %v1090
        %v1431 = vsel %vm1417, %v1398, %v1092
        %v1433 = vsel %vm1417, %v1400, %v1094
        %v1435 = vsel %vm1417, %v1402, %v1096
        %v1437 = vsel %vm1417, %v1404, %v1098
        %v1439 = vsel %vm1417, %v1406, %v1100
        %v1441 = vsel %vm1417, %v1408, %v1102
        %v1443 = vsel %vm1417, %v1410, %v1104
        %v1445 = vsel %vm1417, %v1412, %v1106
        %v1447 = vsel %vm1417, %v1414, %v1108
        %v1449 = vsel %vm1417, %v1416, %v1110
        %vm1450 = vcmask 162816
        %v1452 = vsel %vm1450, %v1419, %v1128
        %v1454 = vsel %vm1450, %v1421, %v1130
        %v1456 = vsel %vm1450, %v1423, %v1132
        %v1458 = vsel %vm1450, %v1425, %v1134
        %v1460 = vsel %vm1450, %v1427, %v1136
        %v1462 = vsel %vm1450, %v1429, %v1138
        %v1464 = vsel %vm1450, %v1431, %v1140
        %v1466 = vsel %vm1450, %v1433, %v1142
        %v1468 = vsel %vm1450, %v1435, %v1144
        %v1470 = vsel %vm1450, %v1437, %v1146
        %v1472 = vsel %vm1450, %v1439, %v1148
        %v1474 = vsel %vm1450, %v1441, %v1150
        %v1476 = vsel %vm1450, %v1443, %v1152
        %v1478 = vsel %vm1450, %v1445, %v1154
        %v1480 = vsel %vm1450, %v1447, %v1156
        %v1482 = vsel %vm1450, %v1449, %v1158
        %vm1483 = vcmask 195584
        %v1485 = vsel %vm1483, %v1452, %v1176
        %v1487 = vsel %vm1483, %v1454, %v1178
        %v1489 = vsel %vm1483, %v1456, %v1180
        %v1491 = vsel %vm1483, %v1458, %v1182
        %v1493 = vsel %vm1483, %v1460, %v1184
        %v1495 = vsel %vm1483, %v1462, %v1186
        %v1497 = vsel %vm1483, %v1464, %v1188
        %v1499 = vsel %vm1483, %v1466, %v1190
        %v1501 = vsel %vm1483, %v1468, %v1192
        %v1503 = vsel %vm1483, %v1470, %v1194
        %v1505 = vsel %vm1483, %v1472, %v1196
        %v1507 = vsel %vm1483, %v1474, %v1198
        %v1509 = vsel %vm1483, %v1476, %v1200
        %v1511 = vsel %vm1483, %v1478, %v1202
        %v1513 = vsel %vm1483, %v1480, %v1204
        %v1515 = vsel %vm1483, %v1482, %v1206
        %vm1516 = vcmask 228352
        %v1518 = vsel %vm1516, %v1485, %v1224
        %v1520 = vsel %vm1516, %v1487, %v1226
        %v1522 = vsel %vm1516, %v1489, %v1228
        %v1524 = vsel %vm1516, %v1491, %v1230
        %v1526 = vsel %vm1516, %v1493, %v1232
        %v1528 = vsel %vm1516, %v1495, %v1234
        %v1530 = vsel %vm1516, %v1497, %v1236
        %v1532 = vsel %vm1516, %v1499, %v1238
        %v1534 = vsel %vm1516, %v1501, %v1240
        %v1536 = vsel %vm1516, %v1503, %v1242
        %v1538 = vsel %vm1516, %v1505, %v1244
        %v1540 = vsel %vm1516, %v1507, %v1246
        %v1542 = vsel %vm1516, %v1509, %v1248
        %v1544 = vsel %vm1516, %v1511, %v1250
        %v1546 = vsel %vm1516, %v1513, %v1252
        %v1548 = vsel %vm1516, %v1515, %v1254
        %vm1549 = vcmask 261120
        %v1551 = vsel %vm1549, %v1518, %v1272
        %v1553 = vsel %vm1549, %v1520, %v1274
        %v1555 = vsel %vm1549, %v1522, %v1276
        %v1557 = vsel %vm1549, %v1524, %v1278
        %v1559 = vsel %vm1549, %v1526, %v1280
        %v1561 = vsel %vm1549, %v1528, %v1282
        %v1563 = vsel %vm1549, %v1530, %v1284
        %v1565 = vsel %vm1549, %v1532, %v1286
        %v1567 = vsel %vm1549, %v1534, %v1288
        %v1569 = vsel %vm1549, %v1536, %v1290
        %v1571 = vsel %vm1549, %v1538, %v1292
        %v1573 = vsel %vm1549, %v1540, %v1294
        %v1575 = vsel %vm1549, %v1542, %v1296
        %v1577 = vsel %vm1549, %v1544, %v1298
        %v1579 = vsel %vm1549, %v1546, %v1300
        %v1581 = vsel %vm1549, %v1548, %v1302
        %v1582 = vld [vmem:[%s1] sm:$0xf]
        %v1583 = vld [vmem:[%s1 + $0x4] sm:$0xf]
        %v1584 = vld [vmem:[%s1 + $0x8] sm:$0xf]
        %v1585 = vld [vmem:[%s1 + $0xc] sm:$0xf]
        %v1586 = vld [vmem:[%s1 + $0x10] sm:$0x3]
        %v1587 = vld [vmem:[%s2] sm:$0x1]
        %v1589 = vlaneseq
        %v1590 = vshrl.u32 %v1589, 7
        %v1591 = vsub.s32 0, %v1590
        %v1592 = vrot.slane %v1587, %v1591
        %v1599 = vunpack.c.l.b16 %v1582
        %v1600 = vunpack.c.l.b16 %v1583
        %v1601 = vunpack.c.l.b16 %v1584
        %v1602 = vunpack.c.l.b16 %v1585
        %v1603 = vunpack.c.l.b16 %v1586
        %v1604 = vpack.c.b16 %v1600, %v1599
        %v1605 = vpack.c.b16 %v1602, %v1601
        %v1606 = vpack.c.b16 %v1603, %v1603
        %vm1609 = vcmask 293888
        %v1610 = vsel %vm1609, %v1551, 0
        %v1612 = vsel %vm1609, %v1553, 0
        %v1614 = vsel %vm1609, %v1555, 0
        %v1616 = vsel %vm1609, %v1557, 0
        %v1618 = vsel %vm1609, %v1559, 0
        %v1620 = vsel %vm1609, %v1561, 0
        %v1622 = vsel %vm1609, %v1563, 0
        %v1624 = vsel %vm1609, %v1565, 0
        %v1626 = vsel %vm1609, %v1567, 0
        %v1628 = vsel %vm1609, %v1569, 0
        %v1630 = vsel %vm1609, %v1571, 0
        %v1632 = vsel %vm1609, %v1573, 0
        %v1634 = vsel %vm1609, %v1575, 0
        %v1636 = vsel %vm1609, %v1577, 0
        %v1638 = vsel %vm1609, %v1579, 0
        %v1640 = vsel %vm1609, %v1581, 0
        %vm1642 = vcmask 1041408
        %v1644 = vsel %vm1642, %v1606, 0
        %1646 = vmatprep.subr.bf16.mxu0 0
        %1647 = vmatpush1.bf16.msra.mxu0 %v1604
        %1648 = vmatprep.subr.bf16.mxu0 0
        %1649 = vmatpush1.bf16.msra.mxu0 %v1605
        %1650 = vmatprep.subr.bf16.mxu0 0
        %1651 = vmatpush1.bf16.msra.mxu0 %v1644
        %1652 = vmatprep.subr.bf16.mxu0 0
        %1653 = vmatpush1.bf16.msra.mxu0 0
        %1654 = vmatprep.subr.bf16.mxu0 0
        %1655 = vmatpush1.bf16.msra.mxu0 0
        %1656 = vmatprep.subr.bf16.mxu0 0
        %1657 = vmatpush1.bf16.msra.mxu0 0
        %1658 = vmatprep.subr.bf16.mxu0 0
        %1659 = vmatpush1.bf16.msra.mxu0 0
        %1660 = vmatprep.subr.bf16.mxu0 0
        %1661 = vmatpush1.bf16.msra.mxu0 0
        %1662 = vmatprep.subr.bf16.mxu0 0
        %1663 = vmatpush1.bf16.msra.mxu0 0
        %1664 = vmatprep.subr.bf16.mxu0 0
        %1665 = vmatpush1.bf16.msra.mxu0 0
        %1666 = vmatprep.subr.bf16.mxu0 0
        %1667 = vmatpush1.bf16.msra.mxu0 0
        %1668 = vmatprep.subr.bf16.mxu0 0
        %1669 = vmatpush1.bf16.msra.mxu0 0
        %1670 = vmatprep.subr.bf16.mxu0 0
        %1671 = vmatpush1.bf16.msra.mxu0 0
        %1672 = vmatprep.subr.bf16.mxu0 0
        %1673 = vmatpush1.bf16.msra.mxu0 0
        %1674 = vmatprep.subr.bf16.mxu0 0
        %1675 = vmatpush1.bf16.msra.mxu0 0
        %1676 = vmatprep.subr.bf16.mxu0 0
        %1677 = vmatpush1.bf16.msra.mxu0 0
        %1678 = vmatprep.mubr.bf16.mxu0 0
        %1679 = vmatmul.mubr.bf16.gmra.mrb[0].mxu0 %v1610
        %v1680 = vpop.f32.mrb[0].mxu0
        %v1681 = vadd.f32 %v1592, %v1680
        %v1682 = vpop.f32.mrb[0].mxu0
        %v1683 = vpop.f32.mrb[0].mxu0
        %v1684 = vadd.f32 %v1592, %v1683
        %v1685 = vpop.f32.mrb[0].mxu0
        %1686 = vmatprep.mubr.bf16.mxu0 0
        %1687 = vmatmul.mubr.bf16.gmra.mrb[0].mxu0 %v1612
        %v1688 = vpop.f32.mrb[0].mxu0
        %v1689 = vadd.f32 %v1592, %v1688
        %v1690 = vpop.f32.mrb[0].mxu0
        %v1691 = vpop.f32.mrb[0].mxu0
        %v1692 = vadd.f32 %v1592, %v1691
        %v1693 = vpop.f32.mrb[0].mxu0
        %1694 = vmatprep.mubr.bf16.mxu0 0
        %1695 = vmatmul.mubr.bf16.gmra.mrb[0].mxu0 %v1614
        %v1696 = vpop.f32.mrb[0].mxu0
        %v1697 = vadd.f32 %v1592, %v1696
        %v1698 = vpop.f32.mrb[0].mxu0
        %v1699 = vpop.f32.mrb[0].mxu0
        %v1700 = vadd.f32 %v1592, %v1699
        %v1701 = vpop.f32.mrb[0].mxu0
        %1702 = vmatprep.mubr.bf16.mxu0 0
        %1703 = vmatmul.mubr.bf16.gmra.mrb[0].mxu0 %v1616
        %v1704 = vpop.f32.mrb[0].mxu0
        %v1705 = vadd.f32 %v1592, %v1704
        %v1706 = vpop.f32.mrb[0].mxu0
        %v1707 = vpop.f32.mrb[0].mxu0
        %v1708 = vadd.f32 %v1592, %v1707
        %v1709 = vpop.f32.mrb[0].mxu0
        %1710 = vmatprep.mubr.bf16.mxu0 0
        %1711 = vmatmul.mubr.bf16.gmra.mrb[0].mxu0 %v1618
        %v1712 = vpop.f32.mrb[0].mxu0
        %v1713 = vadd.f32 %v1592, %v1712
        %v1714 = vpop.f32.mrb[0].mxu0
        %v1715 = vpop.f32.mrb[0].mxu0
        %v1716 = vadd.f32 %v1592, %v1715
        %v1717 = vpop.f32.mrb[0].mxu0
        %1718 = vmatprep.mubr.bf16.mxu0 0
        %1719 = vmatmul.mubr.bf16.gmra.mrb[0].mxu0 %v1620
        %v1720 = vpop.f32.mrb[0].mxu0
        %v1721 = vadd.f32 %v1592, %v1720
        %v1722 = vpop.f32.mrb[0].mxu0
        %v1723 = vpop.f32.mrb[0].mxu0
        %v1724 = vadd.f32 %v1592, %v1723
        %v1725 = vpop.f32.mrb[0].mxu0
        %1726 = vmatprep.mubr.bf16.mxu0 0
        %1727 = vmatmul.mubr.bf16.gmra.mrb[0].mxu0 %v1622
        %v1728 = vpop.f32.mrb[0].mxu0
        %v1729 = vadd.f32 %v1592, %v1728
        %v1730 = vpop.f32.mrb[0].mxu0
        %v1731 = vpop.f32.mrb[0].mxu0
        %v1732 = vadd.f32 %v1592, %v1731
        %v1733 = vpop.f32.mrb[0].mxu0
        %1734 = vmatprep.mubr.bf16.mxu0 0
        %1735 = vmatmul.mubr.bf16.gmra.mrb[0].mxu0 %v1624
        %v1736 = vpop.f32.mrb[0].mxu0
        %v1737 = vadd.f32 %v1592, %v1736
        %v1738 = vpop.f32.mrb[0].mxu0
        %v1739 = vpop.f32.mrb[0].mxu0
        %v1740 = vadd.f32 %v1592, %v1739
        %v1741 = vpop.f32.mrb[0].mxu0
        %1742 = vmatprep.mubr.bf16.mxu0 0
        %1743 = vmatmul.mubr.bf16.gmra.mrb[0].mxu0 %v1626
        %v1744 = vpop.f32.mrb[0].mxu0
        %v1745 = vadd.f32 %v1592, %v1744
        %v1746 = vpop.f32.mrb[0].mxu0
        %v1747 = vpop.f32.mrb[0].mxu0
        %v1748 = vadd.f32 %v1592, %v1747
        %v1749 = vpop.f32.mrb[0].mxu0
        %1750 = vmatprep.mubr.bf16.mxu0 0
        %1751 = vmatmul.mubr.bf16.gmra.mrb[0].mxu0 %v1628
        %v1752 = vpop.f32.mrb[0].mxu0
        %v1753 = vadd.f32 %v1592, %v1752
        %v1754 = vpop.f32.mrb[0].mxu0
        %v1755 = vpop.f32.mrb[0].mxu0
        %v1756 = vadd.f32 %v1592, %v1755
        %v1757 = vpop.f32.mrb[0].mxu0
        %1758 = vmatprep.mubr.bf16.mxu0 0
        %1759 = vmatmul.mubr.bf16.gmra.mrb[0].mxu0 %v1630
        %v1760 = vpop.f32.mrb[0].mxu0
        %v1761 = vadd.f32 %v1592, %v1760
        %v1762 = vpop.f32.mrb[0].mxu0
        %v1763 = vpop.f32.mrb[0].mxu0
        %v1764 = vadd.f32 %v1592, %v1763
        %v1765 = vpop.f32.mrb[0].mxu0
        %1766 = vmatprep.mubr.bf16.mxu0 0
        %1767 = vmatmul.mubr.bf16.gmra.mrb[0].mxu0 %v1632
        %v1768 = vpop.f32.mrb[0].mxu0
        %v1769 = vadd.f32 %v1592, %v1768
        %v1770 = vpop.f32.mrb[0].mxu0
        %v1771 = vpop.f32.mrb[0].mxu0
        %v1772 = vadd.f32 %v1592, %v1771
        %v1773 = vpop.f32.mrb[0].mxu0
        %1774 = vmatprep.mubr.bf16.mxu0 0
        %1775 = vmatmul.mubr.bf16.gmra.mrb[0].mxu0 %v1634
        %v1776 = vpop.f32.mrb[0].mxu0
        %v1777 = vadd.f32 %v1592, %v1776
        %v1778 = vpop.f32.mrb[0].mxu0
        %v1779 = vpop.f32.mrb[0].mxu0
        %v1780 = vadd.f32 %v1592, %v1779
        %v1781 = vpop.f32.mrb[0].mxu0
        %1782 = vmatprep.mubr.bf16.mxu0 0
        %1783 = vmatmul.mubr.bf16.gmra.mrb[0].mxu0 %v1636
        %v1784 = vpop.f32.mrb[0].mxu0
        %v1785 = vadd.f32 %v1592, %v1784
        %v1786 = vpop.f32.mrb[0].mxu0
        %v1787 = vpop.f32.mrb[0].mxu0
        %v1788 = vadd.f32 %v1592, %v1787
        %v1789 = vpop.f32.mrb[0].mxu0
        %1790 = vmatprep.mubr.bf16.mxu0 0
        %1791 = vmatmul.mubr.bf16.gmra.mrb[0].mxu0 %v1638
        %v1792 = vpop.f32.mrb[0].mxu0
        %v1793 = vadd.f32 %v1592, %v1792
        %v1794 = vpop.f32.mrb[0].mxu0
        %v1795 = vpop.f32.mrb[0].mxu0
        %v1796 = vadd.f32 %v1592, %v1795
        %v1797 = vpop.f32.mrb[0].mxu0
        %1798 = vmatprep.mubr.bf16.mxu0 0
        %1799 = vmatmul.mubr.bf16.gmra.mrb[0].mxu0 %v1640
        %v1800 = vpop.f32.mrb[0].mxu0
        %v1801 = vadd.f32 %v1592, %v1800
        %v1802 = vpop.f32.mrb[0].mxu0
        %v1803 = vpop.f32.mrb[0].mxu0
        %v1804 = vadd.f32 %v1592, %v1803
        %v1805 = vpop.f32.mrb[0].mxu0
        %1806 = vdwg.mxu0
        %v1807 = vmax.f32 %v1681, 0.0
        %v1808 = vmax.f32 %v1684, 0.0
        %v1809 = vmax.f32 %v1689, 0.0
        %v1810 = vmax.f32 %v1692, 0.0
        %v1811 = vmax.f32 %v1697, 0.0
        %v1812 = vmax.f32 %v1700, 0.0
        %v1813 = vmax.f32 %v1705, 0.0
        %v1814 = vmax.f32 %v1708, 0.0
        %v1815 = vmax.f32 %v1713, 0.0
        %v1816 = vmax.f32 %v1716, 0.0
        %v1817 = vmax.f32 %v1721, 0.0
        %v1818 = vmax.f32 %v1724, 0.0
        %v1819 = vmax.f32 %v1729, 0.0
        %v1820 = vmax.f32 %v1732, 0.0
        %v1821 = vmax.f32 %v1737, 0.0
        %v1822 = vmax.f32 %v1740, 0.0
        %v1823 = vmax.f32 %v1745, 0.0
        %v1824 = vmax.f32 %v1748, 0.0
        %v1825 = vmax.f32 %v1753, 0.0
        %v1826 = vmax.f32 %v1756, 0.0
        %v1827 = vmax.f32 %v1761, 0.0
        %v1828 = vmax.f32 %v1764, 0.0
        %v1829 = vmax.f32 %v1769, 0.0
        %v1830 = vmax.f32 %v1772, 0.0
        %v1831 = vmax.f32 %v1777, 0.0
        %v1832 = vmax.f32 %v1780, 0.0
        %v1833 = vmax.f32 %v1785, 0.0
        %v1834 = vmax.f32 %v1788, 0.0
        %v1835 = vmax.f32 %v1793, 0.0
        %v1836 = vmax.f32 %v1796, 0.0
        %v1837 = vmax.f32 %v1801, 0.0
        %v1838 = vmax.f32 %v1804, 0.0
        %1839 = vst.msk [vmem:[%s396] sm:$0xff] %vm399, %v1807
        %1840 = vst.msk [vmem:[%s396 + $0x8] sm:$0xff] %vm399, %v1808
        %1841 = vst.msk [vmem:[%s396 + $0x10] sm:$0xff] %vm399, %v1809
        %1842 = vst.msk [vmem:[%s396 + $0x18] sm:$0xff] %vm399, %v1810
        %1843 = vst.msk [vmem:[%s396 + $0x20] sm:$0xff] %vm399, %v1811
        %1844 = vst.msk [vmem:[%s396 + $0x28] sm:$0xff] %vm399, %v1812
        %1845 = vst.msk [vmem:[%s396 + $0x30] sm:$0xff] %vm399, %v1813
        %1846 = vst.msk [vmem:[%s396 + $0x38] sm:$0xff] %vm399, %v1814
        %1847 = vst.msk [vmem:[%s396 + $0x40] sm:$0xff] %vm399, %v1815
        %1848 = vst.msk [vmem:[%s396 + $0x48] sm:$0xff] %vm399, %v1816
        %1849 = vst.msk [vmem:[%s396 + $0x50] sm:$0xff] %vm399, %v1817
        %1850 = vst.msk [vmem:[%s396 + $0x58] sm:$0xff] %vm399, %v1818
        %1851 = vst.msk [vmem:[%s396 + $0x60] sm:$0xff] %vm399, %v1819
        %1852 = vst.msk [vmem:[%s396 + $0x68] sm:$0xff] %vm399, %v1820
        %1853 = vst.msk [vmem:[%s396 + $0x70] sm:$0xff] %vm399, %v1821
        %1854 = vst.msk [vmem:[%s396 + $0x78] sm:$0xff] %vm399, %v1822
        %1855 = vst.msk [vmem:[%s396 + $0x80] sm:$0xff] %vm399, %v1823
        %1856 = vst.msk [vmem:[%s396 + $0x88] sm:$0xff] %vm399, %v1824
        %1857 = vst.msk [vmem:[%s396 + $0x90] sm:$0xff] %vm399, %v1825
        %1858 = vst.msk [vmem:[%s396 + $0x98] sm:$0xff] %vm399, %v1826
        %1859 = vst.msk [vmem:[%s396 + $0xa0] sm:$0xff] %vm399, %v1827
        %1860 = vst.msk [vmem:[%s396 + $0xa8] sm:$0xff] %vm399, %v1828
        %1861 = vst.msk [vmem:[%s396 + $0xb0] sm:$0xff] %vm399, %v1829
        %1862 = vst.msk [vmem:[%s396 + $0xb8] sm:$0xff] %vm399, %v1830
        %1863 = vst.msk [vmem:[%s396 + $0xc0] sm:$0xff] %vm399, %v1831
        %1864 = vst.msk [vmem:[%s396 + $0xc8] sm:$0xff] %vm399, %v1832
        %1865 = vst.msk [vmem:[%s396 + $0xd0] sm:$0xff] %vm399, %v1833
        %1866 = vst.msk [vmem:[%s396 + $0xd8] sm:$0xff] %vm399, %v1834
        %1867 = vst.msk [vmem:[%s396 + $0xe0] sm:$0xff] %vm399, %v1835
        %1868 = vst.msk [vmem:[%s396 + $0xe8] sm:$0xff] %vm399, %v1836
        %1869 = vst.msk [vmem:[%s396 + $0xf0] sm:$0xff] %vm399, %v1837
        %1870 = vst.msk [vmem:[%s396 + $0xf8] sm:$0xff] %vm399, %v1838
        %1871 = vst.msk [vmem:[%s409 + $0x8] sm:$0xff] %vm399, %v1807
        %1872 = vst.msk [vmem:[%s409 + $0x10] sm:$0xff] %vm399, %v1808
        %1873 = vst.msk [vmem:[%s409 + $0x28] sm:$0xff] %vm399, %v1809
        %1874 = vst.msk [vmem:[%s409 + $0x30] sm:$0xff] %vm399, %v1810
        %1875 = vst.msk [vmem:[%s409 + $0x48] sm:$0xff] %vm399, %v1811
        %1876 = vst.msk [vmem:[%s409 + $0x50] sm:$0xff] %vm399, %v1812
        %1877 = vst.msk [vmem:[%s409 + $0x68] sm:$0xff] %vm399, %v1813
        %1878 = vst.msk [vmem:[%s409 + $0x70] sm:$0xff] %vm399, %v1814
        %1879 = vst.msk [vmem:[%s409 + $0x88] sm:$0xff] %vm399, %v1815
        %1880 = vst.msk [vmem:[%s409 + $0x90] sm:$0xff] %vm399, %v1816
        %1881 = vst.msk [vmem:[%s409 + $0xa8] sm:$0xff] %vm399, %v1817
        %1882 = vst.msk [vmem:[%s409 + $0xb0] sm:$0xff] %vm399, %v1818
        %1883 = vst.msk [vmem:[%s409 + $0xc8] sm:$0xff] %vm399, %v1819
        %1884 = vst.msk [vmem:[%s409 + $0xd0] sm:$0xff] %vm399, %v1820
        %1885 = vst.msk [vmem:[%s409 + $0xe8] sm:$0xff] %vm399, %v1821
        %1886 = vst.msk [vmem:[%s409 + $0xf0] sm:$0xff] %vm399, %v1822
        %1887 = vst.msk [vmem:[%s409 + $0x108] sm:$0xff] %vm399, %v1823
        %1888 = vst.msk [vmem:[%s409 + $0x110] sm:$0xff] %vm399, %v1824
        %1889 = vst.msk [vmem:[%s409 + $0x128] sm:$0xff] %vm399, %v1825
        %1890 = vst.msk [vmem:[%s409 + $0x130] sm:$0xff] %vm399, %v1826
        %1891 = vst.msk [vmem:[%s409 + $0x148] sm:$0xff] %vm399, %v1827
        %1892 = vst.msk [vmem:[%s409 + $0x150] sm:$0xff] %vm399, %v1828
        %1893 = vst.msk [vmem:[%s409 + $0x168] sm:$0xff] %vm399, %v1829
        %1894 = vst.msk [vmem:[%s409 + $0x170] sm:$0xff] %vm399, %v1830
        %1895 = vst.msk [vmem:[%s409 + $0x188] sm:$0xff] %vm399, %v1831
        %1896 = vst.msk [vmem:[%s409 + $0x190] sm:$0xff] %vm399, %v1832
        %1897 = vst.msk [vmem:[%s409 + $0x1a8] sm:$0xff] %vm399, %v1833
        %1898 = vst.msk [vmem:[%s409 + $0x1b0] sm:$0xff] %vm399, %v1834
        %1899 = vst.msk [vmem:[%s409 + $0x1c8] sm:$0xff] %vm399, %v1835
        %1900 = vst.msk [vmem:[%s409 + $0x1d0] sm:$0xff] %vm399, %v1836
        %1901 = vst.msk [vmem:[%s409 + $0x1e8] sm:$0xff] %vm399, %v1837
        %1902 = vst.msk [vmem:[%s409 + $0x1f0] sm:$0xff] %vm399, %v1838
        %v1903 = vld [vmem:[#allocation2 + $0x7] sm:$0xff]
        %v1904 = vld [vmem:[#allocation2 + $0xf] sm:$0xff]
        %v1905 = vld [vmem:[#allocation2 + $0x27] sm:$0xff]
        %v1906 = vld [vmem:[#allocation2 + $0x2f] sm:$0xff]
        %v1907 = vld [vmem:[#allocation2 + $0x47] sm:$0xff]
        %v1908 = vld [vmem:[#allocation2 + $0x4f] sm:$0xff]
        %v1909 = vld [vmem:[#allocation2 + $0x67] sm:$0xff]
        %v1910 = vld [vmem:[#allocation2 + $0x6f] sm:$0xff]
        %v1911 = vld [vmem:[#allocation2 + $0x87] sm:$0xff]
        %v1912 = vld [vmem:[#allocation2 + $0x8f] sm:$0xff]
        %v1913 = vld [vmem:[#allocation2 + $0xa7] sm:$0xff]
        %v1914 = vld [vmem:[#allocation2 + $0xaf] sm:$0xff]
        %v1915 = vld [vmem:[#allocation2 + $0xc7] sm:$0xff]
        %v1916 = vld [vmem:[#allocation2 + $0xcf] sm:$0xff]
        %v1917 = vld [vmem:[#allocation2 + $0xe7] sm:$0xff]
        %v1918 = vld [vmem:[#allocation2 + $0xef] sm:$0xff]
        %v1919 = vld [vmem:[#allocation2 + $0x107] sm:$0xff]
        %v1920 = vld [vmem:[#allocation2 + $0x10f] sm:$0xff]
        %v1921 = vld [vmem:[#allocation2 + $0x127] sm:$0xff]
        %v1922 = vld [vmem:[#allocation2 + $0x12f] sm:$0xff]
        %v1923 = vld [vmem:[#allocation2 + $0x147] sm:$0xff]
        %v1924 = vld [vmem:[#allocation2 + $0x14f] sm:$0xff]
        %v1925 = vld [vmem:[#allocation2 + $0x167] sm:$0xff]
        %v1926 = vld [vmem:[#allocation2 + $0x16f] sm:$0xff]
        %v1927 = vld [vmem:[#allocation2 + $0x187] sm:$0xff]
        %v1928 = vld [vmem:[#allocation2 + $0x18f] sm:$0xff]
        %v1929 = vld [vmem:[#allocation2 + $0x1a7] sm:$0xff]
        %v1930 = vld [vmem:[#allocation2 + $0x1af] sm:$0xff]
        %v1931 = vld [vmem:[#allocation2 + $0x1c7] sm:$0xff]
        %v1932 = vld [vmem:[#allocation2 + $0x1cf] sm:$0xff]
        %v1933 = vld [vmem:[#allocation2 + $0x1e7] sm:$0xff]
        %v1934 = vld [vmem:[#allocation2 + $0x1ef] sm:$0xff]
        %v1935 = vpack.c.bf16 %v1904, %v1903
        %v1936 = vpack.c.bf16 %v1906, %v1905
        %v1937 = vpack.c.bf16 %v1908, %v1907
        %v1938 = vpack.c.bf16 %v1910, %v1909
        %v1939 = vpack.c.bf16 %v1912, %v1911
        %v1940 = vpack.c.bf16 %v1914, %v1913
        %v1941 = vpack.c.bf16 %v1916, %v1915
        %v1942 = vpack.c.bf16 %v1918, %v1917
        %v1943 = vpack.c.bf16 %v1920, %v1919
        %v1944 = vpack.c.bf16 %v1922, %v1921
        %v1945 = vpack.c.bf16 %v1924, %v1923
        %v1946 = vpack.c.bf16 %v1926, %v1925
        %v1947 = vpack.c.bf16 %v1928, %v1927
        %v1948 = vpack.c.bf16 %v1930, %v1929
        %v1949 = vpack.c.bf16 %v1932, %v1931
        %v1950 = vpack.c.bf16 %v1934, %v1933
        %v1951 = vld [vmem:[#allocation2 + $0x8] sm:$0xff]
        %v1952 = vld [vmem:[#allocation2 + $0x10] sm:$0xff]
        %v1953 = vld [vmem:[#allocation2 + $0x28] sm:$0xff]
        %v1954 = vld [vmem:[#allocation2 + $0x30] sm:$0xff]
        %v1955 = vld [vmem:[#allocation2 + $0x48] sm:$0xff]
        %v1956 = vld [vmem:[#allocation2 + $0x50] sm:$0xff]
        %v1957 = vld [vmem:[#allocation2 + $0x68] sm:$0xff]
        %v1958 = vld [vmem:[#allocation2 + $0x70] sm:$0xff]
        %v1959 = vld [vmem:[#allocation2 + $0x88] sm:$0xff]
        %v1960 = vld [vmem:[#allocation2 + $0x90] sm:$0xff]
        %v1961 = vld [vmem:[#allocation2 + $0xa8] sm:$0xff]
        %v1962 = vld [vmem:[#allocation2 + $0xb0] sm:$0xff]
        %v1963 = vld [vmem:[#allocation2 + $0xc8] sm:$0xff]
        %v1964 = vld [vmem:[#allocation2 + $0xd0] sm:$0xff]
        %v1965 = vld [vmem:[#allocation2 + $0xe8] sm:$0xff]
        %v1966 = vld [vmem:[#allocation2 + $0xf0] sm:$0xff]
        %v1967 = vld [vmem:[#allocation2 + $0x108] sm:$0xff]
        %v1968 = vld [vmem:[#allocation2 + $0x110] sm:$0xff]
        %v1969 = vld [vmem:[#allocation2 + $0x128] sm:$0xff]
        %v1970 = vld [vmem:[#allocation2 + $0x130] sm:$0xff]
        %v1971 = vld [vmem:[#allocation2 + $0x148] sm:$0xff]
        %v1972 = vld [vmem:[#allocation2 + $0x150] sm:$0xff]
        %v1973 = vld [vmem:[#allocation2 + $0x168] sm:$0xff]
        %v1974 = vld [vmem:[#allocation2 + $0x170] sm:$0xff]
        %v1975 = vld [vmem:[#allocation2 + $0x188] sm:$0xff]
        %v1976 = vld [vmem:[#allocation2 + $0x190] sm:$0xff]
        %v1977 = vld [vmem:[#allocation2 + $0x1a8] sm:$0xff]
        %v1978 = vld [vmem:[#allocation2 + $0x1b0] sm:$0xff]
        %v1979 = vld [vmem:[#allocation2 + $0x1c8] sm:$0xff]
        %v1980 = vld [vmem:[#allocation2 + $0x1d0] sm:$0xff]
        %v1981 = vld [vmem:[#allocation2 + $0x1e8] sm:$0xff]
        %v1982 = vld [vmem:[#allocation2 + $0x1f0] sm:$0xff]
        %v1983 = vpack.c.bf16 %v1952, %v1951
        %v1984 = vpack.c.bf16 %v1954, %v1953
        %v1985 = vpack.c.bf16 %v1956, %v1955
        %v1986 = vpack.c.bf16 %v1958, %v1957
        %v1987 = vpack.c.bf16 %v1960, %v1959
        %v1988 = vpack.c.bf16 %v1962, %v1961
        %v1989 = vpack.c.bf16 %v1964, %v1963
        %v1990 = vpack.c.bf16 %v1966, %v1965
        %v1991 = vpack.c.bf16 %v1968, %v1967
        %v1992 = vpack.c.bf16 %v1970, %v1969
        %v1993 = vpack.c.bf16 %v1972, %v1971
        %v1994 = vpack.c.bf16 %v1974, %v1973
        %v1995 = vpack.c.bf16 %v1976, %v1975
        %v1996 = vpack.c.bf16 %v1978, %v1977
        %v1997 = vpack.c.bf16 %v1980, %v1979
        %v1998 = vpack.c.bf16 %v1982, %v1981
        %v1999 = vld [vmem:[#allocation2 + $0x9] sm:$0xff]
        %v2000 = vld [vmem:[#allocation2 + $0x11] sm:$0xff]
        %v2001 = vld [vmem:[#allocation2 + $0x29] sm:$0xff]
        %v2002 = vld [vmem:[#allocation2 + $0x31] sm:$0xff]
        %v2003 = vld [vmem:[#allocation2 + $0x49] sm:$0xff]
        %v2004 = vld [vmem:[#allocation2 + $0x51] sm:$0xff]
        %v2005 = vld [vmem:[#allocation2 + $0x69] sm:$0xff]
        %v2006 = vld [vmem:[#allocation2 + $0x71] sm:$0xff]
        %v2007 = vld [vmem:[#allocation2 + $0x89] sm:$0xff]
        %v2008 = vld [vmem:[#allocation2 + $0x91] sm:$0xff]
        %v2009 = vld [vmem:[#allocation2 + $0xa9] sm:$0xff]
        %v2010 = vld [vmem:[#allocation2 + $0xb1] sm:$0xff]
        %v2011 = vld [vmem:[#allocation2 + $0xc9] sm:$0xff]
        %v2012 = vld [vmem:[#allocation2 + $0xd1] sm:$0xff]
        %v2013 = vld [vmem:[#allocation2 + $0xe9] sm:$0xff]
        %v2014 = vld [vmem:[#allocation2 + $0xf1] sm:$0xff]
        %v2015 = vld [vmem:[#allocation2 + $0x109] sm:$0xff]
        %v2016 = vld [vmem:[#allocation2 + $0x111] sm:$0xff]
        %v2017 = vld [vmem:[#allocation2 + $0x129] sm:$0xff]
        %v2018 = vld [vmem:[#allocation2 + $0x131] sm:$0xff]
        %v2019 = vld [vmem:[#allocation2 + $0x149] sm:$0xff]
        %v2020 = vld [vmem:[#allocation2 + $0x151] sm:$0xff]
        %v2021 = vld [vmem:[#allocation2 + $0x169] sm:$0xff]
        %v2022 = vld [vmem:[#allocation2 + $0x171] sm:$0xff]
        %v2023 = vld [vmem:[#allocation2 + $0x189] sm:$0xff]
        %v2024 = vld [vmem:[#allocation2 + $0x191] sm:$0xff]
        %v2025 = vld [vmem:[#allocation2 + $0x1a9] sm:$0xff]
        %v2026 = vld [vmem:[#allocation2 + $0x1b1] sm:$0xff]
        %v2027 = vld [vmem:[#allocation2 + $0x1c9] sm:$0xff]
        %v2028 = vld [vmem:[#allocation2 + $0x1d1] sm:$0xff]
        %v2029 = vld [vmem:[#allocation2 + $0x1e9] sm:$0xff]
        %v2030 = vld [vmem:[#allocation2 + $0x1f1] sm:$0xff]
        %v2031 = vpack.c.bf16 %v2000, %v1999
        %v2032 = vpack.c.bf16 %v2002, %v2001
        %v2033 = vpack.c.bf16 %v2004, %v2003
        %v2034 = vpack.c.bf16 %v2006, %v2005
        %v2035 = vpack.c.bf16 %v2008, %v2007
        %v2036 = vpack.c.bf16 %v2010, %v2009
        %v2037 = vpack.c.bf16 %v2012, %v2011
        %v2038 = vpack.c.bf16 %v2014, %v2013
        %v2039 = vpack.c.bf16 %v2016, %v2015
        %v2040 = vpack.c.bf16 %v2018, %v2017
        %v2041 = vpack.c.bf16 %v2020, %v2019
        %v2042 = vpack.c.bf16 %v2022, %v2021
        %v2043 = vpack.c.bf16 %v2024, %v2023
        %v2044 = vpack.c.bf16 %v2026, %v2025
        %v2045 = vpack.c.bf16 %v2028, %v2027
        %v2046 = vpack.c.bf16 %v2030, %v2029
        %v2047 = vld [vmem:[%s409 + $0x7] sm:$0xff]
        %v2048 = vld [vmem:[%s409 + $0xf] sm:$0xff]
        %v2049 = vld [vmem:[%s409 + $0x27] sm:$0xff]
        %v2050 = vld [vmem:[%s409 + $0x2f] sm:$0xff]
        %v2051 = vld [vmem:[%s409 + $0x47] sm:$0xff]
        %v2052 = vld [vmem:[%s409 + $0x4f] sm:$0xff]
        %v2053 = vld [vmem:[%s409 + $0x67] sm:$0xff]
        %v2054 = vld [vmem:[%s409 + $0x6f] sm:$0xff]
        %v2055 = vld [vmem:[%s409 + $0x87] sm:$0xff]
        %v2056 = vld [vmem:[%s409 + $0x8f] sm:$0xff]
        %v2057 = vld [vmem:[%s409 + $0xa7] sm:$0xff]
        %v2058 = vld [vmem:[%s409 + $0xaf] sm:$0xff]
        %v2059 = vld [vmem:[%s409 + $0xc7] sm:$0xff]
        %v2060 = vld [vmem:[%s409 + $0xcf] sm:$0xff]
        %v2061 = vld [vmem:[%s409 + $0xe7] sm:$0xff]
        %v2062 = vld [vmem:[%s409 + $0xef] sm:$0xff]
        %v2063 = vld [vmem:[%s409 + $0x107] sm:$0xff]
        %v2064 = vld [vmem:[%s409 + $0x10f] sm:$0xff]
        %v2065 = vld [vmem:[%s409 + $0x127] sm:$0xff]
        %v2066 = vld [vmem:[%s409 + $0x12f] sm:$0xff]
        %v2067 = vld [vmem:[%s409 + $0x147] sm:$0xff]
        %v2068 = vld [vmem:[%s409 + $0x14f] sm:$0xff]
        %v2069 = vld [vmem:[%s409 + $0x167] sm:$0xff]
        %v2070 = vld [vmem:[%s409 + $0x16f] sm:$0xff]
        %v2071 = vld [vmem:[%s409 + $0x187] sm:$0xff]
        %v2072 = vld [vmem:[%s409 + $0x18f] sm:$0xff]
        %v2073 = vld [vmem:[%s409 + $0x1a7] sm:$0xff]
        %v2074 = vld [vmem:[%s409 + $0x1af] sm:$0xff]
        %v2075 = vld [vmem:[%s409 + $0x1c7] sm:$0xff]
        %v2076 = vld [vmem:[%s409 + $0x1cf] sm:$0xff]
        %v2077 = vld [vmem:[%s409 + $0x1e7] sm:$0xff]
        %v2078 = vld [vmem:[%s409 + $0x1ef] sm:$0xff]
        %v2079 = vpack.c.bf16 %v2048, %v2047
        %v2080 = vpack.c.bf16 %v2050, %v2049
        %v2081 = vpack.c.bf16 %v2052, %v2051
        %v2082 = vpack.c.bf16 %v2054, %v2053
        %v2083 = vpack.c.bf16 %v2056, %v2055
        %v2084 = vpack.c.bf16 %v2058, %v2057
        %v2085 = vpack.c.bf16 %v2060, %v2059
        %v2086 = vpack.c.bf16 %v2062, %v2061
        %v2087 = vpack.c.bf16 %v2064, %v2063
        %v2088 = vpack.c.bf16 %v2066, %v2065
        %v2089 = vpack.c.bf16 %v2068, %v2067
        %v2090 = vpack.c.bf16 %v2070, %v2069
        %v2091 = vpack.c.bf16 %v2072, %v2071
        %v2092 = vpack.c.bf16 %v2074, %v2073
        %v2093 = vpack.c.bf16 %v2076, %v2075
        %v2094 = vpack.c.bf16 %v2078, %v2077
        %v2095 = vld [vmem:[%s409 + $0x8] sm:$0xff]
        %v2096 = vld [vmem:[%s409 + $0x10] sm:$0xff]
        %v2097 = vld [vmem:[%s409 + $0x28] sm:$0xff]
        %v2098 = vld [vmem:[%s409 + $0x30] sm:$0xff]
        %v2099 = vld [vmem:[%s409 + $0x48] sm:$0xff]
        %v2100 = vld [vmem:[%s409 + $0x50] sm:$0xff]
        %v2101 = vld [vmem:[%s409 + $0x68] sm:$0xff]
        %v2102 = vld [vmem:[%s409 + $0x70] sm:$0xff]
        %v2103 = vld [vmem:[%s409 + $0x88] sm:$0xff]
        %v2104 = vld [vmem:[%s409 + $0x90] sm:$0xff]
        %v2105 = vld [vmem:[%s409 + $0xa8] sm:$0xff]
        %v2106 = vld [vmem:[%s409 + $0xb0] sm:$0xff]
        %v2107 = vld [vmem:[%s409 + $0xc8] sm:$0xff]
        %v2108 = vld [vmem:[%s409 + $0xd0] sm:$0xff]
        %v2109 = vld [vmem:[%s409 + $0xe8] sm:$0xff]
        %v2110 = vld [vmem:[%s409 + $0xf0] sm:$0xff]
        %v2111 = vld [vmem:[%s409 + $0x108] sm:$0xff]
        %v2112 = vld [vmem:[%s409 + $0x110] sm:$0xff]
        %v2113 = vld [vmem:[%s409 + $0x128] sm:$0xff]
        %v2114 = vld [vmem:[%s409 + $0x130] sm:$0xff]
        %v2115 = vld [vmem:[%s409 + $0x148] sm:$0xff]
        %v2116 = vld [vmem:[%s409 + $0x150] sm:$0xff]
        %v2117 = vld [vmem:[%s409 + $0x168] sm:$0xff]
        %v2118 = vld [vmem:[%s409 + $0x170] sm:$0xff]
        %v2119 = vld [vmem:[%s409 + $0x188] sm:$0xff]
        %v2120 = vld [vmem:[%s409 + $0x190] sm:$0xff]
        %v2121 = vld [vmem:[%s409 + $0x1a8] sm:$0xff]
        %v2122 = vld [vmem:[%s409 + $0x1b0] sm:$0xff]
        %v2123 = vld [vmem:[%s409 + $0x1c8] sm:$0xff]
        %v2124 = vld [vmem:[%s409 + $0x1d0] sm:$0xff]
        %v2125 = vld [vmem:[%s409 + $0x1e8] sm:$0xff]
        %v2126 = vld [vmem:[%s409 + $0x1f0] sm:$0xff]
        %v2127 = vpack.c.bf16 %v2096, %v2095
        %v2128 = vpack.c.bf16 %v2098, %v2097
        %v2129 = vpack.c.bf16 %v2100, %v2099
        %v2130 = vpack.c.bf16 %v2102, %v2101
        %v2131 = vpack.c.bf16 %v2104, %v2103
        %v2132 = vpack.c.bf16 %v2106, %v2105
        %v2133 = vpack.c.bf16 %v2108, %v2107
        %v2134 = vpack.c.bf16 %v2110, %v2109
        %v2135 = vpack.c.bf16 %v2112, %v2111
        %v2136 = vpack.c.bf16 %v2114, %v2113
        %v2137 = vpack.c.bf16 %v2116, %v2115
        %v2138 = vpack.c.bf16 %v2118, %v2117
        %v2139 = vpack.c.bf16 %v2120, %v2119
        %v2140 = vpack.c.bf16 %v2122, %v2121
        %v2141 = vpack.c.bf16 %v2124, %v2123
        %v2142 = vpack.c.bf16 %v2126, %v2125
        %v2143 = vld [vmem:[%s409 + $0x9] sm:$0xff]
        %v2144 = vld [vmem:[%s409 + $0x11] sm:$0xff]
        %v2145 = vld [vmem:[%s409 + $0x29] sm:$0xff]
        %v2146 = vld [vmem:[%s409 + $0x31] sm:$0xff]
        %v2147 = vld [vmem:[%s409 + $0x49] sm:$0xff]
        %v2148 = vld [vmem:[%s409 + $0x51] sm:$0xff]
        %v2149 = vld [vmem:[%s409 + $0x69] sm:$0xff]
        %v2150 = vld [vmem:[%s409 + $0x71] sm:$0xff]
        %v2151 = vld [vmem:[%s409 + $0x89] sm:$0xff]
        %v2152 = vld [vmem:[%s409 + $0x91] sm:$0xff]
        %v2153 = vld [vmem:[%s409 + $0xa9] sm:$0xff]
        %v2154 = vld [vmem:[%s409 + $0xb1] sm:$0xff]
        %v2155 = vld [vmem:[%s409 + $0xc9] sm:$0xff]
        %v2156 = vld [vmem:[%s409 + $0xd1] sm:$0xff]
        %v2157 = vld [vmem:[%s409 + $0xe9] sm:$0xff]
        %v2158 = vld [vmem:[%s409 + $0xf1] sm:$0xff]
        %v2159 = vld [vmem:[%s409 + $0x109] sm:$0xff]
        %v2160 = vld [vmem:[%s409 + $0x111] sm:$0xff]
        %v2161 = vld [vmem:[%s409 + $0x129] sm:$0xff]
        %v2162 = vld [vmem:[%s409 + $0x131] sm:$0xff]
        %v2163 = vld [vmem:[%s409 + $0x149] sm:$0xff]
        %v2164 = vld [vmem:[%s409 + $0x151] sm:$0xff]
        %v2165 = vld [vmem:[%s409 + $0x169] sm:$0xff]
        %v2166 = vld [vmem:[%s409 + $0x171] sm:$0xff]
        %v2167 = vld [vmem:[%s409 + $0x189] sm:$0xff]
        %v2168 = vld [vmem:[%s409 + $0x191] sm:$0xff]
        %v2169 = vld [vmem:[%s409 + $0x1a9] sm:$0xff]
        %v2170 = vld [vmem:[%s409 + $0x1b1] sm:$0xff]
        %v2171 = vld [vmem:[%s409 + $0x1c9] sm:$0xff]
        %v2172 = vld [vmem:[%s409 + $0x1d1] sm:$0xff]
        %v2173 = vld [vmem:[%s409 + $0x1e9] sm:$0xff]
        %v2174 = vld [vmem:[%s409 + $0x1f1] sm:$0xff]
        %v2175 = vpack.c.bf16 %v2144, %v2143
        %v2176 = vpack.c.bf16 %v2146, %v2145
        %v2177 = vpack.c.bf16 %v2148, %v2147
        %v2178 = vpack.c.bf16 %v2150, %v2149
        %v2179 = vpack.c.bf16 %v2152, %v2151
        %v2180 = vpack.c.bf16 %v2154, %v2153
        %v2181 = vpack.c.bf16 %v2156, %v2155
        %v2182 = vpack.c.bf16 %v2158, %v2157
        %v2183 = vpack.c.bf16 %v2160, %v2159
        %v2184 = vpack.c.bf16 %v2162, %v2161
        %v2185 = vpack.c.bf16 %v2164, %v2163
        %v2186 = vpack.c.bf16 %v2166, %v2165
        %v2187 = vpack.c.bf16 %v2168, %v2167
        %v2188 = vpack.c.bf16 %v2170, %v2169
        %v2189 = vpack.c.bf16 %v2172, %v2171
        %v2190 = vpack.c.bf16 %v2174, %v2173
        %s2191 = scalar_lea.vmem [#allocation2], 64
        %v2192 = vld [vmem:[%s2191 + $0x7] sm:$0xff]
        %v2193 = vld [vmem:[%s2191 + $0xf] sm:$0xff]
        %v2194 = vld [vmem:[%s2191 + $0x27] sm:$0xff]
        %v2195 = vld [vmem:[%s2191 + $0x2f] sm:$0xff]
        %v2196 = vld [vmem:[%s2191 + $0x47] sm:$0xff]
        %v2197 = vld [vmem:[%s2191 + $0x4f] sm:$0xff]
        %v2198 = vld [vmem:[%s2191 + $0x67] sm:$0xff]
        %v2199 = vld [vmem:[%s2191 + $0x6f] sm:$0xff]
        %v2200 = vld [vmem:[%s2191 + $0x87] sm:$0xff]
        %v2201 = vld [vmem:[%s2191 + $0x8f] sm:$0xff]
        %v2202 = vld [vmem:[%s2191 + $0xa7] sm:$0xff]
        %v2203 = vld [vmem:[%s2191 + $0xaf] sm:$0xff]
        %v2204 = vld [vmem:[%s2191 + $0xc7] sm:$0xff]
        %v2205 = vld [vmem:[%s2191 + $0xcf] sm:$0xff]
        %v2206 = vld [vmem:[%s2191 + $0xe7] sm:$0xff]
        %v2207 = vld [vmem:[%s2191 + $0xef] sm:$0xff]
        %v2208 = vld [vmem:[%s2191 + $0x107] sm:$0xff]
        %v2209 = vld [vmem:[%s2191 + $0x10f] sm:$0xff]
        %v2210 = vld [vmem:[%s2191 + $0x127] sm:$0xff]
        %v2211 = vld [vmem:[%s2191 + $0x12f] sm:$0xff]
        %v2212 = vld [vmem:[%s2191 + $0x147] sm:$0xff]
        %v2213 = vld [vmem:[%s2191 + $0x14f] sm:$0xff]
        %v2214 = vld [vmem:[%s2191 + $0x167] sm:$0xff]
        %v2215 = vld [vmem:[%s2191 + $0x16f] sm:$0xff]
        %v2216 = vld [vmem:[%s2191 + $0x187] sm:$0xff]
        %v2217 = vld [vmem:[%s2191 + $0x18f] sm:$0xff]
        %v2218 = vld [vmem:[%s2191 + $0x1a7] sm:$0xff]
        %v2219 = vld [vmem:[%s2191 + $0x1af] sm:$0xff]
        %v2220 = vld [vmem:[%s2191 + $0x1c7] sm:$0xff]
        %v2221 = vld [vmem:[%s2191 + $0x1cf] sm:$0xff]
        %v2222 = vld [vmem:[%s2191 + $0x1e7] sm:$0xff]
        %v2223 = vld [vmem:[%s2191 + $0x1ef] sm:$0xff]
        %v2224 = vpack.c.bf16 %v2193, %v2192
        %v2225 = vpack.c.bf16 %v2195, %v2194
        %v2226 = vpack.c.bf16 %v2197, %v2196
        %v2227 = vpack.c.bf16 %v2199, %v2198
        %v2228 = vpack.c.bf16 %v2201, %v2200
        %v2229 = vpack.c.bf16 %v2203, %v2202
        %v2230 = vpack.c.bf16 %v2205, %v2204
        %v2231 = vpack.c.bf16 %v2207, %v2206
        %v2232 = vpack.c.bf16 %v2209, %v2208
        %v2233 = vpack.c.bf16 %v2211, %v2210
        %v2234 = vpack.c.bf16 %v2213, %v2212
        %v2235 = vpack.c.bf16 %v2215, %v2214
        %v2236 = vpack.c.bf16 %v2217, %v2216
        %v2237 = vpack.c.bf16 %v2219, %v2218
        %v2238 = vpack.c.bf16 %v2221, %v2220
        %v2239 = vpack.c.bf16 %v2223, %v2222
        %v2240 = vld [vmem:[%s2191 + $0x8] sm:$0xff]
        %v2241 = vld [vmem:[%s2191 + $0x10] sm:$0xff]
        %v2242 = vld [vmem:[%s2191 + $0x28] sm:$0xff]
        %v2243 = vld [vmem:[%s2191 + $0x30] sm:$0xff]
        %v2244 = vld [vmem:[%s2191 + $0x48] sm:$0xff]
        %v2245 = vld [vmem:[%s2191 + $0x50] sm:$0xff]
        %v2246 = vld [vmem:[%s2191 + $0x68] sm:$0xff]
        %v2247 = vld [vmem:[%s2191 + $0x70] sm:$0xff]
        %v2248 = vld [vmem:[%s2191 + $0x88] sm:$0xff]
        %v2249 = vld [vmem:[%s2191 + $0x90] sm:$0xff]
        %v2250 = vld [vmem:[%s2191 + $0xa8] sm:$0xff]
        %v2251 = vld [vmem:[%s2191 + $0xb0] sm:$0xff]
        %v2252 = vld [vmem:[%s2191 + $0xc8] sm:$0xff]
        %v2253 = vld [vmem:[%s2191 + $0xd0] sm:$0xff]
        %v2254 = vld [vmem:[%s2191 + $0xe8] sm:$0xff]
        %v2255 = vld [vmem:[%s2191 + $0xf0] sm:$0xff]
        %v2256 = vld [vmem:[%s2191 + $0x108] sm:$0xff]
        %v2257 = vld [vmem:[%s2191 + $0x110] sm:$0xff]
        %v2258 = vld [vmem:[%s2191 + $0x128] sm:$0xff]
        %v2259 = vld [vmem:[%s2191 + $0x130] sm:$0xff]
        %v2260 = vld [vmem:[%s2191 + $0x148] sm:$0xff]
        %v2261 = vld [vmem:[%s2191 + $0x150] sm:$0xff]
        %v2262 = vld [vmem:[%s2191 + $0x168] sm:$0xff]
        %v2263 = vld [vmem:[%s2191 + $0x170] sm:$0xff]
        %v2264 = vld [vmem:[%s2191 + $0x188] sm:$0xff]
        %v2265 = vld [vmem:[%s2191 + $0x190] sm:$0xff]
        %v2266 = vld [vmem:[%s2191 + $0x1a8] sm:$0xff]
        %v2267 = vld [vmem:[%s2191 + $0x1b0] sm:$0xff]
        %v2268 = vld [vmem:[%s2191 + $0x1c8] sm:$0xff]
        %v2269 = vld [vmem:[%s2191 + $0x1d0] sm:$0xff]
        %v2270 = vld [vmem:[%s2191 + $0x1e8] sm:$0xff]
        %v2271 = vld [vmem:[%s2191 + $0x1f0] sm:$0xff]
        %v2272 = vpack.c.bf16 %v2241, %v2240
        %v2273 = vpack.c.bf16 %v2243, %v2242
        %v2274 = vpack.c.bf16 %v2245, %v2244
        %v2275 = vpack.c.bf16 %v2247, %v2246
        %v2276 = vpack.c.bf16 %v2249, %v2248
        %v2277 = vpack.c.bf16 %v2251, %v2250
        %v2278 = vpack.c.bf16 %v2253, %v2252
        %v2279 = vpack.c.bf16 %v2255, %v2254
        %v2280 = vpack.c.bf16 %v2257, %v2256
        %v2281 = vpack.c.bf16 %v2259, %v2258
        %v2282 = vpack.c.bf16 %v2261, %v2260
        %v2283 = vpack.c.bf16 %v2263, %v2262
        %v2284 = vpack.c.bf16 %v2265, %v2264
        %v2285 = vpack.c.bf16 %v2267, %v2266
        %v2286 = vpack.c.bf16 %v2269, %v2268
        %v2287 = vpack.c.bf16 %v2271, %v2270
        %v2288 = vld [vmem:[%s2191 + $0x9] sm:$0xff]
        %v2289 = vld [vmem:[%s2191 + $0x11] sm:$0xff]
        %v2290 = vld [vmem:[%s2191 + $0x29] sm:$0xff]
        %v2291 = vld [vmem:[%s2191 + $0x31] sm:$0xff]
        %v2292 = vld [vmem:[%s2191 + $0x49] sm:$0xff]
        %v2293 = vld [vmem:[%s2191 + $0x51] sm:$0xff]
        %v2294 = vld [vmem:[%s2191 + $0x69] sm:$0xff]
        %v2295 = vld [vmem:[%s2191 + $0x71] sm:$0xff]
        %v2296 = vld [vmem:[%s2191 + $0x89] sm:$0xff]
        %v2297 = vld [vmem:[%s2191 + $0x91] sm:$0xff]
        %v2298 = vld [vmem:[%s2191 + $0xa9] sm:$0xff]
        %v2299 = vld [vmem:[%s2191 + $0xb1] sm:$0xff]
        %v2300 = vld [vmem:[%s2191 + $0xc9] sm:$0xff]
        %v2301 = vld [vmem:[%s2191 + $0xd1] sm:$0xff]
        %v2302 = vld [vmem:[%s2191 + $0xe9] sm:$0xff]
        %v2303 = vld [vmem:[%s2191 + $0xf1] sm:$0xff]
        %v2304 = vld [vmem:[%s2191 + $0x109] sm:$0xff]
        %v2305 = vld [vmem:[%s2191 + $0x111] sm:$0xff]
        %v2306 = vld [vmem:[%s2191 + $0x129] sm:$0xff]
        %v2307 = vld [vmem:[%s2191 + $0x131] sm:$0xff]
        %v2308 = vld [vmem:[%s2191 + $0x149] sm:$0xff]
        %v2309 = vld [vmem:[%s2191 + $0x151] sm:$0xff]
        %v2310 = vld [vmem:[%s2191 + $0x169] sm:$0xff]
        %v2311 = vld [vmem:[%s2191 + $0x171] sm:$0xff]
        %v2312 = vld [vmem:[%s2191 + $0x189] sm:$0xff]
        %v2313 = vld [vmem:[%s2191 + $0x191] sm:$0xff]
        %v2314 = vld [vmem:[%s2191 + $0x1a9] sm:$0xff]
        %v2315 = vld [vmem:[%s2191 + $0x1b1] sm:$0xff]
        %v2316 = vld [vmem:[%s2191 + $0x1c9] sm:$0xff]
        %v2317 = vld [vmem:[%s2191 + $0x1d1] sm:$0xff]
        %v2318 = vld [vmem:[%s2191 + $0x1e9] sm:$0xff]
        %v2319 = vld [vmem:[%s2191 + $0x1f1] sm:$0xff]
        %v2320 = vpack.c.bf16 %v2289, %v2288
        %v2321 = vpack.c.bf16 %v2291, %v2290
        %v2322 = vpack.c.bf16 %v2293, %v2292
        %v2323 = vpack.c.bf16 %v2295, %v2294
        %v2324 = vpack.c.bf16 %v2297, %v2296
        %v2325 = vpack.c.bf16 %v2299, %v2298
        %v2326 = vpack.c.bf16 %v2301, %v2300
        %v2327 = vpack.c.bf16 %v2303, %v2302
        %v2328 = vpack.c.bf16 %v2305, %v2304
        %v2329 = vpack.c.bf16 %v2307, %v2306
        %v2330 = vpack.c.bf16 %v2309, %v2308
        %v2331 = vpack.c.bf16 %v2311, %v2310
        %v2332 = vpack.c.bf16 %v2313, %v2312
        %v2333 = vpack.c.bf16 %v2315, %v2314
        %v2334 = vpack.c.bf16 %v2317, %v2316
        %v2335 = vpack.c.bf16 %v2319, %v2318
        %2352 = vrot.lane.b32.xlu0 %v1983, 8
        %v2353 = vpop.permute.xlu0 %2352
        %2354 = vrot.lane.b32.xlu0 %v1984, 8
        %v2355 = vpop.permute.xlu0 %2354
        %2356 = vrot.lane.b32.xlu0 %v1985, 8
        %v2357 = vpop.permute.xlu0 %2356
        %2358 = vrot.lane.b32.xlu0 %v1986, 8
        %v2359 = vpop.permute.xlu0 %2358
        %2360 = vrot.lane.b32.xlu0 %v1987, 8
        %v2361 = vpop.permute.xlu0 %2360
        %2362 = vrot.lane.b32.xlu0 %v1988, 8
        %v2363 = vpop.permute.xlu0 %2362
        %2364 = vrot.lane.b32.xlu0 %v1989, 8
        %v2365 = vpop.permute.xlu0 %2364
        %2366 = vrot.lane.b32.xlu0 %v1990, 8
        %v2367 = vpop.permute.xlu0 %2366
        %2368 = vrot.lane.b32.xlu0 %v1991, 8
        %v2369 = vpop.permute.xlu0 %2368
        %2370 = vrot.lane.b32.xlu0 %v1992, 8
        %v2371 = vpop.permute.xlu0 %2370
        %2372 = vrot.lane.b32.xlu0 %v1993, 8
        %v2373 = vpop.permute.xlu0 %2372
        %2374 = vrot.lane.b32.xlu0 %v1994, 8
        %v2375 = vpop.permute.xlu0 %2374
        %2376 = vrot.lane.b32.xlu0 %v1995, 8
        %v2377 = vpop.permute.xlu0 %2376
        %2378 = vrot.lane.b32.xlu0 %v1996, 8
        %v2379 = vpop.permute.xlu0 %2378
        %2380 = vrot.lane.b32.xlu0 %v1997, 8
        %v2381 = vpop.permute.xlu0 %2380
        %2382 = vrot.lane.b32.xlu0 %v1998, 8
        %v2383 = vpop.permute.xlu0 %2382
        %2400 = vrot.lane.b32.xlu0 %v2031, 16
        %v2401 = vpop.permute.xlu0 %2400
        %2402 = vrot.lane.b32.xlu0 %v2032, 16
        %v2403 = vpop.permute.xlu0 %2402
        %2404 = vrot.lane.b32.xlu0 %v2033, 16
        %v2405 = vpop.permute.xlu0 %2404
        %2406 = vrot.lane.b32.xlu0 %v2034, 16
        %v2407 = vpop.permute.xlu0 %2406
        %2408 = vrot.lane.b32.xlu0 %v2035, 16
        %v2409 = vpop.permute.xlu0 %2408
        %2410 = vrot.lane.b32.xlu0 %v2036, 16
        %v2411 = vpop.permute.xlu0 %2410
        %2412 = vrot.lane.b32.xlu0 %v2037, 16
        %v2413 = vpop.permute.xlu0 %2412
        %2414 = vrot.lane.b32.xlu0 %v2038, 16
        %v2415 = vpop.permute.xlu0 %2414
        %2416 = vrot.lane.b32.xlu0 %v2039, 16
        %v2417 = vpop.permute.xlu0 %2416
        %2418 = vrot.lane.b32.xlu0 %v2040, 16
        %v2419 = vpop.permute.xlu0 %2418
        %2420 = vrot.lane.b32.xlu0 %v2041, 16
        %v2421 = vpop.permute.xlu0 %2420
        %2422 = vrot.lane.b32.xlu0 %v2042, 16
        %v2423 = vpop.permute.xlu0 %2422
        %2424 = vrot.lane.b32.xlu0 %v2043, 16
        %v2425 = vpop.permute.xlu0 %2424
        %2426 = vrot.lane.b32.xlu0 %v2044, 16
        %v2427 = vpop.permute.xlu0 %2426
        %2428 = vrot.lane.b32.xlu0 %v2045, 16
        %v2429 = vpop.permute.xlu0 %2428
        %2430 = vrot.lane.b32.xlu0 %v2046, 16
        %v2431 = vpop.permute.xlu0 %2430
        %2448 = vrot.lane.b32.xlu0 %v2079, 24
        %v2449 = vpop.permute.xlu0 %2448
        %2450 = vrot.lane.b32.xlu0 %v2080, 24
        %v2451 = vpop.permute.xlu0 %2450
        %2452 = vrot.lane.b32.xlu0 %v2081, 24
        %v2453 = vpop.permute.xlu0 %2452
        %2454 = vrot.lane.b32.xlu0 %v2082, 24
        %v2455 = vpop.permute.xlu0 %2454
        %2456 = vrot.lane.b32.xlu0 %v2083, 24
        %v2457 = vpop.permute.xlu0 %2456
        %2458 = vrot.lane.b32.xlu0 %v2084, 24
        %v2459 = vpop.permute.xlu0 %2458
        %2460 = vrot.lane.b32.xlu0 %v2085, 24
        %v2461 = vpop.permute.xlu0 %2460
        %2462 = vrot.lane.b32.xlu0 %v2086, 24
        %v2463 = vpop.permute.xlu0 %2462
        %2464 = vrot.lane.b32.xlu0 %v2087, 24
        %v2465 = vpop.permute.xlu0 %2464
        %2466 = vrot.lane.b32.xlu0 %v2088, 24
        %v2467 = vpop.permute.xlu0 %2466
        %2468 = vrot.lane.b32.xlu0 %v2089, 24
        %v2469 = vpop.permute.xlu0 %2468
        %2470 = vrot.lane.b32.xlu0 %v2090, 24
        %v2471 = vpop.permute.xlu0 %2470
        %2472 = vrot.lane.b32.xlu0 %v2091, 24
        %v2473 = vpop.permute.xlu0 %2472
        %2474 = vrot.lane.b32.xlu0 %v2092, 24
        %v2475 = vpop.permute.xlu0 %2474
        %2476 = vrot.lane.b32.xlu0 %v2093, 24
        %v2477 = vpop.permute.xlu0 %2476
        %2478 = vrot.lane.b32.xlu0 %v2094, 24
        %v2479 = vpop.permute.xlu0 %2478
        %2496 = vrot.lane.b32.xlu0 %v2127, 32
        %v2497 = vpop.permute.xlu0 %2496
        %2498 = vrot.lane.b32.xlu0 %v2128, 32
        %v2499 = vpop.permute.xlu0 %2498
        %2500 = vrot.lane.b32.xlu0 %v2129, 32
        %v2501 = vpop.permute.xlu0 %2500
        %2502 = vrot.lane.b32.xlu0 %v2130, 32
        %v2503 = vpop.permute.xlu0 %2502
        %2504 = vrot.lane.b32.xlu0 %v2131, 32
        %v2505 = vpop.permute.xlu0 %2504
        %2506 = vrot.lane.b32.xlu0 %v2132, 32
        %v2507 = vpop.permute.xlu0 %2506
        %2508 = vrot.lane.b32.xlu0 %v2133, 32
        %v2509 = vpop.permute.xlu0 %2508
        %2510 = vrot.lane.b32.xlu0 %v2134, 32
        %v2511 = vpop.permute.xlu0 %2510
        %2512 = vrot.lane.b32.xlu0 %v2135, 32
        %v2513 = vpop.permute.xlu0 %2512
        %2514 = vrot.lane.b32.xlu0 %v2136, 32
        %v2515 = vpop.permute.xlu0 %2514
        %2516 = vrot.lane.b32.xlu0 %v2137, 32
        %v2517 = vpop.permute.xlu0 %2516
        %2518 = vrot.lane.b32.xlu0 %v2138, 32
        %v2519 = vpop.permute.xlu0 %2518
        %2520 = vrot.lane.b32.xlu0 %v2139, 32
        %v2521 = vpop.permute.xlu0 %2520
        %2522 = vrot.lane.b32.xlu0 %v2140, 32
        %v2523 = vpop.permute.xlu0 %2522
        %2524 = vrot.lane.b32.xlu0 %v2141, 32
        %v2525 = vpop.permute.xlu0 %2524
        %2526 = vrot.lane.b32.xlu0 %v2142, 32
        %v2527 = vpop.permute.xlu0 %2526
        %2544 = vrot.lane.b32.xlu0 %v2175, 40
        %v2545 = vpop.permute.xlu0 %2544
        %2546 = vrot.lane.b32.xlu0 %v2176, 40
        %v2547 = vpop.permute.xlu0 %2546
        %2548 = vrot.lane.b32.xlu0 %v2177, 40
        %v2549 = vpop.permute.xlu0 %2548
        %2550 = vrot.lane.b32.xlu0 %v2178, 40
        %v2551 = vpop.permute.xlu0 %2550
        %2552 = vrot.lane.b32.xlu0 %v2179, 40
        %v2553 = vpop.permute.xlu0 %2552
        %2554 = vrot.lane.b32.xlu0 %v2180, 40
        %v2555 = vpop.permute.xlu0 %2554
        %2556 = vrot.lane.b32.xlu0 %v2181, 40
        %v2557 = vpop.permute.xlu0 %2556
        %2558 = vrot.lane.b32.xlu0 %v2182, 40
        %v2559 = vpop.permute.xlu0 %2558
        %2560 = vrot.lane.b32.xlu0 %v2183, 40
        %v2561 = vpop.permute.xlu0 %2560
        %2562 = vrot.lane.b32.xlu0 %v2184, 40
        %v2563 = vpop.permute.xlu0 %2562
        %2564 = vrot.lane.b32.xlu0 %v2185, 40
        %v2565 = vpop.permute.xlu0 %2564
        %2566 = vrot.lane.b32.xlu0 %v2186, 40
        %v2567 = vpop.permute.xlu0 %2566
        %2568 = vrot.lane.b32.xlu0 %v2187, 40
        %v2569 = vpop.permute.xlu0 %2568
        %2570 = vrot.lane.b32.xlu0 %v2188, 40
        %v2571 = vpop.permute.xlu0 %2570
        %2572 = vrot.lane.b32.xlu0 %v2189, 40
        %v2573 = vpop.permute.xlu0 %2572
        %2574 = vrot.lane.b32.xlu0 %v2190, 40
        %v2575 = vpop.permute.xlu0 %2574
        %2592 = vrot.lane.b32.xlu0 %v2224, 48
        %v2593 = vpop.permute.xlu0 %2592
        %2594 = vrot.lane.b32.xlu0 %v2225, 48
        %v2595 = vpop.permute.xlu0 %2594
        %2596 = vrot.lane.b32.xlu0 %v2226, 48
        %v2597 = vpop.permute.xlu0 %2596
        %2598 = vrot.lane.b32.xlu0 %v2227, 48
        %v2599 = vpop.permute.xlu0 %2598
        %2600 = vrot.lane.b32.xlu0 %v2228, 48
        %v2601 = vpop.permute.xlu0 %2600
        %2602 = vrot.lane.b32.xlu0 %v2229, 48
        %v2603 = vpop.permute.xlu0 %2602
        %2604 = vrot.lane.b32.xlu0 %v2230, 48
        %v2605 = vpop.permute.xlu0 %2604
        %2606 = vrot.lane.b32.xlu0 %v2231, 48
        %v2607 = vpop.permute.xlu0 %2606
        %2608 = vrot.lane.b32.xlu0 %v2232, 48
        %v2609 = vpop.permute.xlu0 %2608
        %2610 = vrot.lane.b32.xlu0 %v2233, 48
        %v2611 = vpop.permute.xlu0 %2610
        %2612 = vrot.lane.b32.xlu0 %v2234, 48
        %v2613 = vpop.permute.xlu0 %2612
        %2614 = vrot.lane.b32.xlu0 %v2235, 48
        %v2615 = vpop.permute.xlu0 %2614
        %2616 = vrot.lane.b32.xlu0 %v2236, 48
        %v2617 = vpop.permute.xlu0 %2616
        %2618 = vrot.lane.b32.xlu0 %v2237, 48
        %v2619 = vpop.permute.xlu0 %2618
        %2620 = vrot.lane.b32.xlu0 %v2238, 48
        %v2621 = vpop.permute.xlu0 %2620
        %2622 = vrot.lane.b32.xlu0 %v2239, 48
        %v2623 = vpop.permute.xlu0 %2622
        %2640 = vrot.lane.b32.xlu0 %v2272, 56
        %v2641 = vpop.permute.xlu0 %2640
        %2642 = vrot.lane.b32.xlu0 %v2273, 56
        %v2643 = vpop.permute.xlu0 %2642
        %2644 = vrot.lane.b32.xlu0 %v2274, 56
        %v2645 = vpop.permute.xlu0 %2644
        %2646 = vrot.lane.b32.xlu0 %v2275, 56
        %v2647 = vpop.permute.xlu0 %2646
        %2648 = vrot.lane.b32.xlu0 %v2276, 56
        %v2649 = vpop.permute.xlu0 %2648
        %2650 = vrot.lane.b32.xlu0 %v2277, 56
        %v2651 = vpop.permute.xlu0 %2650
        %2652 = vrot.lane.b32.xlu0 %v2278, 56
        %v2653 = vpop.permute.xlu0 %2652
        %2654 = vrot.lane.b32.xlu0 %v2279, 56
        %v2655 = vpop.permute.xlu0 %2654
        %2656 = vrot.lane.b32.xlu0 %v2280, 56
        %v2657 = vpop.permute.xlu0 %2656
        %2658 = vrot.lane.b32.xlu0 %v2281, 56
        %v2659 = vpop.permute.xlu0 %2658
        %2660 = vrot.lane.b32.xlu0 %v2282, 56
        %v2661 = vpop.permute.xlu0 %2660
        %2662 = vrot.lane.b32.xlu0 %v2283, 56
        %v2663 = vpop.permute.xlu0 %2662
        %2664 = vrot.lane.b32.xlu0 %v2284, 56
        %v2665 = vpop.permute.xlu0 %2664
        %2666 = vrot.lane.b32.xlu0 %v2285, 56
        %v2667 = vpop.permute.xlu0 %2666
        %2668 = vrot.lane.b32.xlu0 %v2286, 56
        %v2669 = vpop.permute.xlu0 %2668
        %2670 = vrot.lane.b32.xlu0 %v2287, 56
        %v2671 = vpop.permute.xlu0 %2670
        %2688 = vrot.lane.b32.xlu0 %v2320, 64
        %v2689 = vpop.permute.xlu0 %2688
        %2690 = vrot.lane.b32.xlu0 %v2321, 64
        %v2691 = vpop.permute.xlu0 %2690
        %2692 = vrot.lane.b32.xlu0 %v2322, 64
        %v2693 = vpop.permute.xlu0 %2692
        %2694 = vrot.lane.b32.xlu0 %v2323, 64
        %v2695 = vpop.permute.xlu0 %2694
        %2696 = vrot.lane.b32.xlu0 %v2324, 64
        %v2697 = vpop.permute.xlu0 %2696
        %2698 = vrot.lane.b32.xlu0 %v2325, 64
        %v2699 = vpop.permute.xlu0 %2698
        %2700 = vrot.lane.b32.xlu0 %v2326, 64
        %v2701 = vpop.permute.xlu0 %2700
        %2702 = vrot.lane.b32.xlu0 %v2327, 64
        %v2703 = vpop.permute.xlu0 %2702
        %2704 = vrot.lane.b32.xlu0 %v2328, 64
        %v2705 = vpop.permute.xlu0 %2704
        %2706 = vrot.lane.b32.xlu0 %v2329, 64
        %v2707 = vpop.permute.xlu0 %2706
        %2708 = vrot.lane.b32.xlu0 %v2330, 64
        %v2709 = vpop.permute.xlu0 %2708
        %2710 = vrot.lane.b32.xlu0 %v2331, 64
        %v2711 = vpop.permute.xlu0 %2710
        %2712 = vrot.lane.b32.xlu0 %v2332, 64
        %v2713 = vpop.permute.xlu0 %2712
        %2714 = vrot.lane.b32.xlu0 %v2333, 64
        %v2715 = vpop.permute.xlu0 %2714
        %2716 = vrot.lane.b32.xlu0 %v2334, 64
        %v2717 = vpop.permute.xlu0 %2716
        %2718 = vrot.lane.b32.xlu0 %v2335, 64
        %v2719 = vpop.permute.xlu0 %2718
        %v2722 = vsel %vm399, %v1935, %v2353
        %v2725 = vsel %vm399, %v1936, %v2355
        %v2728 = vsel %vm399, %v1937, %v2357
        %v2731 = vsel %vm399, %v1938, %v2359
        %v2734 = vsel %vm399, %v1939, %v2361
        %v2737 = vsel %vm399, %v1940, %v2363
        %v2740 = vsel %vm399, %v1941, %v2365
        %v2743 = vsel %vm399, %v1942, %v2367
        %v2746 = vsel %vm399, %v1943, %v2369
        %v2749 = vsel %vm399, %v1944, %v2371
        %v2752 = vsel %vm399, %v1945, %v2373
        %v2755 = vsel %vm399, %v1946, %v2375
        %v2758 = vsel %vm399, %v1947, %v2377
        %v2761 = vsel %vm399, %v1948, %v2379
        %v2764 = vsel %vm399, %v1949, %v2381
        %v2767 = vsel %vm399, %v1950, %v2383
        %v2769 = vsel %vm1417, %v2722, %v2401
        %v2771 = vsel %vm1417, %v2725, %v2403
        %v2773 = vsel %vm1417, %v2728, %v2405
        %v2775 = vsel %vm1417, %v2731, %v2407
        %v2777 = vsel %vm1417, %v2734, %v2409
        %v2779 = vsel %vm1417, %v2737, %v2411
        %v2781 = vsel %vm1417, %v2740, %v2413
        %v2783 = vsel %vm1417, %v2743, %v2415
        %v2785 = vsel %vm1417, %v2746, %v2417
        %v2787 = vsel %vm1417, %v2749, %v2419
        %v2789 = vsel %vm1417, %v2752, %v2421
        %v2791 = vsel %vm1417, %v2755, %v2423
        %v2793 = vsel %vm1417, %v2758, %v2425
        %v2795 = vsel %vm1417, %v2761, %v2427
        %v2797 = vsel %vm1417, %v2764, %v2429
        %v2799 = vsel %vm1417, %v2767, %v2431
        %v2801 = vsel %vm1483, %v2769, %v2449
        %v2803 = vsel %vm1483, %v2771, %v2451
        %v2805 = vsel %vm1483, %v2773, %v2453
        %v2807 = vsel %vm1483, %v2775, %v2455
        %v2809 = vsel %vm1483, %v2777, %v2457
        %v2811 = vsel %vm1483, %v2779, %v2459
        %v2813 = vsel %vm1483, %v2781, %v2461
        %v2815 = vsel %vm1483, %v2783, %v2463
        %v2817 = vsel %vm1483, %v2785, %v2465
        %v2819 = vsel %vm1483, %v2787, %v2467
        %v2821 = vsel %vm1483, %v2789, %v2469
        %v2823 = vsel %vm1483, %v2791, %v2471
        %v2825 = vsel %vm1483, %v2793, %v2473
        %v2827 = vsel %vm1483, %v2795, %v2475
        %v2829 = vsel %vm1483, %v2797, %v2477
        %v2831 = vsel %vm1483, %v2799, %v2479
        %v2833 = vsel %vm1549, %v2801, %v2497
        %v2835 = vsel %vm1549, %v2803, %v2499
        %v2837 = vsel %vm1549, %v2805, %v2501
        %v2839 = vsel %vm1549, %v2807, %v2503
        %v2841 = vsel %vm1549, %v2809, %v2505
        %v2843 = vsel %vm1549, %v2811, %v2507
        %v2845 = vsel %vm1549, %v2813, %v2509
        %v2847 = vsel %vm1549, %v2815, %v2511
        %v2849 = vsel %vm1549, %v2817, %v2513
        %v2851 = vsel %vm1549, %v2819, %v2515
        %v2853 = vsel %vm1549, %v2821, %v2517
        %v2855 = vsel %vm1549, %v2823, %v2519
        %v2857 = vsel %vm1549, %v2825, %v2521
        %v2859 = vsel %vm1549, %v2827, %v2523
        %v2861 = vsel %vm1549, %v2829, %v2525
        %v2863 = vsel %vm1549, %v2831, %v2527
        %vm2864 = vcmask 326656
        %v2866 = vsel %vm2864, %v2833, %v2545
        %v2868 = vsel %vm2864, %v2835, %v2547
        %v2870 = vsel %vm2864, %v2837, %v2549
        %v2872 = vsel %vm2864, %v2839, %v2551
        %v2874 = vsel %vm2864, %v2841, %v2553
        %v2876 = vsel %vm2864, %v2843, %v2555
        %v2878 = vsel %vm2864, %v2845, %v2557
        %v2880 = vsel %vm2864, %v2847, %v2559
        %v2882 = vsel %vm2864, %v2849, %v2561
        %v2884 = vsel %vm2864, %v2851, %v2563
        %v2886 = vsel %vm2864, %v2853, %v2565
        %v2888 = vsel %vm2864, %v2855, %v2567
        %v2890 = vsel %vm2864, %v2857, %v2569
        %v2892 = vsel %vm2864, %v2859, %v2571
        %v2894 = vsel %vm2864, %v2861, %v2573
        %v2896 = vsel %vm2864, %v2863, %v2575
        %vm2897 = vcmask 392192
        %v2899 = vsel %vm2897, %v2866, %v2593
        %v2901 = vsel %vm2897, %v2868, %v2595
        %v2903 = vsel %vm2897, %v2870, %v2597
        %v2905 = vsel %vm2897, %v2872, %v2599
        %v2907 = vsel %vm2897, %v2874, %v2601
        %v2909 = vsel %vm2897, %v2876, %v2603
        %v2911 = vsel %vm2897, %v2878, %v2605
        %v2913 = vsel %vm2897, %v2880, %v2607
        %v2915 = vsel %vm2897, %v2882, %v2609
        %v2917 = vsel %vm2897, %v2884, %v2611
        %v2919 = vsel %vm2897, %v2886, %v2613
        %v2921 = vsel %vm2897, %v2888, %v2615
        %v2923 = vsel %vm2897, %v2890, %v2617
        %v2925 = vsel %vm2897, %v2892, %v2619
        %v2927 = vsel %vm2897, %v2894, %v2621
        %v2929 = vsel %vm2897, %v2896, %v2623
        %vm2930 = vcmask 457728
        %v2932 = vsel %vm2930, %v2899, %v2641
        %v2934 = vsel %vm2930, %v2901, %v2643
        %v2936 = vsel %vm2930, %v2903, %v2645
        %v2938 = vsel %vm2930, %v2905, %v2647
        %v2940 = vsel %vm2930, %v2907, %v2649
        %v2942 = vsel %vm2930, %v2909, %v2651
        %v2944 = vsel %vm2930, %v2911, %v2653
        %v2946 = vsel %vm2930, %v2913, %v2655
        %v2948 = vsel %vm2930, %v2915, %v2657
        %v2950 = vsel %vm2930, %v2917, %v2659
        %v2952 = vsel %vm2930, %v2919, %v2661
        %v2954 = vsel %vm2930, %v2921, %v2663
        %v2956 = vsel %vm2930, %v2923, %v2665
        %v2958 = vsel %vm2930, %v2925, %v2667
        %v2960 = vsel %vm2930, %v2927, %v2669
        %v2962 = vsel %vm2930, %v2929, %v2671
        %vm2963 = vcmask 523264
        %v2965 = vsel %vm2963, %v2932, %v2689
        %v2967 = vsel %vm2963, %v2934, %v2691
        %v2969 = vsel %vm2963, %v2936, %v2693
        %v2971 = vsel %vm2963, %v2938, %v2695
        %v2973 = vsel %vm2963, %v2940, %v2697
        %v2975 = vsel %vm2963, %v2942, %v2699
        %v2977 = vsel %vm2963, %v2944, %v2701
        %v2979 = vsel %vm2963, %v2946, %v2703
        %v2981 = vsel %vm2963, %v2948, %v2705
        %v2983 = vsel %vm2963, %v2950, %v2707
        %v2985 = vsel %vm2963, %v2952, %v2709
        %v2987 = vsel %vm2963, %v2954, %v2711
        %v2989 = vsel %vm2963, %v2956, %v2713
        %v2991 = vsel %vm2963, %v2958, %v2715
        %v2993 = vsel %vm2963, %v2960, %v2717
        %v2995 = vsel %vm2963, %v2962, %v2719
        %v2996 = vld [vmem:[%s3] sm:$0xf]
        %v2997 = vld [vmem:[%s3 + $0x4] sm:$0xf]
        %v2998 = vld [vmem:[%s3 + $0x8] sm:$0xf]
        %v2999 = vld [vmem:[%s3 + $0xc] sm:$0xf]
        %v3000 = vld [vmem:[%s3 + $0x10] sm:$0xf]
        %v3001 = vld [vmem:[%s3 + $0x14] sm:$0xf]
        %v3002 = vld [vmem:[%s3 + $0x18] sm:$0xf]
        %v3003 = vld [vmem:[%s3 + $0x1c] sm:$0xf]
        %v3004 = vld [vmem:[%s3 + $0x20] sm:$0xf]
        %v3005 = vld [vmem:[%s4] sm:$0x1]
        %v3007 = vlaneseq
        %v3008 = vshrl.u32 %v3007, 7
        %v3009 = vsub.s32 0, %v3008
        %v3010 = vrot.slane %v3005, %v3009
        %v3021 = vunpack.c.l.b16 %v2996
        %v3022 = vunpack.c.l.b16 %v2997
        %v3023 = vunpack.c.l.b16 %v2998
        %v3024 = vunpack.c.l.b16 %v2999
        %v3025 = vunpack.c.l.b16 %v3000
        %v3026 = vunpack.c.l.b16 %v3001
        %v3027 = vunpack.c.l.b16 %v3002
        %v3028 = vunpack.c.l.b16 %v3003
        %v3029 = vunpack.c.l.b16 %v3004
        %v3030 = vpack.c.b16 %v3022, %v3021
        %v3031 = vpack.c.b16 %v3024, %v3023
        %v3032 = vpack.c.b16 %v3026, %v3025
        %v3033 = vpack.c.b16 %v3028, %v3027
        %v3034 = vpack.c.b16 %v3029, %v3029
        %vm3039 = vcmask 588800
        %v3040 = vsel %vm3039, %v2965, 0
        %v3042 = vsel %vm3039, %v2967, 0
        %v3044 = vsel %vm3039, %v2969, 0
        %v3046 = vsel %vm3039, %v2971, 0
        %v3048 = vsel %vm3039, %v2973, 0
        %v3050 = vsel %vm3039, %v2975, 0
        %v3052 = vsel %vm3039, %v2977, 0
        %v3054 = vsel %vm3039, %v2979, 0
        %v3056 = vsel %vm3039, %v2981, 0
        %v3058 = vsel %vm3039, %v2983, 0
        %v3060 = vsel %vm3039, %v2985, 0
        %v3062 = vsel %vm3039, %v2987, 0
        %v3064 = vsel %vm3039, %v2989, 0
        %v3066 = vsel %vm3039, %v2991, 0
        %v3068 = vsel %vm3039, %v2993, 0
        %v3070 = vsel %vm3039, %v2995, 0
        %vm3072 = vcmask 1043456
        %v3074 = vsel %vm3072, %v3034, 0
        %3076 = vmatprep.subr.bf16.mxu0 0
        %3077 = vmatpush1.bf16.msra.mxu0 %v3030
        %3078 = vmatprep.subr.bf16.mxu0 0
        %3079 = vmatpush1.bf16.msra.mxu0 %v3031
        %3080 = vmatprep.subr.bf16.mxu0 0
        %3081 = vmatpush1.bf16.msra.mxu0 %v3032
        %3082 = vmatprep.subr.bf16.mxu0 0
        %3083 = vmatpush1.bf16.msra.mxu0 %v3033
        %3084 = vmatprep.subr.bf16.mxu0 0
        %3085 = vmatpush1.bf16.msra.mxu0 %v3074
        %3086 = vmatprep.subr.bf16.mxu0 0
        %3087 = vmatpush1.bf16.msra.mxu0 0
        %3088 = vmatprep.subr.bf16.mxu0 0
        %3089 = vmatpush1.bf16.msra.mxu0 0
        %3090 = vmatprep.subr.bf16.mxu0 0
        %3091 = vmatpush1.bf16.msra.mxu0 0
        %3092 = vmatprep.subr.bf16.mxu0 0
        %3093 = vmatpush1.bf16.msra.mxu0 0
        %3094 = vmatprep.subr.bf16.mxu0 0
        %3095 = vmatpush1.bf16.msra.mxu0 0
        %3096 = vmatprep.subr.bf16.mxu0 0
        %3097 = vmatpush1.bf16.msra.mxu0 0
        %3098 = vmatprep.subr.bf16.mxu0 0
        %3099 = vmatpush1.bf16.msra.mxu0 0
        %3100 = vmatprep.subr.bf16.mxu0 0
        %3101 = vmatpush1.bf16.msra.mxu0 0
        %3102 = vmatprep.subr.bf16.mxu0 0
        %3103 = vmatpush1.bf16.msra.mxu0 0
        %3104 = vmatprep.subr.bf16.mxu0 0
        %3105 = vmatpush1.bf16.msra.mxu0 0
        %3106 = vmatprep.subr.bf16.mxu0 0
        %3107 = vmatpush1.bf16.msra.mxu0 0
        %3108 = vmatprep.mubr.bf16.mxu0 0
        %3109 = vmatmul.mubr.bf16.gmra.mrb[0].mxu0 %v3040
        %v3110 = vpop.f32.mrb[0].mxu0
        %v3111 = vadd.f32 %v3010, %v3110
        %v3112 = vpop.f32.mrb[0].mxu0
        %v3113 = vpop.f32.mrb[0].mxu0
        %v3114 = vadd.f32 %v3010, %v3113
        %v3115 = vpop.f32.mrb[0].mxu0
        %3116 = vmatprep.mubr.bf16.mxu0 0
        %3117 = vmatmul.mubr.bf16.gmra.mrb[0].mxu0 %v3042
        %v3118 = vpop.f32.mrb[0].mxu0
        %v3119 = vadd.f32 %v3010, %v3118
        %v3120 = vpop.f32.mrb[0].mxu0
        %v3121 = vpop.f32.mrb[0].mxu0
        %v3122 = vadd.f32 %v3010, %v3121
        %v3123 = vpop.f32.mrb[0].mxu0
        %3124 = vmatprep.mubr.bf16.mxu0 0
        %3125 = vmatmul.mubr.bf16.gmra.mrb[0].mxu0 %v3044
        %v3126 = vpop.f32.mrb[0].mxu0
        %v3127 = vadd.f32 %v3010, %v3126
        %v3128 = vpop.f32.mrb[0].mxu0
        %v3129 = vpop.f32.mrb[0].mxu0
        %v3130 = vadd.f32 %v3010, %v3129
        %v3131 = vpop.f32.mrb[0].mxu0
        %3132 = vmatprep.mubr.bf16.mxu0 0
        %3133 = vmatmul.mubr.bf16.gmra.mrb[0].mxu0 %v3046
        %v3134 = vpop.f32.mrb[0].mxu0
        %v3135 = vadd.f32 %v3010, %v3134
        %v3136 = vpop.f32.mrb[0].mxu0
        %v3137 = vpop.f32.mrb[0].mxu0
        %v3138 = vadd.f32 %v3010, %v3137
        %v3139 = vpop.f32.mrb[0].mxu0
        %3140 = vmatprep.mubr.bf16.mxu0 0
        %3141 = vmatmul.mubr.bf16.gmra.mrb[0].mxu0 %v3048
        %v3142 = vpop.f32.mrb[0].mxu0
        %v3143 = vadd.f32 %v3010, %v3142
        %v3144 = vpop.f32.mrb[0].mxu0
        %v3145 = vpop.f32.mrb[0].mxu0
        %v3146 = vadd.f32 %v3010, %v3145
        %v3147 = vpop.f32.mrb[0].mxu0
        %3148 = vmatprep.mubr.bf16.mxu0 0
        %3149 = vmatmul.mubr.bf16.gmra.mrb[0].mxu0 %v3050
        %v3150 = vpop.f32.mrb[0].mxu0
        %v3151 = vadd.f32 %v3010, %v3150
        %v3152 = vpop.f32.mrb[0].mxu0
        %v3153 = vpop.f32.mrb[0].mxu0
        %v3154 = vadd.f32 %v3010, %v3153
        %v3155 = vpop.f32.mrb[0].mxu0
        %3156 = vmatprep.mubr.bf16.mxu0 0
        %3157 = vmatmul.mubr.bf16.gmra.mrb[0].mxu0 %v3052
        %v3158 = vpop.f32.mrb[0].mxu0
        %v3159 = vadd.f32 %v3010, %v3158
        %v3160 = vpop.f32.mrb[0].mxu0
        %v3161 = vpop.f32.mrb[0].mxu0
        %v3162 = vadd.f32 %v3010, %v3161
        %v3163 = vpop.f32.mrb[0].mxu0
        %3164 = vmatprep.mubr.bf16.mxu0 0
        %3165 = vmatmul.mubr.bf16.gmra.mrb[0].mxu0 %v3054
        %v3166 = vpop.f32.mrb[0].mxu0
        %v3167 = vadd.f32 %v3010, %v3166
        %v3168 = vpop.f32.mrb[0].mxu0
        %v3169 = vpop.f32.mrb[0].mxu0
        %v3170 = vadd.f32 %v3010, %v3169
        %v3171 = vpop.f32.mrb[0].mxu0
        %3172 = vmatprep.mubr.bf16.mxu0 0
        %3173 = vmatmul.mubr.bf16.gmra.mrb[0].mxu0 %v3056
        %v3174 = vpop.f32.mrb[0].mxu0
        %v3175 = vadd.f32 %v3010, %v3174
        %v3176 = vpop.f32.mrb[0].mxu0
        %v3177 = vpop.f32.mrb[0].mxu0
        %v3178 = vadd.f32 %v3010, %v3177
        %v3179 = vpop.f32.mrb[0].mxu0
        %3180 = vmatprep.mubr.bf16.mxu0 0
        %3181 = vmatmul.mubr.bf16.gmra.mrb[0].mxu0 %v3058
        %v3182 = vpop.f32.mrb[0].mxu0
        %v3183 = vadd.f32 %v3010, %v3182
        %v3184 = vpop.f32.mrb[0].mxu0
        %v3185 = vpop.f32.mrb[0].mxu0
        %v3186 = vadd.f32 %v3010, %v3185
        %v3187 = vpop.f32.mrb[0].mxu0
        %3188 = vmatprep.mubr.bf16.mxu0 0
        %3189 = vmatmul.mubr.bf16.gmra.mrb[0].mxu0 %v3060
        %v3190 = vpop.f32.mrb[0].mxu0
        %v3191 = vadd.f32 %v3010, %v3190
        %v3192 = vpop.f32.mrb[0].mxu0
        %v3193 = vpop.f32.mrb[0].mxu0
        %v3194 = vadd.f32 %v3010, %v3193
        %v3195 = vpop.f32.mrb[0].mxu0
        %3196 = vmatprep.mubr.bf16.mxu0 0
        %3197 = vmatmul.mubr.bf16.gmra.mrb[0].mxu0 %v3062
        %v3198 = vpop.f32.mrb[0].mxu0
        %v3199 = vadd.f32 %v3010, %v3198
        %v3200 = vpop.f32.mrb[0].mxu0
        %v3201 = vpop.f32.mrb[0].mxu0
        %v3202 = vadd.f32 %v3010, %v3201
        %v3203 = vpop.f32.mrb[0].mxu0
        %3204 = vmatprep.mubr.bf16.mxu0 0
        %3205 = vmatmul.mubr.bf16.gmra.mrb[0].mxu0 %v3064
        %v3206 = vpop.f32.mrb[0].mxu0
        %v3207 = vadd.f32 %v3010, %v3206
        %v3208 = vpop.f32.mrb[0].mxu0
        %v3209 = vpop.f32.mrb[0].mxu0
        %v3210 = vadd.f32 %v3010, %v3209
        %v3211 = vpop.f32.mrb[0].mxu0
        %3212 = vmatprep.mubr.bf16.mxu0 0
        %3213 = vmatmul.mubr.bf16.gmra.mrb[0].mxu0 %v3066
        %v3214 = vpop.f32.mrb[0].mxu0
        %v3215 = vadd.f32 %v3010, %v3214
        %v3216 = vpop.f32.mrb[0].mxu0
        %v3217 = vpop.f32.mrb[0].mxu0
        %v3218 = vadd.f32 %v3010, %v3217
        %v3219 = vpop.f32.mrb[0].mxu0
        %3220 = vmatprep.mubr.bf16.mxu0 0
        %3221 = vmatmul.mubr.bf16.gmra.mrb[0].mxu0 %v3068
        %v3222 = vpop.f32.mrb[0].mxu0
        %v3223 = vadd.f32 %v3010, %v3222
        %v3224 = vpop.f32.mrb[0].mxu0
        %v3225 = vpop.f32.mrb[0].mxu0
        %v3226 = vadd.f32 %v3010, %v3225
        %v3227 = vpop.f32.mrb[0].mxu0
        %3228 = vmatprep.mubr.bf16.mxu0 0
        %3229 = vmatmul.mubr.bf16.gmra.mrb[0].mxu0 %v3070
        %v3230 = vpop.f32.mrb[0].mxu0
        %v3231 = vadd.f32 %v3010, %v3230
        %v3232 = vpop.f32.mrb[0].mxu0
        %v3233 = vpop.f32.mrb[0].mxu0
        %v3234 = vadd.f32 %v3010, %v3233
        %v3235 = vpop.f32.mrb[0].mxu0
        %3236 = vdwg.mxu0
        %v3237 = vmax.f32 %v3111, 0.0
        %v3238 = vmax.f32 %v3114, 0.0
        %v3239 = vmax.f32 %v3119, 0.0
        %v3240 = vmax.f32 %v3122, 0.0
        %v3241 = vmax.f32 %v3127, 0.0
        %v3242 = vmax.f32 %v3130, 0.0
        %v3243 = vmax.f32 %v3135, 0.0
        %v3244 = vmax.f32 %v3138, 0.0
        %v3245 = vmax.f32 %v3143, 0.0
        %v3246 = vmax.f32 %v3146, 0.0
        %v3247 = vmax.f32 %v3151, 0.0
        %v3248 = vmax.f32 %v3154, 0.0
        %v3249 = vmax.f32 %v3159, 0.0
        %v3250 = vmax.f32 %v3162, 0.0
        %v3251 = vmax.f32 %v3167, 0.0
        %v3252 = vmax.f32 %v3170, 0.0
        %v3253 = vmax.f32 %v3175, 0.0
        %v3254 = vmax.f32 %v3178, 0.0
        %v3255 = vmax.f32 %v3183, 0.0
        %v3256 = vmax.f32 %v3186, 0.0
        %v3257 = vmax.f32 %v3191, 0.0
        %v3258 = vmax.f32 %v3194, 0.0
        %v3259 = vmax.f32 %v3199, 0.0
        %v3260 = vmax.f32 %v3202, 0.0
        %v3261 = vmax.f32 %v3207, 0.0
        %v3262 = vmax.f32 %v3210, 0.0
        %v3263 = vmax.f32 %v3215, 0.0
        %v3264 = vmax.f32 %v3218, 0.0
        %v3265 = vmax.f32 %v3223, 0.0
        %v3266 = vmax.f32 %v3226, 0.0
        %v3267 = vmax.f32 %v3231, 0.0
        %v3268 = vmax.f32 %v3234, 0.0
        %v3269 = vadd.f32 %v3237, %v1807
        %v3270 = vadd.f32 %v3238, %v1808
        %v3271 = vadd.f32 %v3239, %v1809
        %v3272 = vadd.f32 %v3240, %v1810
        %v3273 = vadd.f32 %v3241, %v1811
        %v3274 = vadd.f32 %v3242, %v1812
        %v3275 = vadd.f32 %v3243, %v1813
        %v3276 = vadd.f32 %v3244, %v1814
        %v3277 = vadd.f32 %v3245, %v1815
        %v3278 = vadd.f32 %v3246, %v1816
        %v3279 = vadd.f32 %v3247, %v1817
        %v3280 = vadd.f32 %v3248, %v1818
        %v3281 = vadd.f32 %v3249, %v1819
        %v3282 = vadd.f32 %v3250, %v1820
        %v3283 = vadd.f32 %v3251, %v1821
        %v3284 = vadd.f32 %v3252, %v1822
        %v3285 = vadd.f32 %v3253, %v1823
        %v3286 = vadd.f32 %v3254, %v1824
        %v3287 = vadd.f32 %v3255, %v1825
        %v3288 = vadd.f32 %v3256, %v1826
        %v3289 = vadd.f32 %v3257, %v1827
        %v3290 = vadd.f32 %v3258, %v1828
        %v3291 = vadd.f32 %v3259, %v1829
        %v3292 = vadd.f32 %v3260, %v1830
        %v3293 = vadd.f32 %v3261, %v1831
        %v3294 = vadd.f32 %v3262, %v1832
        %v3295 = vadd.f32 %v3263, %v1833
        %v3296 = vadd.f32 %v3264, %v1834
        %v3297 = vadd.f32 %v3265, %v1835
        %v3298 = vadd.f32 %v3266, %v1836
        %v3299 = vadd.f32 %v3267, %v1837
        %v3300 = vadd.f32 %v3268, %v1838
        %3301 = vst.msk [vmem:[%s452 + $0x8] sm:$0xff] %vm399, %v3269
        %3302 = vst.msk [vmem:[%s452 + $0x10] sm:$0xff] %vm399, %v3270
        %3303 = vst.msk [vmem:[%s452 + $0x28] sm:$0xff] %vm399, %v3271
        %3304 = vst.msk [vmem:[%s452 + $0x30] sm:$0xff] %vm399, %v3272
        %3305 = vst.msk [vmem:[%s452 + $0x48] sm:$0xff] %vm399, %v3273
        %3306 = vst.msk [vmem:[%s452 + $0x50] sm:$0xff] %vm399, %v3274
        %3307 = vst.msk [vmem:[%s452 + $0x68] sm:$0xff] %vm399, %v3275
        %3308 = vst.msk [vmem:[%s452 + $0x70] sm:$0xff] %vm399, %v3276
        %3309 = vst.msk [vmem:[%s452 + $0x88] sm:$0xff] %vm399, %v3277
        %3310 = vst.msk [vmem:[%s452 + $0x90] sm:$0xff] %vm399, %v3278
        %3311 = vst.msk [vmem:[%s452 + $0xa8] sm:$0xff] %vm399, %v3279
        %3312 = vst.msk [vmem:[%s452 + $0xb0] sm:$0xff] %vm399, %v3280
        %3313 = vst.msk [vmem:[%s452 + $0xc8] sm:$0xff] %vm399, %v3281
        %3314 = vst.msk [vmem:[%s452 + $0xd0] sm:$0xff] %vm399, %v3282
        %3315 = vst.msk [vmem:[%s452 + $0xe8] sm:$0xff] %vm399, %v3283
        %3316 = vst.msk [vmem:[%s452 + $0xf0] sm:$0xff] %vm399, %v3284
        %3317 = vst.msk [vmem:[%s452 + $0x108] sm:$0xff] %vm399, %v3285
        %3318 = vst.msk [vmem:[%s452 + $0x110] sm:$0xff] %vm399, %v3286
        %3319 = vst.msk [vmem:[%s452 + $0x128] sm:$0xff] %vm399, %v3287
        %3320 = vst.msk [vmem:[%s452 + $0x130] sm:$0xff] %vm399, %v3288
        %3321 = vst.msk [vmem:[%s452 + $0x148] sm:$0xff] %vm399, %v3289
        %3322 = vst.msk [vmem:[%s452 + $0x150] sm:$0xff] %vm399, %v3290
        %3323 = vst.msk [vmem:[%s452 + $0x168] sm:$0xff] %vm399, %v3291
        %3324 = vst.msk [vmem:[%s452 + $0x170] sm:$0xff] %vm399, %v3292
        %3325 = vst.msk [vmem:[%s452 + $0x188] sm:$0xff] %vm399, %v3293
        %3326 = vst.msk [vmem:[%s452 + $0x190] sm:$0xff] %vm399, %v3294
        %3327 = vst.msk [vmem:[%s452 + $0x1a8] sm:$0xff] %vm399, %v3295
        %3328 = vst.msk [vmem:[%s452 + $0x1b0] sm:$0xff] %vm399, %v3296
        %3329 = vst.msk [vmem:[%s452 + $0x1c8] sm:$0xff] %vm399, %v3297
        %3330 = vst.msk [vmem:[%s452 + $0x1d0] sm:$0xff] %vm399, %v3298
        %3331 = vst.msk [vmem:[%s452 + $0x1e8] sm:$0xff] %vm399, %v3299
        %3332 = vst.msk [vmem:[%s452 + $0x1f0] sm:$0xff] %vm399, %v3300
        %v3333 = vld [vmem:[#allocation3 + $0x7] sm:$0xff]
        %v3334 = vld [vmem:[#allocation3 + $0xf] sm:$0xff]
        %v3335 = vld [vmem:[#allocation3 + $0x27] sm:$0xff]
        %v3336 = vld [vmem:[#allocation3 + $0x2f] sm:$0xff]
        %v3337 = vld [vmem:[#allocation3 + $0x47] sm:$0xff]
        %v3338 = vld [vmem:[#allocation3 + $0x4f] sm:$0xff]
        %v3339 = vld [vmem:[#allocation3 + $0x67] sm:$0xff]
        %v3340 = vld [vmem:[#allocation3 + $0x6f] sm:$0xff]
        %v3341 = vld [vmem:[#allocation3 + $0x87] sm:$0xff]
        %v3342 = vld [vmem:[#allocation3 + $0x8f] sm:$0xff]
        %v3343 = vld [vmem:[#allocation3 + $0xa7] sm:$0xff]
        %v3344 = vld [vmem:[#allocation3 + $0xaf] sm:$0xff]
        %v3345 = vld [vmem:[#allocation3 + $0xc7] sm:$0xff]
        %v3346 = vld [vmem:[#allocation3 + $0xcf] sm:$0xff]
        %v3347 = vld [vmem:[#allocation3 + $0xe7] sm:$0xff]
        %v3348 = vld [vmem:[#allocation3 + $0xef] sm:$0xff]
        %v3349 = vld [vmem:[#allocation3 + $0x107] sm:$0xff]
        %v3350 = vld [vmem:[#allocation3 + $0x10f] sm:$0xff]
        %v3351 = vld [vmem:[#allocation3 + $0x127] sm:$0xff]
        %v3352 = vld [vmem:[#allocation3 + $0x12f] sm:$0xff]
        %v3353 = vld [vmem:[#allocation3 + $0x147] sm:$0xff]
        %v3354 = vld [vmem:[#allocation3 + $0x14f] sm:$0xff]
        %v3355 = vld [vmem:[#allocation3 + $0x167] sm:$0xff]
        %v3356 = vld [vmem:[#allocation3 + $0x16f] sm:$0xff]
        %v3357 = vld [vmem:[#allocation3 + $0x187] sm:$0xff]
        %v3358 = vld [vmem:[#allocation3 + $0x18f] sm:$0xff]
        %v3359 = vld [vmem:[#allocation3 + $0x1a7] sm:$0xff]
        %v3360 = vld [vmem:[#allocation3 + $0x1af] sm:$0xff]
        %v3361 = vld [vmem:[#allocation3 + $0x1c7] sm:$0xff]
        %v3362 = vld [vmem:[#allocation3 + $0x1cf] sm:$0xff]
        %v3363 = vld [vmem:[#allocation3 + $0x1e7] sm:$0xff]
        %v3364 = vld [vmem:[#allocation3 + $0x1ef] sm:$0xff]
        %v3365 = vpack.c.bf16 %v3334, %v3333
        %v3366 = vpack.c.bf16 %v3336, %v3335
        %v3367 = vpack.c.bf16 %v3338, %v3337
        %v3368 = vpack.c.bf16 %v3340, %v3339
        %v3369 = vpack.c.bf16 %v3342, %v3341
        %v3370 = vpack.c.bf16 %v3344, %v3343
        %v3371 = vpack.c.bf16 %v3346, %v3345
        %v3372 = vpack.c.bf16 %v3348, %v3347
        %v3373 = vpack.c.bf16 %v3350, %v3349
        %v3374 = vpack.c.bf16 %v3352, %v3351
        %v3375 = vpack.c.bf16 %v3354, %v3353
        %v3376 = vpack.c.bf16 %v3356, %v3355
        %v3377 = vpack.c.bf16 %v3358, %v3357
        %v3378 = vpack.c.bf16 %v3360, %v3359
        %v3379 = vpack.c.bf16 %v3362, %v3361
        %v3380 = vpack.c.bf16 %v3364, %v3363
        %v3381 = vld [vmem:[#allocation3 + $0x8] sm:$0xff]
        %v3382 = vld [vmem:[#allocation3 + $0x10] sm:$0xff]
        %v3383 = vld [vmem:[#allocation3 + $0x28] sm:$0xff]
        %v3384 = vld [vmem:[#allocation3 + $0x30] sm:$0xff]
        %v3385 = vld [vmem:[#allocation3 + $0x48] sm:$0xff]
        %v3386 = vld [vmem:[#allocation3 + $0x50] sm:$0xff]
        %v3387 = vld [vmem:[#allocation3 + $0x68] sm:$0xff]
        %v3388 = vld [vmem:[#allocation3 + $0x70] sm:$0xff]
        %v3389 = vld [vmem:[#allocation3 + $0x88] sm:$0xff]
        %v3390 = vld [vmem:[#allocation3 + $0x90] sm:$0xff]
        %v3391 = vld [vmem:[#allocation3 + $0xa8] sm:$0xff]
        %v3392 = vld [vmem:[#allocation3 + $0xb0] sm:$0xff]
        %v3393 = vld [vmem:[#allocation3 + $0xc8] sm:$0xff]
        %v3394 = vld [vmem:[#allocation3 + $0xd0] sm:$0xff]
        %v3395 = vld [vmem:[#allocation3 + $0xe8] sm:$0xff]
        %v3396 = vld [vmem:[#allocation3 + $0xf0] sm:$0xff]
        %v3397 = vld [vmem:[#allocation3 + $0x108] sm:$0xff]
        %v3398 = vld [vmem:[#allocation3 + $0x110] sm:$0xff]
        %v3399 = vld [vmem:[#allocation3 + $0x128] sm:$0xff]
        %v3400 = vld [vmem:[#allocation3 + $0x130] sm:$0xff]
        %v3401 = vld [vmem:[#allocation3 + $0x148] sm:$0xff]
        %v3402 = vld [vmem:[#allocation3 + $0x150] sm:$0xff]
        %v3403 = vld [vmem:[#allocation3 + $0x168] sm:$0xff]
        %v3404 = vld [vmem:[#allocation3 + $0x170] sm:$0xff]
        %v3405 = vld [vmem:[#allocation3 + $0x188] sm:$0xff]
        %v3406 = vld [vmem:[#allocation3 + $0x190] sm:$0xff]
        %v3407 = vld [vmem:[#allocation3 + $0x1a8] sm:$0xff]
        %v3408 = vld [vmem:[#allocation3 + $0x1b0] sm:$0xff]
        %v3409 = vld [vmem:[#allocation3 + $0x1c8] sm:$0xff]
        %v3410 = vld [vmem:[#allocation3 + $0x1d0] sm:$0xff]
        %v3411 = vld [vmem:[#allocation3 + $0x1e8] sm:$0xff]
        %v3412 = vld [vmem:[#allocation3 + $0x1f0] sm:$0xff]
        %v3413 = vpack.c.bf16 %v3382, %v3381
        %v3414 = vpack.c.bf16 %v3384, %v3383
        %v3415 = vpack.c.bf16 %v3386, %v3385
        %v3416 = vpack.c.bf16 %v3388, %v3387
        %v3417 = vpack.c.bf16 %v3390, %v3389
        %v3418 = vpack.c.bf16 %v3392, %v3391
        %v3419 = vpack.c.bf16 %v3394, %v3393
        %v3420 = vpack.c.bf16 %v3396, %v3395
        %v3421 = vpack.c.bf16 %v3398, %v3397
        %v3422 = vpack.c.bf16 %v3400, %v3399
        %v3423 = vpack.c.bf16 %v3402, %v3401
        %v3424 = vpack.c.bf16 %v3404, %v3403
        %v3425 = vpack.c.bf16 %v3406, %v3405
        %v3426 = vpack.c.bf16 %v3408, %v3407
        %v3427 = vpack.c.bf16 %v3410, %v3409
        %v3428 = vpack.c.bf16 %v3412, %v3411
        %v3429 = vld [vmem:[#allocation3 + $0x9] sm:$0xff]
        %v3430 = vld [vmem:[#allocation3 + $0x11] sm:$0xff]
        %v3431 = vld [vmem:[#allocation3 + $0x29] sm:$0xff]
        %v3432 = vld [vmem:[#allocation3 + $0x31] sm:$0xff]
        %v3433 = vld [vmem:[#allocation3 + $0x49] sm:$0xff]
        %v3434 = vld [vmem:[#allocation3 + $0x51] sm:$0xff]
        %v3435 = vld [vmem:[#allocation3 + $0x69] sm:$0xff]
        %v3436 = vld [vmem:[#allocation3 + $0x71] sm:$0xff]
        %v3437 = vld [vmem:[#allocation3 + $0x89] sm:$0xff]
        %v3438 = vld [vmem:[#allocation3 + $0x91] sm:$0xff]
        %v3439 = vld [vmem:[#allocation3 + $0xa9] sm:$0xff]
        %v3440 = vld [vmem:[#allocation3 + $0xb1] sm:$0xff]
        %v3441 = vld [vmem:[#allocation3 + $0xc9] sm:$0xff]
        %v3442 = vld [vmem:[#allocation3 + $0xd1] sm:$0xff]
        %v3443 = vld [vmem:[#allocation3 + $0xe9] sm:$0xff]
        %v3444 = vld [vmem:[#allocation3 + $0xf1] sm:$0xff]
        %v3445 = vld [vmem:[#allocation3 + $0x109] sm:$0xff]
        %v3446 = vld [vmem:[#allocation3 + $0x111] sm:$0xff]
        %v3447 = vld [vmem:[#allocation3 + $0x129] sm:$0xff]
        %v3448 = vld [vmem:[#allocation3 + $0x131] sm:$0xff]
        %v3449 = vld [vmem:[#allocation3 + $0x149] sm:$0xff]
        %v3450 = vld [vmem:[#allocation3 + $0x151] sm:$0xff]
        %v3451 = vld [vmem:[#allocation3 + $0x169] sm:$0xff]
        %v3452 = vld [vmem:[#allocation3 + $0x171] sm:$0xff]
        %v3453 = vld [vmem:[#allocation3 + $0x189] sm:$0xff]
        %v3454 = vld [vmem:[#allocation3 + $0x191] sm:$0xff]
        %v3455 = vld [vmem:[#allocation3 + $0x1a9] sm:$0xff]
        %v3456 = vld [vmem:[#allocation3 + $0x1b1] sm:$0xff]
        %v3457 = vld [vmem:[#allocation3 + $0x1c9] sm:$0xff]
        %v3458 = vld [vmem:[#allocation3 + $0x1d1] sm:$0xff]
        %v3459 = vld [vmem:[#allocation3 + $0x1e9] sm:$0xff]
        %v3460 = vld [vmem:[#allocation3 + $0x1f1] sm:$0xff]
        %v3461 = vpack.c.bf16 %v3430, %v3429
        %v3462 = vpack.c.bf16 %v3432, %v3431
        %v3463 = vpack.c.bf16 %v3434, %v3433
        %v3464 = vpack.c.bf16 %v3436, %v3435
        %v3465 = vpack.c.bf16 %v3438, %v3437
        %v3466 = vpack.c.bf16 %v3440, %v3439
        %v3467 = vpack.c.bf16 %v3442, %v3441
        %v3468 = vpack.c.bf16 %v3444, %v3443
        %v3469 = vpack.c.bf16 %v3446, %v3445
        %v3470 = vpack.c.bf16 %v3448, %v3447
        %v3471 = vpack.c.bf16 %v3450, %v3449
        %v3472 = vpack.c.bf16 %v3452, %v3451
        %v3473 = vpack.c.bf16 %v3454, %v3453
        %v3474 = vpack.c.bf16 %v3456, %v3455
        %v3475 = vpack.c.bf16 %v3458, %v3457
        %v3476 = vpack.c.bf16 %v3460, %v3459
        %v3477 = vld [vmem:[%s452 + $0x7] sm:$0xff]
        %v3478 = vld [vmem:[%s452 + $0xf] sm:$0xff]
        %v3479 = vld [vmem:[%s452 + $0x27] sm:$0xff]
        %v3480 = vld [vmem:[%s452 + $0x2f] sm:$0xff]
        %v3481 = vld [vmem:[%s452 + $0x47] sm:$0xff]
        %v3482 = vld [vmem:[%s452 + $0x4f] sm:$0xff]
        %v3483 = vld [vmem:[%s452 + $0x67] sm:$0xff]
        %v3484 = vld [vmem:[%s452 + $0x6f] sm:$0xff]
        %v3485 = vld [vmem:[%s452 + $0x87] sm:$0xff]
        %v3486 = vld [vmem:[%s452 + $0x8f] sm:$0xff]
        %v3487 = vld [vmem:[%s452 + $0xa7] sm:$0xff]
        %v3488 = vld [vmem:[%s452 + $0xaf] sm:$0xff]
        %v3489 = vld [vmem:[%s452 + $0xc7] sm:$0xff]
        %v3490 = vld [vmem:[%s452 + $0xcf] sm:$0xff]
        %v3491 = vld [vmem:[%s452 + $0xe7] sm:$0xff]
        %v3492 = vld [vmem:[%s452 + $0xef] sm:$0xff]
        %v3493 = vld [vmem:[%s452 + $0x107] sm:$0xff]
        %v3494 = vld [vmem:[%s452 + $0x10f] sm:$0xff]
        %v3495 = vld [vmem:[%s452 + $0x127] sm:$0xff]
        %v3496 = vld [vmem:[%s452 + $0x12f] sm:$0xff]
        %v3497 = vld [vmem:[%s452 + $0x147] sm:$0xff]
        %v3498 = vld [vmem:[%s452 + $0x14f] sm:$0xff]
        %v3499 = vld [vmem:[%s452 + $0x167] sm:$0xff]
        %v3500 = vld [vmem:[%s452 + $0x16f] sm:$0xff]
        %v3501 = vld [vmem:[%s452 + $0x187] sm:$0xff]
        %v3502 = vld [vmem:[%s452 + $0x18f] sm:$0xff]
        %v3503 = vld [vmem:[%s452 + $0x1a7] sm:$0xff]
        %v3504 = vld [vmem:[%s452 + $0x1af] sm:$0xff]
        %v3505 = vld [vmem:[%s452 + $0x1c7] sm:$0xff]
        %v3506 = vld [vmem:[%s452 + $0x1cf] sm:$0xff]
        %v3507 = vld [vmem:[%s452 + $0x1e7] sm:$0xff]
        %v3508 = vld [vmem:[%s452 + $0x1ef] sm:$0xff]
        %v3509 = vpack.c.bf16 %v3478, %v3477
        %v3510 = vpack.c.bf16 %v3480, %v3479
        %v3511 = vpack.c.bf16 %v3482, %v3481
        %v3512 = vpack.c.bf16 %v3484, %v3483
        %v3513 = vpack.c.bf16 %v3486, %v3485
        %v3514 = vpack.c.bf16 %v3488, %v3487
        %v3515 = vpack.c.bf16 %v3490, %v3489
        %v3516 = vpack.c.bf16 %v3492, %v3491
        %v3517 = vpack.c.bf16 %v3494, %v3493
        %v3518 = vpack.c.bf16 %v3496, %v3495
        %v3519 = vpack.c.bf16 %v3498, %v3497
        %v3520 = vpack.c.bf16 %v3500, %v3499
        %v3521 = vpack.c.bf16 %v3502, %v3501
        %v3522 = vpack.c.bf16 %v3504, %v3503
        %v3523 = vpack.c.bf16 %v3506, %v3505
        %v3524 = vpack.c.bf16 %v3508, %v3507
        %v3525 = vld [vmem:[%s452 + $0x8] sm:$0xff]
        %v3526 = vld [vmem:[%s452 + $0x10] sm:$0xff]
        %v3527 = vld [vmem:[%s452 + $0x28] sm:$0xff]
        %v3528 = vld [vmem:[%s452 + $0x30] sm:$0xff]
        %v3529 = vld [vmem:[%s452 + $0x48] sm:$0xff]
        %v3530 = vld [vmem:[%s452 + $0x50] sm:$0xff]
        %v3531 = vld [vmem:[%s452 + $0x68] sm:$0xff]
        %v3532 = vld [vmem:[%s452 + $0x70] sm:$0xff]
        %v3533 = vld [vmem:[%s452 + $0x88] sm:$0xff]
        %v3534 = vld [vmem:[%s452 + $0x90] sm:$0xff]
        %v3535 = vld [vmem:[%s452 + $0xa8] sm:$0xff]
        %v3536 = vld [vmem:[%s452 + $0xb0] sm:$0xff]
        %v3537 = vld [vmem:[%s452 + $0xc8] sm:$0xff]
        %v3538 = vld [vmem:[%s452 + $0xd0] sm:$0xff]
        %v3539 = vld [vmem:[%s452 + $0xe8] sm:$0xff]
        %v3540 = vld [vmem:[%s452 + $0xf0] sm:$0xff]
        %v3541 = vld [vmem:[%s452 + $0x108] sm:$0xff]
        %v3542 = vld [vmem:[%s452 + $0x110] sm:$0xff]
        %v3543 = vld [vmem:[%s452 + $0x128] sm:$0xff]
        %v3544 = vld [vmem:[%s452 + $0x130] sm:$0xff]
        %v3545 = vld [vmem:[%s452 + $0x148] sm:$0xff]
        %v3546 = vld [vmem:[%s452 + $0x150] sm:$0xff]
        %v3547 = vld [vmem:[%s452 + $0x168] sm:$0xff]
        %v3548 = vld [vmem:[%s452 + $0x170] sm:$0xff]
        %v3549 = vld [vmem:[%s452 + $0x188] sm:$0xff]
        %v3550 = vld [vmem:[%s452 + $0x190] sm:$0xff]
        %v3551 = vld [vmem:[%s452 + $0x1a8] sm:$0xff]
        %v3552 = vld [vmem:[%s452 + $0x1b0] sm:$0xff]
        %v3553 = vld [vmem:[%s452 + $0x1c8] sm:$0xff]
        %v3554 = vld [vmem:[%s452 + $0x1d0] sm:$0xff]
        %v3555 = vld [vmem:[%s452 + $0x1e8] sm:$0xff]
        %v3556 = vld [vmem:[%s452 + $0x1f0] sm:$0xff]
        %v3557 = vpack.c.bf16 %v3526, %v3525
        %v3558 = vpack.c.bf16 %v3528, %v3527
        %v3559 = vpack.c.bf16 %v3530, %v3529
        %v3560 = vpack.c.bf16 %v3532, %v3531
        %v3561 = vpack.c.bf16 %v3534, %v3533
        %v3562 = vpack.c.bf16 %v3536, %v3535
        %v3563 = vpack.c.bf16 %v3538, %v3537
        %v3564 = vpack.c.bf16 %v3540, %v3539
        %v3565 = vpack.c.bf16 %v3542, %v3541
        %v3566 = vpack.c.bf16 %v3544, %v3543
        %v3567 = vpack.c.bf16 %v3546, %v3545
        %v3568 = vpack.c.bf16 %v3548, %v3547
        %v3569 = vpack.c.bf16 %v3550, %v3549
        %v3570 = vpack.c.bf16 %v3552, %v3551
        %v3571 = vpack.c.bf16 %v3554, %v3553
        %v3572 = vpack.c.bf16 %v3556, %v3555
        %v3573 = vld [vmem:[%s452 + $0x9] sm:$0xff]
        %v3574 = vld [vmem:[%s452 + $0x11] sm:$0xff]
        %v3575 = vld [vmem:[%s452 + $0x29] sm:$0xff]
        %v3576 = vld [vmem:[%s452 + $0x31] sm:$0xff]
        %v3577 = vld [vmem:[%s452 + $0x49] sm:$0xff]
        %v3578 = vld [vmem:[%s452 + $0x51] sm:$0xff]
        %v3579 = vld [vmem:[%s452 + $0x69] sm:$0xff]
        %v3580 = vld [vmem:[%s452 + $0x71] sm:$0xff]
        %v3581 = vld [vmem:[%s452 + $0x89] sm:$0xff]
        %v3582 = vld [vmem:[%s452 + $0x91] sm:$0xff]
        %v3583 = vld [vmem:[%s452 + $0xa9] sm:$0xff]
        %v3584 = vld [vmem:[%s452 + $0xb1] sm:$0xff]
        %v3585 = vld [vmem:[%s452 + $0xc9] sm:$0xff]
        %v3586 = vld [vmem:[%s452 + $0xd1] sm:$0xff]
        %v3587 = vld [vmem:[%s452 + $0xe9] sm:$0xff]
        %v3588 = vld [vmem:[%s452 + $0xf1] sm:$0xff]
        %v3589 = vld [vmem:[%s452 + $0x109] sm:$0xff]
        %v3590 = vld [vmem:[%s452 + $0x111] sm:$0xff]
        %v3591 = vld [vmem:[%s452 + $0x129] sm:$0xff]
        %v3592 = vld [vmem:[%s452 + $0x131] sm:$0xff]
        %v3593 = vld [vmem:[%s452 + $0x149] sm:$0xff]
        %v3594 = vld [vmem:[%s452 + $0x151] sm:$0xff]
        %v3595 = vld [vmem:[%s452 + $0x169] sm:$0xff]
        %v3596 = vld [vmem:[%s452 + $0x171] sm:$0xff]
        %v3597 = vld [vmem:[%s452 + $0x189] sm:$0xff]
        %v3598 = vld [vmem:[%s452 + $0x191] sm:$0xff]
        %v3599 = vld [vmem:[%s452 + $0x1a9] sm:$0xff]
        %v3600 = vld [vmem:[%s452 + $0x1b1] sm:$0xff]
        %v3601 = vld [vmem:[%s452 + $0x1c9] sm:$0xff]
        %v3602 = vld [vmem:[%s452 + $0x1d1] sm:$0xff]
        %v3603 = vld [vmem:[%s452 + $0x1e9] sm:$0xff]
        %v3604 = vld [vmem:[%s452 + $0x1f1] sm:$0xff]
        %v3605 = vpack.c.bf16 %v3574, %v3573
        %v3606 = vpack.c.bf16 %v3576, %v3575
        %v3607 = vpack.c.bf16 %v3578, %v3577
        %v3608 = vpack.c.bf16 %v3580, %v3579
        %v3609 = vpack.c.bf16 %v3582, %v3581
        %v3610 = vpack.c.bf16 %v3584, %v3583
        %v3611 = vpack.c.bf16 %v3586, %v3585
        %v3612 = vpack.c.bf16 %v3588, %v3587
        %v3613 = vpack.c.bf16 %v3590, %v3589
        %v3614 = vpack.c.bf16 %v3592, %v3591
        %v3615 = vpack.c.bf16 %v3594, %v3593
        %v3616 = vpack.c.bf16 %v3596, %v3595
        %v3617 = vpack.c.bf16 %v3598, %v3597
        %v3618 = vpack.c.bf16 %v3600, %v3599
        %v3619 = vpack.c.bf16 %v3602, %v3601
        %v3620 = vpack.c.bf16 %v3604, %v3603
        %s3621 = scalar_lea.vmem [#allocation3], 64
        %v3622 = vld [vmem:[%s3621 + $0x7] sm:$0xff]
        %v3623 = vld [vmem:[%s3621 + $0xf] sm:$0xff]
        %v3624 = vld [vmem:[%s3621 + $0x27] sm:$0xff]
        %v3625 = vld [vmem:[%s3621 + $0x2f] sm:$0xff]
        %v3626 = vld [vmem:[%s3621 + $0x47] sm:$0xff]
        %v3627 = vld [vmem:[%s3621 + $0x4f] sm:$0xff]
        %v3628 = vld [vmem:[%s3621 + $0x67] sm:$0xff]
        %v3629 = vld [vmem:[%s3621 + $0x6f] sm:$0xff]
        %v3630 = vld [vmem:[%s3621 + $0x87] sm:$0xff]
        %v3631 = vld [vmem:[%s3621 + $0x8f] sm:$0xff]
        %v3632 = vld [vmem:[%s3621 + $0xa7] sm:$0xff]
        %v3633 = vld [vmem:[%s3621 + $0xaf] sm:$0xff]
        %v3634 = vld [vmem:[%s3621 + $0xc7] sm:$0xff]
        %v3635 = vld [vmem:[%s3621 + $0xcf] sm:$0xff]
        %v3636 = vld [vmem:[%s3621 + $0xe7] sm:$0xff]
        %v3637 = vld [vmem:[%s3621 + $0xef] sm:$0xff]
        %v3638 = vld [vmem:[%s3621 + $0x107] sm:$0xff]
        %v3639 = vld [vmem:[%s3621 + $0x10f] sm:$0xff]
        %v3640 = vld [vmem:[%s3621 + $0x127] sm:$0xff]
        %v3641 = vld [vmem:[%s3621 + $0x12f] sm:$0xff]
        %v3642 = vld [vmem:[%s3621 + $0x147] sm:$0xff]
        %v3643 = vld [vmem:[%s3621 + $0x14f] sm:$0xff]
        %v3644 = vld [vmem:[%s3621 + $0x167] sm:$0xff]
        %v3645 = vld [vmem:[%s3621 + $0x16f] sm:$0xff]
        %v3646 = vld [vmem:[%s3621 + $0x187] sm:$0xff]
        %v3647 = vld [vmem:[%s3621 + $0x18f] sm:$0xff]
        %v3648 = vld [vmem:[%s3621 + $0x1a7] sm:$0xff]
        %v3649 = vld [vmem:[%s3621 + $0x1af] sm:$0xff]
        %v3650 = vld [vmem:[%s3621 + $0x1c7] sm:$0xff]
        %v3651 = vld [vmem:[%s3621 + $0x1cf] sm:$0xff]
        %v3652 = vld [vmem:[%s3621 + $0x1e7] sm:$0xff]
        %v3653 = vld [vmem:[%s3621 + $0x1ef] sm:$0xff]
        %v3654 = vpack.c.bf16 %v3623, %v3622
        %v3655 = vpack.c.bf16 %v3625, %v3624
        %v3656 = vpack.c.bf16 %v3627, %v3626
        %v3657 = vpack.c.bf16 %v3629, %v3628
        %v3658 = vpack.c.bf16 %v3631, %v3630
        %v3659 = vpack.c.bf16 %v3633, %v3632
        %v3660 = vpack.c.bf16 %v3635, %v3634
        %v3661 = vpack.c.bf16 %v3637, %v3636
        %v3662 = vpack.c.bf16 %v3639, %v3638
        %v3663 = vpack.c.bf16 %v3641, %v3640
        %v3664 = vpack.c.bf16 %v3643, %v3642
        %v3665 = vpack.c.bf16 %v3645, %v3644
        %v3666 = vpack.c.bf16 %v3647, %v3646
        %v3667 = vpack.c.bf16 %v3649, %v3648
        %v3668 = vpack.c.bf16 %v3651, %v3650
        %v3669 = vpack.c.bf16 %v3653, %v3652
        %v3670 = vld [vmem:[%s3621 + $0x8] sm:$0xff]
        %v3671 = vld [vmem:[%s3621 + $0x10] sm:$0xff]
        %v3672 = vld [vmem:[%s3621 + $0x28] sm:$0xff]
        %v3673 = vld [vmem:[%s3621 + $0x30] sm:$0xff]
        %v3674 = vld [vmem:[%s3621 + $0x48] sm:$0xff]
        %v3675 = vld [vmem:[%s3621 + $0x50] sm:$0xff]
        %v3676 = vld [vmem:[%s3621 + $0x68] sm:$0xff]
        %v3677 = vld [vmem:[%s3621 + $0x70] sm:$0xff]
        %v3678 = vld [vmem:[%s3621 + $0x88] sm:$0xff]
        %v3679 = vld [vmem:[%s3621 + $0x90] sm:$0xff]
        %v3680 = vld [vmem:[%s3621 + $0xa8] sm:$0xff]
        %v3681 = vld [vmem:[%s3621 + $0xb0] sm:$0xff]
        %v3682 = vld [vmem:[%s3621 + $0xc8] sm:$0xff]
        %v3683 = vld [vmem:[%s3621 + $0xd0] sm:$0xff]
        %v3684 = vld [vmem:[%s3621 + $0xe8] sm:$0xff]
        %v3685 = vld [vmem:[%s3621 + $0xf0] sm:$0xff]
        %v3686 = vld [vmem:[%s3621 + $0x108] sm:$0xff]
        %v3687 = vld [vmem:[%s3621 + $0x110] sm:$0xff]
        %v3688 = vld [vmem:[%s3621 + $0x128] sm:$0xff]
        %v3689 = vld [vmem:[%s3621 + $0x130] sm:$0xff]
        %v3690 = vld [vmem:[%s3621 + $0x148] sm:$0xff]
        %v3691 = vld [vmem:[%s3621 + $0x150] sm:$0xff]
        %v3692 = vld [vmem:[%s3621 + $0x168] sm:$0xff]
        %v3693 = vld [vmem:[%s3621 + $0x170] sm:$0xff]
        %v3694 = vld [vmem:[%s3621 + $0x188] sm:$0xff]
        %v3695 = vld [vmem:[%s3621 + $0x190] sm:$0xff]
        %v3696 = vld [vmem:[%s3621 + $0x1a8] sm:$0xff]
        %v3697 = vld [vmem:[%s3621 + $0x1b0] sm:$0xff]
        %v3698 = vld [vmem:[%s3621 + $0x1c8] sm:$0xff]
        %v3699 = vld [vmem:[%s3621 + $0x1d0] sm:$0xff]
        %v3700 = vld [vmem:[%s3621 + $0x1e8] sm:$0xff]
        %v3701 = vld [vmem:[%s3621 + $0x1f0] sm:$0xff]
        %v3702 = vpack.c.bf16 %v3671, %v3670
        %v3703 = vpack.c.bf16 %v3673, %v3672
        %v3704 = vpack.c.bf16 %v3675, %v3674
        %v3705 = vpack.c.bf16 %v3677, %v3676
        %v3706 = vpack.c.bf16 %v3679, %v3678
        %v3707 = vpack.c.bf16 %v3681, %v3680
        %v3708 = vpack.c.bf16 %v3683, %v3682
        %v3709 = vpack.c.bf16 %v3685, %v3684
        %v3710 = vpack.c.bf16 %v3687, %v3686
        %v3711 = vpack.c.bf16 %v3689, %v3688
        %v3712 = vpack.c.bf16 %v3691, %v3690
        %v3713 = vpack.c.bf16 %v3693, %v3692
        %v3714 = vpack.c.bf16 %v3695, %v3694
        %v3715 = vpack.c.bf16 %v3697, %v3696
        %v3716 = vpack.c.bf16 %v3699, %v3698
        %v3717 = vpack.c.bf16 %v3701, %v3700
        %v3718 = vld [vmem:[%s3621 + $0x9] sm:$0xff]
        %v3719 = vld [vmem:[%s3621 + $0x11] sm:$0xff]
        %v3720 = vld [vmem:[%s3621 + $0x29] sm:$0xff]
        %v3721 = vld [vmem:[%s3621 + $0x31] sm:$0xff]
        %v3722 = vld [vmem:[%s3621 + $0x49] sm:$0xff]
        %v3723 = vld [vmem:[%s3621 + $0x51] sm:$0xff]
        %v3724 = vld [vmem:[%s3621 + $0x69] sm:$0xff]
        %v3725 = vld [vmem:[%s3621 + $0x71] sm:$0xff]
        %v3726 = vld [vmem:[%s3621 + $0x89] sm:$0xff]
        %v3727 = vld [vmem:[%s3621 + $0x91] sm:$0xff]
        %v3728 = vld [vmem:[%s3621 + $0xa9] sm:$0xff]
        %v3729 = vld [vmem:[%s3621 + $0xb1] sm:$0xff]
        %v3730 = vld [vmem:[%s3621 + $0xc9] sm:$0xff]
        %v3731 = vld [vmem:[%s3621 + $0xd1] sm:$0xff]
        %v3732 = vld [vmem:[%s3621 + $0xe9] sm:$0xff]
        %v3733 = vld [vmem:[%s3621 + $0xf1] sm:$0xff]
        %v3734 = vld [vmem:[%s3621 + $0x109] sm:$0xff]
        %v3735 = vld [vmem:[%s3621 + $0x111] sm:$0xff]
        %v3736 = vld [vmem:[%s3621 + $0x129] sm:$0xff]
        %v3737 = vld [vmem:[%s3621 + $0x131] sm:$0xff]
        %v3738 = vld [vmem:[%s3621 + $0x149] sm:$0xff]
        %v3739 = vld [vmem:[%s3621 + $0x151] sm:$0xff]
        %v3740 = vld [vmem:[%s3621 + $0x169] sm:$0xff]
        %v3741 = vld [vmem:[%s3621 + $0x171] sm:$0xff]
        %v3742 = vld [vmem:[%s3621 + $0x189] sm:$0xff]
        %v3743 = vld [vmem:[%s3621 + $0x191] sm:$0xff]
        %v3744 = vld [vmem:[%s3621 + $0x1a9] sm:$0xff]
        %v3745 = vld [vmem:[%s3621 + $0x1b1] sm:$0xff]
        %v3746 = vld [vmem:[%s3621 + $0x1c9] sm:$0xff]
        %v3747 = vld [vmem:[%s3621 + $0x1d1] sm:$0xff]
        %v3748 = vld [vmem:[%s3621 + $0x1e9] sm:$0xff]
        %v3749 = vld [vmem:[%s3621 + $0x1f1] sm:$0xff]
        %v3750 = vpack.c.bf16 %v3719, %v3718
        %v3751 = vpack.c.bf16 %v3721, %v3720
        %v3752 = vpack.c.bf16 %v3723, %v3722
        %v3753 = vpack.c.bf16 %v3725, %v3724
        %v3754 = vpack.c.bf16 %v3727, %v3726
        %v3755 = vpack.c.bf16 %v3729, %v3728
        %v3756 = vpack.c.bf16 %v3731, %v3730
        %v3757 = vpack.c.bf16 %v3733, %v3732
        %v3758 = vpack.c.bf16 %v3735, %v3734
        %v3759 = vpack.c.bf16 %v3737, %v3736
        %v3760 = vpack.c.bf16 %v3739, %v3738
        %v3761 = vpack.c.bf16 %v3741, %v3740
        %v3762 = vpack.c.bf16 %v3743, %v3742
        %v3763 = vpack.c.bf16 %v3745, %v3744
        %v3764 = vpack.c.bf16 %v3747, %v3746
        %v3765 = vpack.c.bf16 %v3749, %v3748
        %3782 = vrot.lane.b32.xlu0 %v3413, 8
        %v3783 = vpop.permute.xlu0 %3782
        %3784 = vrot.lane.b32.xlu0 %v3414, 8
        %v3785 = vpop.permute.xlu0 %3784
        %3786 = vrot.lane.b32.xlu0 %v3415, 8
        %v3787 = vpop.permute.xlu0 %3786
        %3788 = vrot.lane.b32.xlu0 %v3416, 8
        %v3789 = vpop.permute.xlu0 %3788
        %3790 = vrot.lane.b32.xlu0 %v3417, 8
        %v3791 = vpop.permute.xlu0 %3790
        %3792 = vrot.lane.b32.xlu0 %v3418, 8
        %v3793 = vpop.permute.xlu0 %3792
        %3794 = vrot.lane.b32.xlu0 %v3419, 8
        %v3795 = vpop.permute.xlu0 %3794
        %3796 = vrot.lane.b32.xlu0 %v3420, 8
        %v3797 = vpop.permute.xlu0 %3796
        %3798 = vrot.lane.b32.xlu0 %v3421, 8
        %v3799 = vpop.permute.xlu0 %3798
        %3800 = vrot.lane.b32.xlu0 %v3422, 8
        %v3801 = vpop.permute.xlu0 %3800
        %3802 = vrot.lane.b32.xlu0 %v3423, 8
        %v3803 = vpop.permute.xlu0 %3802
        %3804 = vrot.lane.b32.xlu0 %v3424, 8
        %v3805 = vpop.permute.xlu0 %3804
        %3806 = vrot.lane.b32.xlu0 %v3425, 8
        %v3807 = vpop.permute.xlu0 %3806
        %3808 = vrot.lane.b32.xlu0 %v3426, 8
        %v3809 = vpop.permute.xlu0 %3808
        %3810 = vrot.lane.b32.xlu0 %v3427, 8
        %v3811 = vpop.permute.xlu0 %3810
        %3812 = vrot.lane.b32.xlu0 %v3428, 8
        %v3813 = vpop.permute.xlu0 %3812
        %3830 = vrot.lane.b32.xlu0 %v3461, 16
        %v3831 = vpop.permute.xlu0 %3830
        %3832 = vrot.lane.b32.xlu0 %v3462, 16
        %v3833 = vpop.permute.xlu0 %3832
        %3834 = vrot.lane.b32.xlu0 %v3463, 16
        %v3835 = vpop.permute.xlu0 %3834
        %3836 = vrot.lane.b32.xlu0 %v3464, 16
        %v3837 = vpop.permute.xlu0 %3836
        %3838 = vrot.lane.b32.xlu0 %v3465, 16
        %v3839 = vpop.permute.xlu0 %3838
        %3840 = vrot.lane.b32.xlu0 %v3466, 16
        %v3841 = vpop.permute.xlu0 %3840
        %3842 = vrot.lane.b32.xlu0 %v3467, 16
        %v3843 = vpop.permute.xlu0 %3842
        %3844 = vrot.lane.b32.xlu0 %v3468, 16
        %v3845 = vpop.permute.xlu0 %3844
        %3846 = vrot.lane.b32.xlu0 %v3469, 16
        %v3847 = vpop.permute.xlu0 %3846
        %3848 = vrot.lane.b32.xlu0 %v3470, 16
        %v3849 = vpop.permute.xlu0 %3848
        %3850 = vrot.lane.b32.xlu0 %v3471, 16
        %v3851 = vpop.permute.xlu0 %3850
        %3852 = vrot.lane.b32.xlu0 %v3472, 16
        %v3853 = vpop.permute.xlu0 %3852
        %3854 = vrot.lane.b32.xlu0 %v3473, 16
        %v3855 = vpop.permute.xlu0 %3854
        %3856 = vrot.lane.b32.xlu0 %v3474, 16
        %v3857 = vpop.permute.xlu0 %3856
        %3858 = vrot.lane.b32.xlu0 %v3475, 16
        %v3859 = vpop.permute.xlu0 %3858
        %3860 = vrot.lane.b32.xlu0 %v3476, 16
        %v3861 = vpop.permute.xlu0 %3860
        %3878 = vrot.lane.b32.xlu0 %v3509, 24
        %v3879 = vpop.permute.xlu0 %3878
        %3880 = vrot.lane.b32.xlu0 %v3510, 24
        %v3881 = vpop.permute.xlu0 %3880
        %3882 = vrot.lane.b32.xlu0 %v3511, 24
        %v3883 = vpop.permute.xlu0 %3882
        %3884 = vrot.lane.b32.xlu0 %v3512, 24
        %v3885 = vpop.permute.xlu0 %3884
        %3886 = vrot.lane.b32.xlu0 %v3513, 24
        %v3887 = vpop.permute.xlu0 %3886
        %3888 = vrot.lane.b32.xlu0 %v3514, 24
        %v3889 = vpop.permute.xlu0 %3888
        %3890 = vrot.lane.b32.xlu0 %v3515, 24
        %v3891 = vpop.permute.xlu0 %3890
        %3892 = vrot.lane.b32.xlu0 %v3516, 24
        %v3893 = vpop.permute.xlu0 %3892
        %3894 = vrot.lane.b32.xlu0 %v3517, 24
        %v3895 = vpop.permute.xlu0 %3894
        %3896 = vrot.lane.b32.xlu0 %v3518, 24
        %v3897 = vpop.permute.xlu0 %3896
        %3898 = vrot.lane.b32.xlu0 %v3519, 24
        %v3899 = vpop.permute.xlu0 %3898
        %3900 = vrot.lane.b32.xlu0 %v3520, 24
        %v3901 = vpop.permute.xlu0 %3900
        %3902 = vrot.lane.b32.xlu0 %v3521, 24
        %v3903 = vpop.permute.xlu0 %3902
        %3904 = vrot.lane.b32.xlu0 %v3522, 24
        %v3905 = vpop.permute.xlu0 %3904
        %3906 = vrot.lane.b32.xlu0 %v3523, 24
        %v3907 = vpop.permute.xlu0 %3906
        %3908 = vrot.lane.b32.xlu0 %v3524, 24
        %v3909 = vpop.permute.xlu0 %3908
        %3926 = vrot.lane.b32.xlu0 %v3557, 32
        %v3927 = vpop.permute.xlu0 %3926
        %3928 = vrot.lane.b32.xlu0 %v3558, 32
        %v3929 = vpop.permute.xlu0 %3928
        %3930 = vrot.lane.b32.xlu0 %v3559, 32
        %v3931 = vpop.permute.xlu0 %3930
        %3932 = vrot.lane.b32.xlu0 %v3560, 32
        %v3933 = vpop.permute.xlu0 %3932
        %3934 = vrot.lane.b32.xlu0 %v3561, 32
        %v3935 = vpop.permute.xlu0 %3934
        %3936 = vrot.lane.b32.xlu0 %v3562, 32
        %v3937 = vpop.permute.xlu0 %3936
        %3938 = vrot.lane.b32.xlu0 %v3563, 32
        %v3939 = vpop.permute.xlu0 %3938
        %3940 = vrot.lane.b32.xlu0 %v3564, 32
        %v3941 = vpop.permute.xlu0 %3940
        %3942 = vrot.lane.b32.xlu0 %v3565, 32
        %v3943 = vpop.permute.xlu0 %3942
        %3944 = vrot.lane.b32.xlu0 %v3566, 32
        %v3945 = vpop.permute.xlu0 %3944
        %3946 = vrot.lane.b32.xlu0 %v3567, 32
        %v3947 = vpop.permute.xlu0 %3946
        %3948 = vrot.lane.b32.xlu0 %v3568, 32
        %v3949 = vpop.permute.xlu0 %3948
        %3950 = vrot.lane.b32.xlu0 %v3569, 32
        %v3951 = vpop.permute.xlu0 %3950
        %3952 = vrot.lane.b32.xlu0 %v3570, 32
        %v3953 = vpop.permute.xlu0 %3952
        %3954 = vrot.lane.b32.xlu0 %v3571, 32
        %v3955 = vpop.permute.xlu0 %3954
        %3956 = vrot.lane.b32.xlu0 %v3572, 32
        %v3957 = vpop.permute.xlu0 %3956
        %3974 = vrot.lane.b32.xlu0 %v3605, 40
        %v3975 = vpop.permute.xlu0 %3974
        %3976 = vrot.lane.b32.xlu0 %v3606, 40
        %v3977 = vpop.permute.xlu0 %3976
        %3978 = vrot.lane.b32.xlu0 %v3607, 40
        %v3979 = vpop.permute.xlu0 %3978
        %3980 = vrot.lane.b32.xlu0 %v3608, 40
        %v3981 = vpop.permute.xlu0 %3980
        %3982 = vrot.lane.b32.xlu0 %v3609, 40
        %v3983 = vpop.permute.xlu0 %3982
        %3984 = vrot.lane.b32.xlu0 %v3610, 40
        %v3985 = vpop.permute.xlu0 %3984
        %3986 = vrot.lane.b32.xlu0 %v3611, 40
        %v3987 = vpop.permute.xlu0 %3986
        %3988 = vrot.lane.b32.xlu0 %v3612, 40
        %v3989 = vpop.permute.xlu0 %3988
        %3990 = vrot.lane.b32.xlu0 %v3613, 40
        %v3991 = vpop.permute.xlu0 %3990
        %3992 = vrot.lane.b32.xlu0 %v3614, 40
        %v3993 = vpop.permute.xlu0 %3992
        %3994 = vrot.lane.b32.xlu0 %v3615, 40
        %v3995 = vpop.permute.xlu0 %3994
        %3996 = vrot.lane.b32.xlu0 %v3616, 40
        %v3997 = vpop.permute.xlu0 %3996
        %3998 = vrot.lane.b32.xlu0 %v3617, 40
        %v3999 = vpop.permute.xlu0 %3998
        %4000 = vrot.lane.b32.xlu0 %v3618, 40
        %v4001 = vpop.permute.xlu0 %4000
        %4002 = vrot.lane.b32.xlu0 %v3619, 40
        %v4003 = vpop.permute.xlu0 %4002
        %4004 = vrot.lane.b32.xlu0 %v3620, 40
        %v4005 = vpop.permute.xlu0 %4004
        %4022 = vrot.lane.b32.xlu0 %v3654, 48
        %v4023 = vpop.permute.xlu0 %4022
        %4024 = vrot.lane.b32.xlu0 %v3655, 48
        %v4025 = vpop.permute.xlu0 %4024
        %4026 = vrot.lane.b32.xlu0 %v3656, 48
        %v4027 = vpop.permute.xlu0 %4026
        %4028 = vrot.lane.b32.xlu0 %v3657, 48
        %v4029 = vpop.permute.xlu0 %4028
        %4030 = vrot.lane.b32.xlu0 %v3658, 48
        %v4031 = vpop.permute.xlu0 %4030
        %4032 = vrot.lane.b32.xlu0 %v3659, 48
        %v4033 = vpop.permute.xlu0 %4032
        %4034 = vrot.lane.b32.xlu0 %v3660, 48
        %v4035 = vpop.permute.xlu0 %4034
        %4036 = vrot.lane.b32.xlu0 %v3661, 48
        %v4037 = vpop.permute.xlu0 %4036
        %4038 = vrot.lane.b32.xlu0 %v3662, 48
        %v4039 = vpop.permute.xlu0 %4038
        %4040 = vrot.lane.b32.xlu0 %v3663, 48
        %v4041 = vpop.permute.xlu0 %4040
        %4042 = vrot.lane.b32.xlu0 %v3664, 48
        %v4043 = vpop.permute.xlu0 %4042
        %4044 = vrot.lane.b32.xlu0 %v3665, 48
        %v4045 = vpop.permute.xlu0 %4044
        %4046 = vrot.lane.b32.xlu0 %v3666, 48
        %v4047 = vpop.permute.xlu0 %4046
        %4048 = vrot.lane.b32.xlu0 %v3667, 48
        %v4049 = vpop.permute.xlu0 %4048
        %4050 = vrot.lane.b32.xlu0 %v3668, 48
        %v4051 = vpop.permute.xlu0 %4050
        %4052 = vrot.lane.b32.xlu0 %v3669, 48
        %v4053 = vpop.permute.xlu0 %4052
        %4070 = vrot.lane.b32.xlu0 %v3702, 56
        %v4071 = vpop.permute.xlu0 %4070
        %4072 = vrot.lane.b32.xlu0 %v3703, 56
        %v4073 = vpop.permute.xlu0 %4072
        %4074 = vrot.lane.b32.xlu0 %v3704, 56
        %v4075 = vpop.permute.xlu0 %4074
        %4076 = vrot.lane.b32.xlu0 %v3705, 56
        %v4077 = vpop.permute.xlu0 %4076
        %4078 = vrot.lane.b32.xlu0 %v3706, 56
        %v4079 = vpop.permute.xlu0 %4078
        %4080 = vrot.lane.b32.xlu0 %v3707, 56
        %v4081 = vpop.permute.xlu0 %4080
        %4082 = vrot.lane.b32.xlu0 %v3708, 56
        %v4083 = vpop.permute.xlu0 %4082
        %4084 = vrot.lane.b32.xlu0 %v3709, 56
        %v4085 = vpop.permute.xlu0 %4084
        %4086 = vrot.lane.b32.xlu0 %v3710, 56
        %v4087 = vpop.permute.xlu0 %4086
        %4088 = vrot.lane.b32.xlu0 %v3711, 56
        %v4089 = vpop.permute.xlu0 %4088
        %4090 = vrot.lane.b32.xlu0 %v3712, 56
        %v4091 = vpop.permute.xlu0 %4090
        %4092 = vrot.lane.b32.xlu0 %v3713, 56
        %v4093 = vpop.permute.xlu0 %4092
        %4094 = vrot.lane.b32.xlu0 %v3714, 56
        %v4095 = vpop.permute.xlu0 %4094
        %4096 = vrot.lane.b32.xlu0 %v3715, 56
        %v4097 = vpop.permute.xlu0 %4096
        %4098 = vrot.lane.b32.xlu0 %v3716, 56
        %v4099 = vpop.permute.xlu0 %4098
        %4100 = vrot.lane.b32.xlu0 %v3717, 56
        %v4101 = vpop.permute.xlu0 %4100
        %4118 = vrot.lane.b32.xlu0 %v3750, 64
        %v4119 = vpop.permute.xlu0 %4118
        %4120 = vrot.lane.b32.xlu0 %v3751, 64
        %v4121 = vpop.permute.xlu0 %4120
        %4122 = vrot.lane.b32.xlu0 %v3752, 64
        %v4123 = vpop.permute.xlu0 %4122
        %4124 = vrot.lane.b32.xlu0 %v3753, 64
        %v4125 = vpop.permute.xlu0 %4124
        %4126 = vrot.lane.b32.xlu0 %v3754, 64
        %v4127 = vpop.permute.xlu0 %4126
        %4128 = vrot.lane.b32.xlu0 %v3755, 64
        %v4129 = vpop.permute.xlu0 %4128
        %4130 = vrot.lane.b32.xlu0 %v3756, 64
        %v4131 = vpop.permute.xlu0 %4130
        %4132 = vrot.lane.b32.xlu0 %v3757, 64
        %v4133 = vpop.permute.xlu0 %4132
        %4134 = vrot.lane.b32.xlu0 %v3758, 64
        %v4135 = vpop.permute.xlu0 %4134
        %4136 = vrot.lane.b32.xlu0 %v3759, 64
        %v4137 = vpop.permute.xlu0 %4136
        %4138 = vrot.lane.b32.xlu0 %v3760, 64
        %v4139 = vpop.permute.xlu0 %4138
        %4140 = vrot.lane.b32.xlu0 %v3761, 64
        %v4141 = vpop.permute.xlu0 %4140
        %4142 = vrot.lane.b32.xlu0 %v3762, 64
        %v4143 = vpop.permute.xlu0 %4142
        %4144 = vrot.lane.b32.xlu0 %v3763, 64
        %v4145 = vpop.permute.xlu0 %4144
        %4146 = vrot.lane.b32.xlu0 %v3764, 64
        %v4147 = vpop.permute.xlu0 %4146
        %4148 = vrot.lane.b32.xlu0 %v3765, 64
        %v4149 = vpop.permute.xlu0 %4148
        %v4152 = vsel %vm399, %v3365, %v3783
        %v4155 = vsel %vm399, %v3366, %v3785
        %v4158 = vsel %vm399, %v3367, %v3787
        %v4161 = vsel %vm399, %v3368, %v3789
        %v4164 = vsel %vm399, %v3369, %v3791
        %v4167 = vsel %vm399, %v3370, %v3793
        %v4170 = vsel %vm399, %v3371, %v3795
        %v4173 = vsel %vm399, %v3372, %v3797
        %v4176 = vsel %vm399, %v3373, %v3799
        %v4179 = vsel %vm399, %v3374, %v3801
        %v4182 = vsel %vm399, %v3375, %v3803
        %v4185 = vsel %vm399, %v3376, %v3805
        %v4188 = vsel %vm399, %v3377, %v3807
        %v4191 = vsel %vm399, %v3378, %v3809
        %v4194 = vsel %vm399, %v3379, %v3811
        %v4197 = vsel %vm399, %v3380, %v3813
        %v4199 = vsel %vm1417, %v4152, %v3831
        %v4201 = vsel %vm1417, %v4155, %v3833
        %v4203 = vsel %vm1417, %v4158, %v3835
        %v4205 = vsel %vm1417, %v4161, %v3837
        %v4207 = vsel %vm1417, %v4164, %v3839
        %v4209 = vsel %vm1417, %v4167, %v3841
        %v4211 = vsel %vm1417, %v4170, %v3843
        %v4213 = vsel %vm1417, %v4173, %v3845
        %v4215 = vsel %vm1417, %v4176, %v3847
        %v4217 = vsel %vm1417, %v4179, %v3849
        %v4219 = vsel %vm1417, %v4182, %v3851
        %v4221 = vsel %vm1417, %v4185, %v3853
        %v4223 = vsel %vm1417, %v4188, %v3855
        %v4225 = vsel %vm1417, %v4191, %v3857
        %v4227 = vsel %vm1417, %v4194, %v3859
        %v4229 = vsel %vm1417, %v4197, %v3861
        %v4231 = vsel %vm1483, %v4199, %v3879
        %v4233 = vsel %vm1483, %v4201, %v3881
        %v4235 = vsel %vm1483, %v4203, %v3883
        %v4237 = vsel %vm1483, %v4205, %v3885
        %v4239 = vsel %vm1483, %v4207, %v3887
        %v4241 = vsel %vm1483, %v4209, %v3889
        %v4243 = vsel %vm1483, %v4211, %v3891
        %v4245 = vsel %vm1483, %v4213, %v3893
        %v4247 = vsel %vm1483, %v4215, %v3895
        %v4249 = vsel %vm1483, %v4217, %v3897
        %v4251 = vsel %vm1483, %v4219, %v3899
        %v4253 = vsel %vm1483, %v4221, %v3901
        %v4255 = vsel %vm1483, %v4223, %v3903
        %v4257 = vsel %vm1483, %v4225, %v3905
        %v4259 = vsel %vm1483, %v4227, %v3907
        %v4261 = vsel %vm1483, %v4229, %v3909
        %v4263 = vsel %vm1549, %v4231, %v3927
        %v4265 = vsel %vm1549, %v4233, %v3929
        %v4267 = vsel %vm1549, %v4235, %v3931
        %v4269 = vsel %vm1549, %v4237, %v3933
        %v4271 = vsel %vm1549, %v4239, %v3935
        %v4273 = vsel %vm1549, %v4241, %v3937
        %v4275 = vsel %vm1549, %v4243, %v3939
        %v4277 = vsel %vm1549, %v4245, %v3941
        %v4279 = vsel %vm1549, %v4247, %v3943
        %v4281 = vsel %vm1549, %v4249, %v3945
        %v4283 = vsel %vm1549, %v4251, %v3947
        %v4285 = vsel %vm1549, %v4253, %v3949
        %v4287 = vsel %vm1549, %v4255, %v3951
        %v4289 = vsel %vm1549, %v4257, %v3953
        %v4291 = vsel %vm1549, %v4259, %v3955
        %v4293 = vsel %vm1549, %v4261, %v3957
        %v4295 = vsel %vm2864, %v4263, %v3975
        %v4297 = vsel %vm2864, %v4265, %v3977
        %v4299 = vsel %vm2864, %v4267, %v3979
        %v4301 = vsel %vm2864, %v4269, %v3981
        %v4303 = vsel %vm2864, %v4271, %v3983
        %v4305 = vsel %vm2864, %v4273, %v3985
        %v4307 = vsel %vm2864, %v4275, %v3987
        %v4309 = vsel %vm2864, %v4277, %v3989
        %v4311 = vsel %vm2864, %v4279, %v3991
        %v4313 = vsel %vm2864, %v4281, %v3993
        %v4315 = vsel %vm2864, %v4283, %v3995
        %v4317 = vsel %vm2864, %v4285, %v3997
        %v4319 = vsel %vm2864, %v4287, %v3999
        %v4321 = vsel %vm2864, %v4289, %v4001
        %v4323 = vsel %vm2864, %v4291, %v4003
        %v4325 = vsel %vm2864, %v4293, %v4005
        %v4327 = vsel %vm2897, %v4295, %v4023
        %v4329 = vsel %vm2897, %v4297, %v4025
        %v4331 = vsel %vm2897, %v4299, %v4027
        %v4333 = vsel %vm2897, %v4301, %v4029
        %v4335 = vsel %vm2897, %v4303, %v4031
        %v4337 = vsel %vm2897, %v4305, %v4033
        %v4339 = vsel %vm2897, %v4307, %v4035
        %v4341 = vsel %vm2897, %v4309, %v4037
        %v4343 = vsel %vm2897, %v4311, %v4039
        %v4345 = vsel %vm2897, %v4313, %v4041
        %v4347 = vsel %vm2897, %v4315, %v4043
        %v4349 = vsel %vm2897, %v4317, %v4045
        %v4351 = vsel %vm2897, %v4319, %v4047
        %v4353 = vsel %vm2897, %v4321, %v4049
        %v4355 = vsel %vm2897, %v4323, %v4051
        %v4357 = vsel %vm2897, %v4325, %v4053
        %v4359 = vsel %vm2930, %v4327, %v4071
        %v4361 = vsel %vm2930, %v4329, %v4073
        %v4363 = vsel %vm2930, %v4331, %v4075
        %v4365 = vsel %vm2930, %v4333, %v4077
        %v4367 = vsel %vm2930, %v4335, %v4079
        %v4369 = vsel %vm2930, %v4337, %v4081
        %v4371 = vsel %vm2930, %v4339, %v4083
        %v4373 = vsel %vm2930, %v4341, %v4085
        %v4375 = vsel %vm2930, %v4343, %v4087
        %v4377 = vsel %vm2930, %v4345, %v4089
        %v4379 = vsel %vm2930, %v4347, %v4091
        %v4381 = vsel %vm2930, %v4349, %v4093
        %v4383 = vsel %vm2930, %v4351, %v4095
        %v4385 = vsel %vm2930, %v4353, %v4097
        %v4387 = vsel %vm2930, %v4355, %v4099
        %v4389 = vsel %vm2930, %v4357, %v4101
        %v4391 = vsel %vm2963, %v4359, %v4119
        %v4393 = vsel %vm2963, %v4361, %v4121
        %v4395 = vsel %vm2963, %v4363, %v4123
        %v4397 = vsel %vm2963, %v4365, %v4125
        %v4399 = vsel %vm2963, %v4367, %v4127
        %v4401 = vsel %vm2963, %v4369, %v4129
        %v4403 = vsel %vm2963, %v4371, %v4131
        %v4405 = vsel %vm2963, %v4373, %v4133
        %v4407 = vsel %vm2963, %v4375, %v4135
        %v4409 = vsel %vm2963, %v4377, %v4137
        %v4411 = vsel %vm2963, %v4379, %v4139
        %v4413 = vsel %vm2963, %v4381, %v4141
        %v4415 = vsel %vm2963, %v4383, %v4143
        %v4417 = vsel %vm2963, %v4385, %v4145
        %v4419 = vsel %vm2963, %v4387, %v4147
        %v4421 = vsel %vm2963, %v4389, %v4149
        %v4422 = vld [vmem:[%s5] sm:$0xf]
        %v4423 = vld [vmem:[%s5 + $0x4] sm:$0xf]
        %v4424 = vld [vmem:[%s5 + $0x8] sm:$0xf]
        %v4425 = vld [vmem:[%s5 + $0xc] sm:$0xf]
        %v4426 = vld [vmem:[%s5 + $0x10] sm:$0xf]
        %v4427 = vld [vmem:[%s5 + $0x14] sm:$0xf]
        %v4428 = vld [vmem:[%s5 + $0x18] sm:$0xf]
        %v4429 = vld [vmem:[%s5 + $0x1c] sm:$0xf]
        %v4430 = vld [vmem:[%s5 + $0x20] sm:$0xf]
        %v4431 = vld [vmem:[%s6] sm:$0xf]
        %v4432 = vld [vmem:[%s6 + $0x4] sm:$0xf]
        %v4433 = vld [vmem:[%s6 + $0x8] sm:$0xf]
        %v4434 = vld [vmem:[%s6 + $0xc] sm:$0xf]
        %v4435 = vld [vmem:[%s6 + $0x10] sm:$0xf]
        %v4436 = vld [vmem:[%s6 + $0x14] sm:$0xf]
        %v4437 = vld [vmem:[%s6 + $0x18] sm:$0xf]
        %v4438 = vld [vmem:[%s6 + $0x1c] sm:$0xf]
        %v4439 = vld [vmem:[%s6 + $0x20] sm:$0xf]
        %v4449 = vunpack.c.l.b16 %v4431
        %v4450 = vunpack.c.l.b16 %v4432
        %v4451 = vunpack.c.l.b16 %v4433
        %v4452 = vunpack.c.l.b16 %v4434
        %v4453 = vunpack.c.l.b16 %v4435
        %v4454 = vunpack.c.l.b16 %v4436
        %v4455 = vunpack.c.l.b16 %v4437
        %v4456 = vunpack.c.l.b16 %v4438
        %v4457 = vunpack.c.l.b16 %v4439
        %v4458 = vpack.c.b16 %v4450, %v4449
        %v4459 = vpack.c.b16 %v4452, %v4451
        %v4460 = vpack.c.b16 %v4454, %v4453
        %v4461 = vpack.c.b16 %v4456, %v4455
        %v4462 = vpack.c.b16 %v4457, %v4457
        %v4468 = vsel %vm3072, %v4462, 0
        %4470 = vmatprep.subr.bf16.mxu0 0
        %4471 = vmatpush1.bf16.msra.mxu0 %v4458
        %4472 = vmatprep.subr.bf16.mxu0 0
        %4473 = vmatpush1.bf16.msra.mxu0 %v4459
        %4474 = vmatprep.subr.bf16.mxu0 0
        %4475 = vmatpush1.bf16.msra.mxu0 %v4460
        %4476 = vmatprep.subr.bf16.mxu0 0
        %4477 = vmatpush1.bf16.msra.mxu0 %v4461
        %4478 = vmatprep.subr.bf16.mxu0 0
        %4479 = vmatpush1.bf16.msra.mxu0 %v4468
        %4480 = vmatprep.subr.bf16.mxu0 0
        %4481 = vmatpush1.bf16.msra.mxu0 0
        %4482 = vmatprep.subr.bf16.mxu0 0
        %4483 = vmatpush1.bf16.msra.mxu0 0
        %4484 = vmatprep.subr.bf16.mxu0 0
        %4485 = vmatpush1.bf16.msra.mxu0 0
        %4486 = vmatprep.subr.bf16.mxu0 0
        %4487 = vmatpush1.bf16.msra.mxu0 0
        %4488 = vmatprep.subr.bf16.mxu0 0
        %4489 = vmatpush1.bf16.msra.mxu0 0
        %4490 = vmatprep.subr.bf16.mxu0 0
        %4491 = vmatpush1.bf16.msra.mxu0 0
        %4492 = vmatprep.subr.bf16.mxu0 0
        %4493 = vmatpush1.bf16.msra.mxu0 0
        %4494 = vmatprep.subr.bf16.mxu0 0
        %4495 = vmatpush1.bf16.msra.mxu0 0
        %4496 = vmatprep.subr.bf16.mxu0 0
        %4497 = vmatpush1.bf16.msra.mxu0 0
        %4498 = vmatprep.subr.bf16.mxu0 0
        %4499 = vmatpush1.bf16.msra.mxu0 0
        %4500 = vmatprep.subr.bf16.mxu0 0
        %4501 = vmatpush1.bf16.msra.mxu0 0
        %4502 = vmatprep.mubr.bf16.mxu0 0
        %4503 = vmatmul.mubr.bf16.gmra.mrb[0].mxu0 %v3040
        %v4504 = vpop.f32.mrb[0].mxu0
        %v4505 = vadd.f32 0.0, %v4504
        %v4506 = vpop.f32.mrb[0].mxu0
        %v4507 = vpop.f32.mrb[0].mxu0
        %v4508 = vadd.f32 0.0, %v4507
        %v4509 = vpop.f32.mrb[0].mxu0
        %4510 = vmatprep.mubr.bf16.mxu0 0
        %4511 = vmatmul.mubr.bf16.gmra.mrb[0].mxu0 %v3042
        %v4512 = vpop.f32.mrb[0].mxu0
        %v4513 = vadd.f32 0.0, %v4512
        %v4514 = vpop.f32.mrb[0].mxu0
        %v4515 = vpop.f32.mrb[0].mxu0
        %v4516 = vadd.f32 0.0, %v4515
        %v4517 = vpop.f32.mrb[0].mxu0
        %4518 = vmatprep.mubr.bf16.mxu0 0
        %4519 = vmatmul.mubr.bf16.gmra.mrb[0].mxu0 %v3044
        %v4520 = vpop.f32.mrb[0].mxu0
        %v4521 = vadd.f32 0.0, %v4520
        %v4522 = vpop.f32.mrb[0].mxu0
        %v4523 = vpop.f32.mrb[0].mxu0
        %v4524 = vadd.f32 0.0, %v4523
        %v4525 = vpop.f32.mrb[0].mxu0
        %4526 = vmatprep.mubr.bf16.mxu0 0
        %4527 = vmatmul.mubr.bf16.gmra.mrb[0].mxu0 %v3046
        %v4528 = vpop.f32.mrb[0].mxu0
        %v4529 = vadd.f32 0.0, %v4528
        %v4530 = vpop.f32.mrb[0].mxu0
        %v4531 = vpop.f32.mrb[0].mxu0
        %v4532 = vadd.f32 0.0, %v4531
        %v4533 = vpop.f32.mrb[0].mxu0
        %4534 = vmatprep.mubr.bf16.mxu0 0
        %4535 = vmatmul.mubr.bf16.gmra.mrb[0].mxu0 %v3048
        %v4536 = vpop.f32.mrb[0].mxu0
        %v4537 = vadd.f32 0.0, %v4536
        %v4538 = vpop.f32.mrb[0].mxu0
        %v4539 = vpop.f32.mrb[0].mxu0
        %v4540 = vadd.f32 0.0, %v4539
        %v4541 = vpop.f32.mrb[0].mxu0
        %4542 = vmatprep.mubr.bf16.mxu0 0
        %4543 = vmatmul.mubr.bf16.gmra.mrb[0].mxu0 %v3050
        %v4544 = vpop.f32.mrb[0].mxu0
        %v4545 = vadd.f32 0.0, %v4544
        %v4546 = vpop.f32.mrb[0].mxu0
        %v4547 = vpop.f32.mrb[0].mxu0
        %v4548 = vadd.f32 0.0, %v4547
        %v4549 = vpop.f32.mrb[0].mxu0
        %4550 = vmatprep.mubr.bf16.mxu0 0
        %4551 = vmatmul.mubr.bf16.gmra.mrb[0].mxu0 %v3052
        %v4552 = vpop.f32.mrb[0].mxu0
        %v4553 = vadd.f32 0.0, %v4552
        %v4554 = vpop.f32.mrb[0].mxu0
        %v4555 = vpop.f32.mrb[0].mxu0
        %v4556 = vadd.f32 0.0, %v4555
        %v4557 = vpop.f32.mrb[0].mxu0
        %4558 = vmatprep.mubr.bf16.mxu0 0
        %4559 = vmatmul.mubr.bf16.gmra.mrb[0].mxu0 %v3054
        %v4560 = vpop.f32.mrb[0].mxu0
        %v4561 = vadd.f32 0.0, %v4560
        %v4562 = vpop.f32.mrb[0].mxu0
        %v4563 = vpop.f32.mrb[0].mxu0
        %v4564 = vadd.f32 0.0, %v4563
        %v4565 = vpop.f32.mrb[0].mxu0
        %4566 = vmatprep.mubr.bf16.mxu0 0
        %4567 = vmatmul.mubr.bf16.gmra.mrb[0].mxu0 %v3056
        %v4568 = vpop.f32.mrb[0].mxu0
        %v4569 = vadd.f32 0.0, %v4568
        %v4570 = vpop.f32.mrb[0].mxu0
        %v4571 = vpop.f32.mrb[0].mxu0
        %v4572 = vadd.f32 0.0, %v4571
        %v4573 = vpop.f32.mrb[0].mxu0
        %4574 = vmatprep.mubr.bf16.mxu0 0
        %4575 = vmatmul.mubr.bf16.gmra.mrb[0].mxu0 %v3058
        %v4576 = vpop.f32.mrb[0].mxu0
        %v4577 = vadd.f32 0.0, %v4576
        %v4578 = vpop.f32.mrb[0].mxu0
        %v4579 = vpop.f32.mrb[0].mxu0
        %v4580 = vadd.f32 0.0, %v4579
        %v4581 = vpop.f32.mrb[0].mxu0
        %4582 = vmatprep.mubr.bf16.mxu0 0
        %4583 = vmatmul.mubr.bf16.gmra.mrb[0].mxu0 %v3060
        %v4584 = vpop.f32.mrb[0].mxu0
        %v4585 = vadd.f32 0.0, %v4584
        %v4586 = vpop.f32.mrb[0].mxu0
        %v4587 = vpop.f32.mrb[0].mxu0
        %v4588 = vadd.f32 0.0, %v4587
        %v4589 = vpop.f32.mrb[0].mxu0
        %4590 = vmatprep.mubr.bf16.mxu0 0
        %4591 = vmatmul.mubr.bf16.gmra.mrb[0].mxu0 %v3062
        %v4592 = vpop.f32.mrb[0].mxu0
        %v4593 = vadd.f32 0.0, %v4592
        %v4594 = vpop.f32.mrb[0].mxu0
        %v4595 = vpop.f32.mrb[0].mxu0
        %v4596 = vadd.f32 0.0, %v4595
        %v4597 = vpop.f32.mrb[0].mxu0
        %4598 = vmatprep.mubr.bf16.mxu0 0
        %4599 = vmatmul.mubr.bf16.gmra.mrb[0].mxu0 %v3064
        %v4600 = vpop.f32.mrb[0].mxu0
        %v4601 = vadd.f32 0.0, %v4600
        %v4602 = vpop.f32.mrb[0].mxu0
        %v4603 = vpop.f32.mrb[0].mxu0
        %v4604 = vadd.f32 0.0, %v4603
        %v4605 = vpop.f32.mrb[0].mxu0
        %4606 = vmatprep.mubr.bf16.mxu0 0
        %4607 = vmatmul.mubr.bf16.gmra.mrb[0].mxu0 %v3066
        %v4608 = vpop.f32.mrb[0].mxu0
        %v4609 = vadd.f32 0.0, %v4608
        %v4610 = vpop.f32.mrb[0].mxu0
        %v4611 = vpop.f32.mrb[0].mxu0
        %v4612 = vadd.f32 0.0, %v4611
        %v4613 = vpop.f32.mrb[0].mxu0
        %4614 = vmatprep.mubr.bf16.mxu0 0
        %4615 = vmatmul.mubr.bf16.gmra.mrb[0].mxu0 %v3068
        %v4616 = vpop.f32.mrb[0].mxu0
        %v4617 = vadd.f32 0.0, %v4616
        %v4618 = vpop.f32.mrb[0].mxu0
        %v4619 = vpop.f32.mrb[0].mxu0
        %v4620 = vadd.f32 0.0, %v4619
        %v4621 = vpop.f32.mrb[0].mxu0
        %4622 = vmatprep.mubr.bf16.mxu0 0
        %4623 = vmatmul.mubr.bf16.gmra.mrb[0].mxu0 %v3070
        %v4624 = vpop.f32.mrb[0].mxu0
        %v4625 = vadd.f32 0.0, %v4624
        %v4626 = vpop.f32.mrb[0].mxu0
        %v4627 = vpop.f32.mrb[0].mxu0
        %v4628 = vadd.f32 0.0, %v4627
        %v4629 = vpop.f32.mrb[0].mxu0
        %4630 = vdwg.mxu0
        %v4640 = vunpack.c.l.b16 %v4422
        %v4641 = vunpack.c.l.b16 %v4423
        %v4642 = vunpack.c.l.b16 %v4424
        %v4643 = vunpack.c.l.b16 %v4425
        %v4644 = vunpack.c.l.b16 %v4426
        %v4645 = vunpack.c.l.b16 %v4427
        %v4646 = vunpack.c.l.b16 %v4428
        %v4647 = vunpack.c.l.b16 %v4429
        %v4648 = vunpack.c.l.b16 %v4430
        %v4649 = vpack.c.b16 %v4641, %v4640
        %v4650 = vpack.c.b16 %v4643, %v4642
        %v4651 = vpack.c.b16 %v4645, %v4644
        %v4652 = vpack.c.b16 %v4647, %v4646
        %v4653 = vpack.c.b16 %v4648, %v4648
        %v4658 = vsel %vm3039, %v4391, 0
        %v4660 = vsel %vm3039, %v4393, 0
        %v4662 = vsel %vm3039, %v4395, 0
        %v4664 = vsel %vm3039, %v4397, 0
        %v4666 = vsel %vm3039, %v4399, 0
        %v4668 = vsel %vm3039, %v4401, 0
        %v4670 = vsel %vm3039, %v4403, 0
        %v4672 = vsel %vm3039, %v4405, 0
        %v4674 = vsel %vm3039, %v4407, 0
        %v4676 = vsel %vm3039, %v4409, 0
        %v4678 = vsel %vm3039, %v4411, 0
        %v4680 = vsel %vm3039, %v4413, 0
        %v4682 = vsel %vm3039, %v4415, 0
        %v4684 = vsel %vm3039, %v4417, 0
        %v4686 = vsel %vm3039, %v4419, 0
        %v4688 = vsel %vm3039, %v4421, 0
        %v4691 = vsel %vm3072, %v4653, 0
        %4693 = vmatprep.subr.bf16.mxu0 0
        %4694 = vmatpush1.bf16.msra.mxu0 %v4649
        %4695 = vmatprep.subr.bf16.mxu0 0
        %4696 = vmatpush1.bf16.msra.mxu0 %v4650
        %4697 = vmatprep.subr.bf16.mxu0 0
        %4698 = vmatpush1.bf16.msra.mxu0 %v4651
        %4699 = vmatprep.subr.bf16.mxu0 0
        %4700 = vmatpush1.bf16.msra.mxu0 %v4652
        %4701 = vmatprep.subr.bf16.mxu0 0
        %4702 = vmatpush1.bf16.msra.mxu0 %v4691
        %4703 = vmatprep.subr.bf16.mxu0 0
        %4704 = vmatpush1.bf16.msra.mxu0 0
        %4705 = vmatprep.subr.bf16.mxu0 0
        %4706 = vmatpush1.bf16.msra.mxu0 0
        %4707 = vmatprep.subr.bf16.mxu0 0
        %4708 = vmatpush1.bf16.msra.mxu0 0
        %4709 = vmatprep.subr.bf16.mxu0 0
        %4710 = vmatpush1.bf16.msra.mxu0 0
        %4711 = vmatprep.subr.bf16.mxu0 0
        %4712 = vmatpush1.bf16.msra.mxu0 0
        %4713 = vmatprep.subr.bf16.mxu0 0
        %4714 = vmatpush1.bf16.msra.mxu0 0
        %4715 = vmatprep.subr.bf16.mxu0 0
        %4716 = vmatpush1.bf16.msra.mxu0 0
        %4717 = vmatprep.subr.bf16.mxu0 0
        %4718 = vmatpush1.bf16.msra.mxu0 0
        %4719 = vmatprep.subr.bf16.mxu0 0
        %4720 = vmatpush1.bf16.msra.mxu0 0
        %4721 = vmatprep.subr.bf16.mxu0 0
        %4722 = vmatpush1.bf16.msra.mxu0 0
        %4723 = vmatprep.subr.bf16.mxu0 0
        %4724 = vmatpush1.bf16.msra.mxu0 0
        %4725 = vmatprep.mubr.bf16.mxu0 0
        %4726 = vmatmul.mubr.bf16.gmra.mrb[0].mxu0 %v4658
        %v4727 = vpop.f32.mrb[0].mxu0
        %v4728 = vadd.f32 %v4505, %v4727
        %v4729 = vpop.f32.mrb[0].mxu0
        %v4730 = vpop.f32.mrb[0].mxu0
        %v4731 = vadd.f32 %v4508, %v4730
        %v4732 = vpop.f32.mrb[0].mxu0
        %4733 = vmatprep.mubr.bf16.mxu0 0
        %4734 = vmatmul.mubr.bf16.gmra.mrb[0].mxu0 %v4660
        %v4735 = vpop.f32.mrb[0].mxu0
        %v4736 = vadd.f32 %v4513, %v4735
        %v4737 = vpop.f32.mrb[0].mxu0
        %v4738 = vpop.f32.mrb[0].mxu0
        %v4739 = vadd.f32 %v4516, %v4738
        %v4740 = vpop.f32.mrb[0].mxu0
        %4741 = vmatprep.mubr.bf16.mxu0 0
        %4742 = vmatmul.mubr.bf16.gmra.mrb[0].mxu0 %v4662
        %v4743 = vpop.f32.mrb[0].mxu0
        %v4744 = vadd.f32 %v4521, %v4743
        %v4745 = vpop.f32.mrb[0].mxu0
        %v4746 = vpop.f32.mrb[0].mxu0
        %v4747 = vadd.f32 %v4524, %v4746
        %v4748 = vpop.f32.mrb[0].mxu0
        %4749 = vmatprep.mubr.bf16.mxu0 0
        %4750 = vmatmul.mubr.bf16.gmra.mrb[0].mxu0 %v4664
        %v4751 = vpop.f32.mrb[0].mxu0
        %v4752 = vadd.f32 %v4529, %v4751
        %v4753 = vpop.f32.mrb[0].mxu0
        %v4754 = vpop.f32.mrb[0].mxu0
        %v4755 = vadd.f32 %v4532, %v4754
        %v4756 = vpop.f32.mrb[0].mxu0
        %4757 = vmatprep.mubr.bf16.mxu0 0
        %4758 = vmatmul.mubr.bf16.gmra.mrb[0].mxu0 %v4666
        %v4759 = vpop.f32.mrb[0].mxu0
        %v4760 = vadd.f32 %v4537, %v4759
        %v4761 = vpop.f32.mrb[0].mxu0
        %v4762 = vpop.f32.mrb[0].mxu0
        %v4763 = vadd.f32 %v4540, %v4762
        %v4764 = vpop.f32.mrb[0].mxu0
        %4765 = vmatprep.mubr.bf16.mxu0 0
        %4766 = vmatmul.mubr.bf16.gmra.mrb[0].mxu0 %v4668
        %v4767 = vpop.f32.mrb[0].mxu0
        %v4768 = vadd.f32 %v4545, %v4767
        %v4769 = vpop.f32.mrb[0].mxu0
        %v4770 = vpop.f32.mrb[0].mxu0
        %v4771 = vadd.f32 %v4548, %v4770
        %v4772 = vpop.f32.mrb[0].mxu0
        %4773 = vmatprep.mubr.bf16.mxu0 0
        %4774 = vmatmul.mubr.bf16.gmra.mrb[0].mxu0 %v4670
        %v4775 = vpop.f32.mrb[0].mxu0
        %v4776 = vadd.f32 %v4553, %v4775
        %v4777 = vpop.f32.mrb[0].mxu0
        %v4778 = vpop.f32.mrb[0].mxu0
        %v4779 = vadd.f32 %v4556, %v4778
        %v4780 = vpop.f32.mrb[0].mxu0
        %4781 = vmatprep.mubr.bf16.mxu0 0
        %4782 = vmatmul.mubr.bf16.gmra.mrb[0].mxu0 %v4672
        %v4783 = vpop.f32.mrb[0].mxu0
        %v4784 = vadd.f32 %v4561, %v4783
        %v4785 = vpop.f32.mrb[0].mxu0
        %v4786 = vpop.f32.mrb[0].mxu0
        %v4787 = vadd.f32 %v4564, %v4786
        %v4788 = vpop.f32.mrb[0].mxu0
        %4789 = vmatprep.mubr.bf16.mxu0 0
        %4790 = vmatmul.mubr.bf16.gmra.mrb[0].mxu0 %v4674
        %v4791 = vpop.f32.mrb[0].mxu0
        %v4792 = vadd.f32 %v4569, %v4791
        %v4793 = vpop.f32.mrb[0].mxu0
        %v4794 = vpop.f32.mrb[0].mxu0
        %v4795 = vadd.f32 %v4572, %v4794
        %v4796 = vpop.f32.mrb[0].mxu0
        %4797 = vmatprep.mubr.bf16.mxu0 0
        %4798 = vmatmul.mubr.bf16.gmra.mrb[0].mxu0 %v4676
        %v4799 = vpop.f32.mrb[0].mxu0
        %v4800 = vadd.f32 %v4577, %v4799
        %v4801 = vpop.f32.mrb[0].mxu0
        %v4802 = vpop.f32.mrb[0].mxu0
        %v4803 = vadd.f32 %v4580, %v4802
        %v4804 = vpop.f32.mrb[0].mxu0
        %4805 = vmatprep.mubr.bf16.mxu0 0
        %4806 = vmatmul.mubr.bf16.gmra.mrb[0].mxu0 %v4678
        %v4807 = vpop.f32.mrb[0].mxu0
        %v4808 = vadd.f32 %v4585, %v4807
        %v4809 = vpop.f32.mrb[0].mxu0
        %v4810 = vpop.f32.mrb[0].mxu0
        %v4811 = vadd.f32 %v4588, %v4810
        %v4812 = vpop.f32.mrb[0].mxu0
        %4813 = vmatprep.mubr.bf16.mxu0 0
        %4814 = vmatmul.mubr.bf16.gmra.mrb[0].mxu0 %v4680
        %v4815 = vpop.f32.mrb[0].mxu0
        %v4816 = vadd.f32 %v4593, %v4815
        %v4817 = vpop.f32.mrb[0].mxu0
        %v4818 = vpop.f32.mrb[0].mxu0
        %v4819 = vadd.f32 %v4596, %v4818
        %v4820 = vpop.f32.mrb[0].mxu0
        %4821 = vmatprep.mubr.bf16.mxu0 0
        %4822 = vmatmul.mubr.bf16.gmra.mrb[0].mxu0 %v4682
        %v4823 = vpop.f32.mrb[0].mxu0
        %v4824 = vadd.f32 %v4601, %v4823
        %v4825 = vpop.f32.mrb[0].mxu0
        %v4826 = vpop.f32.mrb[0].mxu0
        %v4827 = vadd.f32 %v4604, %v4826
        %v4828 = vpop.f32.mrb[0].mxu0
        %4829 = vmatprep.mubr.bf16.mxu0 0
        %4830 = vmatmul.mubr.bf16.gmra.mrb[0].mxu0 %v4684
        %v4831 = vpop.f32.mrb[0].mxu0
        %v4832 = vadd.f32 %v4609, %v4831
        %v4833 = vpop.f32.mrb[0].mxu0
        %v4834 = vpop.f32.mrb[0].mxu0
        %v4835 = vadd.f32 %v4612, %v4834
        %v4836 = vpop.f32.mrb[0].mxu0
        %4837 = vmatprep.mubr.bf16.mxu0 0
        %4838 = vmatmul.mubr.bf16.gmra.mrb[0].mxu0 %v4686
        %v4839 = vpop.f32.mrb[0].mxu0
        %v4840 = vadd.f32 %v4617, %v4839
        %v4841 = vpop.f32.mrb[0].mxu0
        %v4842 = vpop.f32.mrb[0].mxu0
        %v4843 = vadd.f32 %v4620, %v4842
        %v4844 = vpop.f32.mrb[0].mxu0
        %4845 = vmatprep.mubr.bf16.mxu0 0
        %4846 = vmatmul.mubr.bf16.gmra.mrb[0].mxu0 %v4688
        %v4847 = vpop.f32.mrb[0].mxu0
        %v4848 = vadd.f32 %v4625, %v4847
        %v4849 = vpop.f32.mrb[0].mxu0
        %v4850 = vpop.f32.mrb[0].mxu0
        %v4851 = vadd.f32 %v4628, %v4850
        %v4852 = vpop.f32.mrb[0].mxu0
        %4853 = vdwg.mxu0
        %v4854 = vld [vmem:[%s7] sm:$0x1]
        %v4856 = vlaneseq
        %v4857 = vshrl.u32 %v4856, 7
        %v4858 = vsub.s32 0, %v4857
        %v4859 = vrot.slane %v4854, %v4858
        %v4861 = vadd.f32 %v4728, %v4859
        %v4862 = vadd.f32 %v4731, %v4859
        %v4863 = vadd.f32 %v4736, %v4859
        %v4864 = vadd.f32 %v4739, %v4859
        %v4865 = vadd.f32 %v4744, %v4859
        %v4866 = vadd.f32 %v4747, %v4859
        %v4867 = vadd.f32 %v4752, %v4859
        %v4868 = vadd.f32 %v4755, %v4859
        %v4869 = vadd.f32 %v4760, %v4859
        %v4870 = vadd.f32 %v4763, %v4859
        %v4871 = vadd.f32 %v4768, %v4859
        %v4872 = vadd.f32 %v4771, %v4859
        %v4873 = vadd.f32 %v4776, %v4859
        %v4874 = vadd.f32 %v4779, %v4859
        %v4875 = vadd.f32 %v4784, %v4859
        %v4876 = vadd.f32 %v4787, %v4859
        %v4877 = vadd.f32 %v4792, %v4859
        %v4878 = vadd.f32 %v4795, %v4859
        %v4879 = vadd.f32 %v4800, %v4859
        %v4880 = vadd.f32 %v4803, %v4859
        %v4881 = vadd.f32 %v4808, %v4859
        %v4882 = vadd.f32 %v4811, %v4859
        %v4883 = vadd.f32 %v4816, %v4859
        %v4884 = vadd.f32 %v4819, %v4859
        %v4885 = vadd.f32 %v4824, %v4859
        %v4886 = vadd.f32 %v4827, %v4859
        %v4887 = vadd.f32 %v4832, %v4859
        %v4888 = vadd.f32 %v4835, %v4859
        %v4889 = vadd.f32 %v4840, %v4859
        %v4890 = vadd.f32 %v4843, %v4859
        %v4891 = vadd.f32 %v4848, %v4859
        %v4892 = vadd.f32 %v4851, %v4859
        %v4893 = vmax.f32 %v4861, 0.0
        %v4894 = vmax.f32 %v4862, 0.0
        %v4895 = vmax.f32 %v4863, 0.0
        %v4896 = vmax.f32 %v4864, 0.0
        %v4897 = vmax.f32 %v4865, 0.0
        %v4898 = vmax.f32 %v4866, 0.0
        %v4899 = vmax.f32 %v4867, 0.0
        %v4900 = vmax.f32 %v4868, 0.0
        %v4901 = vmax.f32 %v4869, 0.0
        %v4902 = vmax.f32 %v4870, 0.0
        %v4903 = vmax.f32 %v4871, 0.0
        %v4904 = vmax.f32 %v4872, 0.0
        %v4905 = vmax.f32 %v4873, 0.0
        %v4906 = vmax.f32 %v4874, 0.0
        %v4907 = vmax.f32 %v4875, 0.0
        %v4908 = vmax.f32 %v4876, 0.0
        %v4909 = vmax.f32 %v4877, 0.0
        %v4910 = vmax.f32 %v4878, 0.0
        %v4911 = vmax.f32 %v4879, 0.0
        %v4912 = vmax.f32 %v4880, 0.0
        %v4913 = vmax.f32 %v4881, 0.0
        %v4914 = vmax.f32 %v4882, 0.0
        %v4915 = vmax.f32 %v4883, 0.0
        %v4916 = vmax.f32 %v4884, 0.0
        %v4917 = vmax.f32 %v4885, 0.0
        %v4918 = vmax.f32 %v4886, 0.0
        %v4919 = vmax.f32 %v4887, 0.0
        %v4920 = vmax.f32 %v4888, 0.0
        %v4921 = vmax.f32 %v4889, 0.0
        %v4922 = vmax.f32 %v4890, 0.0
        %v4923 = vmax.f32 %v4891, 0.0
        %v4924 = vmax.f32 %v4892, 0.0
        %v4925 = vld [vmem:[%s8] sm:$0xff]
        %v4926 = vld [vmem:[%s8 + $0x8] sm:$0xff]
        %v4927 = vld [vmem:[%s8 + $0x10] sm:$0xff]
        %v4928 = vld [vmem:[%s8 + $0x18] sm:$0xff]
        %v4929 = vld [vmem:[%s8 + $0x20] sm:$0xff]
        %v4930 = vld [vmem:[%s8 + $0x28] sm:$0xff]
        %v4931 = vld [vmem:[%s8 + $0x30] sm:$0xff]
        %v4932 = vld [vmem:[%s8 + $0x38] sm:$0xff]
        %v4933 = vld [vmem:[%s8 + $0x40] sm:$0xff]
        %v4934 = vld [vmem:[%s8 + $0x48] sm:$0xff]
        %v4935 = vld [vmem:[%s8 + $0x50] sm:$0xff]
        %v4936 = vld [vmem:[%s8 + $0x58] sm:$0xff]
        %v4937 = vld [vmem:[%s8 + $0x60] sm:$0xff]
        %v4938 = vld [vmem:[%s8 + $0x68] sm:$0xff]
        %v4939 = vld [vmem:[%s8 + $0x70] sm:$0xff]
        %v4940 = vld [vmem:[%s8 + $0x78] sm:$0xff]
        %v4941 = vld [vmem:[%s8 + $0x80] sm:$0xff]
        %v4942 = vld [vmem:[%s8 + $0x88] sm:$0xff]
        %v4943 = vld [vmem:[%s8 + $0x90] sm:$0xff]
        %v4944 = vld [vmem:[%s8 + $0x98] sm:$0xff]
        %v4945 = vld [vmem:[%s8 + $0xa0] sm:$0xff]
        %v4946 = vld [vmem:[%s8 + $0xa8] sm:$0xff]
        %v4947 = vld [vmem:[%s8 + $0xb0] sm:$0xff]
        %v4948 = vld [vmem:[%s8 + $0xb8] sm:$0xff]
        %v4949 = vld [vmem:[%s8 + $0xc0] sm:$0xff]
        %v4950 = vld [vmem:[%s8 + $0xc8] sm:$0xff]
        %v4951 = vld [vmem:[%s8 + $0xd0] sm:$0xff]
        %v4952 = vld [vmem:[%s8 + $0xd8] sm:$0xff]
        %v4953 = vld [vmem:[%s8 + $0xe0] sm:$0xff]
        %v4954 = vld [vmem:[%s8 + $0xe8] sm:$0xff]
        %v4955 = vld [vmem:[%s8 + $0xf0] sm:$0xff]
        %v4956 = vld [vmem:[%s8 + $0xf8] sm:$0xff]
        %4958 = vset.pattern.permute.xlu0 0
        %4959 = vperm.xlu0 %4958, %v4893
        %v4960 = vpop.permute.xlu0 %4959
        %4963 = vset.pattern.permute.xlu0 0
        %4964 = vperm.xlu0 %4963, %v4894
        %v4965 = vpop.permute.xlu0 %4964
        %4968 = vset.pattern.permute.xlu0 0
        %4969 = vperm.xlu0 %4968, %v4895
        %v4970 = vpop.permute.xlu0 %4969
        %4973 = vset.pattern.permute.xlu0 0
        %4974 = vperm.xlu0 %4973, %v4896
        %v4975 = vpop.permute.xlu0 %4974
        %4978 = vset.pattern.permute.xlu0 0
        %4979 = vperm.xlu0 %4978, %v4897
        %v4980 = vpop.permute.xlu0 %4979
        %4983 = vset.pattern.permute.xlu0 0
        %4984 = vperm.xlu0 %4983, %v4898
        %v4985 = vpop.permute.xlu0 %4984
        %4988 = vset.pattern.permute.xlu0 0
        %4989 = vperm.xlu0 %4988, %v4899
        %v4990 = vpop.permute.xlu0 %4989
        %4993 = vset.pattern.permute.xlu0 0
        %4994 = vperm.xlu0 %4993, %v4900
        %v4995 = vpop.permute.xlu0 %4994
        %4998 = vset.pattern.permute.xlu0 0
        %4999 = vperm.xlu0 %4998, %v4901
        %v5000 = vpop.permute.xlu0 %4999
        %5003 = vset.pattern.permute.xlu0 0
        %5004 = vperm.xlu0 %5003, %v4902
        %v5005 = vpop.permute.xlu0 %5004
        %5008 = vset.pattern.permute.xlu0 0
        %5009 = vperm.xlu0 %5008, %v4903
        %v5010 = vpop.permute.xlu0 %5009
        %5013 = vset.pattern.permute.xlu0 0
        %5014 = vperm.xlu0 %5013, %v4904
        %v5015 = vpop.permute.xlu0 %5014
        %5018 = vset.pattern.permute.xlu0 0
        %5019 = vperm.xlu0 %5018, %v4905
        %v5020 = vpop.permute.xlu0 %5019
        %5023 = vset.pattern.permute.xlu0 0
        %5024 = vperm.xlu0 %5023, %v4906
        %v5025 = vpop.permute.xlu0 %5024
        %5028 = vset.pattern.permute.xlu0 0
        %5029 = vperm.xlu0 %5028, %v4907
        %v5030 = vpop.permute.xlu0 %5029
        %5033 = vset.pattern.permute.xlu0 0
        %5034 = vperm.xlu0 %5033, %v4908
        %v5035 = vpop.permute.xlu0 %5034
        %5038 = vset.pattern.permute.xlu0 0
        %5039 = vperm.xlu0 %5038, %v4909
        %v5040 = vpop.permute.xlu0 %5039
        %5043 = vset.pattern.permute.xlu0 0
        %5044 = vperm.xlu0 %5043, %v4910
        %v5045 = vpop.permute.xlu0 %5044
        %5048 = vset.pattern.permute.xlu0 0
        %5049 = vperm.xlu0 %5048, %v4911
        %v5050 = vpop.permute.xlu0 %5049
        %5053 = vset.pattern.permute.xlu0 0
        %5054 = vperm.xlu0 %5053, %v4912
        %v5055 = vpop.permute.xlu0 %5054
        %5058 = vset.pattern.permute.xlu0 0
        %5059 = vperm.xlu0 %5058, %v4913
        %v5060 = vpop.permute.xlu0 %5059
        %5063 = vset.pattern.permute.xlu0 0
        %5064 = vperm.xlu0 %5063, %v4914
        %v5065 = vpop.permute.xlu0 %5064
        %5068 = vset.pattern.permute.xlu0 0
        %5069 = vperm.xlu0 %5068, %v4915
        %v5070 = vpop.permute.xlu0 %5069
        %5073 = vset.pattern.permute.xlu0 0
        %5074 = vperm.xlu0 %5073, %v4916
        %v5075 = vpop.permute.xlu0 %5074
        %5078 = vset.pattern.permute.xlu0 0
        %5079 = vperm.xlu0 %5078, %v4917
        %v5080 = vpop.permute.xlu0 %5079
        %5083 = vset.pattern.permute.xlu0 0
        %5084 = vperm.xlu0 %5083, %v4918
        %v5085 = vpop.permute.xlu0 %5084
        %5088 = vset.pattern.permute.xlu0 0
        %5089 = vperm.xlu0 %5088, %v4919
        %v5090 = vpop.permute.xlu0 %5089
        %5093 = vset.pattern.permute.xlu0 0
        %5094 = vperm.xlu0 %5093, %v4920
        %v5095 = vpop.permute.xlu0 %5094
        %5098 = vset.pattern.permute.xlu0 0
        %5099 = vperm.xlu0 %5098, %v4921
        %v5100 = vpop.permute.xlu0 %5099
        %5103 = vset.pattern.permute.xlu0 0
        %5104 = vperm.xlu0 %5103, %v4922
        %v5105 = vpop.permute.xlu0 %5104
        %5108 = vset.pattern.permute.xlu0 0
        %5109 = vperm.xlu0 %5108, %v4923
        %v5110 = vpop.permute.xlu0 %5109
        %5113 = vset.pattern.permute.xlu0 0
        %5114 = vperm.xlu0 %5113, %v4924
        %v5115 = vpop.permute.xlu0 %5114
        %v5117 = vmul.f32 %v4960, %v4925
        %v5118 = vmul.f32 %v4965, %v4926
        %v5119 = vmul.f32 %v4970, %v4927
        %v5120 = vmul.f32 %v4975, %v4928
        %v5121 = vmul.f32 %v4980, %v4929
        %v5122 = vmul.f32 %v4985, %v4930
        %v5123 = vmul.f32 %v4990, %v4931
        %v5124 = vmul.f32 %v4995, %v4932
        %v5125 = vmul.f32 %v5000, %v4933
        %v5126 = vmul.f32 %v5005, %v4934
        %v5127 = vmul.f32 %v5010, %v4935
        %v5128 = vmul.f32 %v5015, %v4936
        %v5129 = vmul.f32 %v5020, %v4937
        %v5130 = vmul.f32 %v5025, %v4938
        %v5131 = vmul.f32 %v5030, %v4939
        %v5132 = vmul.f32 %v5035, %v4940
        %v5133 = vmul.f32 %v5040, %v4941
        %v5134 = vmul.f32 %v5045, %v4942
        %v5135 = vmul.f32 %v5050, %v4943
        %v5136 = vmul.f32 %v5055, %v4944
        %v5137 = vmul.f32 %v5060, %v4945
        %v5138 = vmul.f32 %v5065, %v4946
        %v5139 = vmul.f32 %v5070, %v4947
        %v5140 = vmul.f32 %v5075, %v4948
        %v5141 = vmul.f32 %v5080, %v4949
        %v5142 = vmul.f32 %v5085, %v4950
        %v5143 = vmul.f32 %v5090, %v4951
        %v5144 = vmul.f32 %v5095, %v4952
        %v5145 = vmul.f32 %v5100, %v4953
        %v5146 = vmul.f32 %v5105, %v4954
        %v5147 = vmul.f32 %v5110, %v4955
        %v5148 = vmul.f32 %v5115, %v4956
        %v5149 = vadd.f32 %v5117, 0.0
        %v5150 = vadd.f32 %v5118, 0.0
        %v5151 = vadd.f32 %v5119, 0.0
        %v5152 = vadd.f32 %v5120, 0.0
        %v5153 = vadd.f32 %v5121, 0.0
        %v5154 = vadd.f32 %v5122, 0.0
        %v5155 = vadd.f32 %v5123, 0.0
        %v5156 = vadd.f32 %v5124, 0.0
        %v5157 = vadd.f32 %v5125, 0.0
        %v5158 = vadd.f32 %v5126, 0.0
        %v5159 = vadd.f32 %v5127, 0.0
        %v5160 = vadd.f32 %v5128, 0.0
        %v5161 = vadd.f32 %v5129, 0.0
        %v5162 = vadd.f32 %v5130, 0.0
        %v5163 = vadd.f32 %v5131, 0.0
        %v5164 = vadd.f32 %v5132, 0.0
        %v5165 = vadd.f32 %v5133, 0.0
        %v5166 = vadd.f32 %v5134, 0.0
        %v5167 = vadd.f32 %v5135, 0.0
        %v5168 = vadd.f32 %v5136, 0.0
        %v5169 = vadd.f32 %v5137, 0.0
        %v5170 = vadd.f32 %v5138, 0.0
        %v5171 = vadd.f32 %v5139, 0.0
        %v5172 = vadd.f32 %v5140, 0.0
        %v5173 = vadd.f32 %v5141, 0.0
        %v5174 = vadd.f32 %v5142, 0.0
        %v5175 = vadd.f32 %v5143, 0.0
        %v5176 = vadd.f32 %v5144, 0.0
        %v5177 = vadd.f32 %v5145, 0.0
        %v5178 = vadd.f32 %v5146, 0.0
        %v5179 = vadd.f32 %v5147, 0.0
        %v5180 = vadd.f32 %v5148, 0.0
        %s5181 = scalar_lea.vmem %s8, 256
        %v5182 = vld [vmem:[%s5181] sm:$0xff]
        %v5183 = vld [vmem:[%s5181 + $0x8] sm:$0xff]
        %v5184 = vld [vmem:[%s5181 + $0x10] sm:$0xff]
        %v5185 = vld [vmem:[%s5181 + $0x18] sm:$0xff]
        %v5186 = vld [vmem:[%s5181 + $0x20] sm:$0xff]
        %v5187 = vld [vmem:[%s5181 + $0x28] sm:$0xff]
        %v5188 = vld [vmem:[%s5181 + $0x30] sm:$0xff]
        %v5189 = vld [vmem:[%s5181 + $0x38] sm:$0xff]
        %v5190 = vld [vmem:[%s5181 + $0x40] sm:$0xff]
        %v5191 = vld [vmem:[%s5181 + $0x48] sm:$0xff]
        %v5192 = vld [vmem:[%s5181 + $0x50] sm:$0xff]
        %v5193 = vld [vmem:[%s5181 + $0x58] sm:$0xff]
        %v5194 = vld [vmem:[%s5181 + $0x60] sm:$0xff]
        %v5195 = vld [vmem:[%s5181 + $0x68] sm:$0xff]
        %v5196 = vld [vmem:[%s5181 + $0x70] sm:$0xff]
        %v5197 = vld [vmem:[%s5181 + $0x78] sm:$0xff]
        %v5198 = vld [vmem:[%s5181 + $0x80] sm:$0xff]
        %v5199 = vld [vmem:[%s5181 + $0x88] sm:$0xff]
        %v5200 = vld [vmem:[%s5181 + $0x90] sm:$0xff]
        %v5201 = vld [vmem:[%s5181 + $0x98] sm:$0xff]
        %v5202 = vld [vmem:[%s5181 + $0xa0] sm:$0xff]
        %v5203 = vld [vmem:[%s5181 + $0xa8] sm:$0xff]
        %v5204 = vld [vmem:[%s5181 + $0xb0] sm:$0xff]
        %v5205 = vld [vmem:[%s5181 + $0xb8] sm:$0xff]
        %v5206 = vld [vmem:[%s5181 + $0xc0] sm:$0xff]
        %v5207 = vld [vmem:[%s5181 + $0xc8] sm:$0xff]
        %v5208 = vld [vmem:[%s5181 + $0xd0] sm:$0xff]
        %v5209 = vld [vmem:[%s5181 + $0xd8] sm:$0xff]
        %v5210 = vld [vmem:[%s5181 + $0xe0] sm:$0xff]
        %v5211 = vld [vmem:[%s5181 + $0xe8] sm:$0xff]
        %v5212 = vld [vmem:[%s5181 + $0xf0] sm:$0xff]
        %v5213 = vld [vmem:[%s5181 + $0xf8] sm:$0xff]
        %5214 = vset.pattern.permute.xlu0 1
        %5215 = vperm.xlu0 %5214, %v4893
        %v5216 = vpop.permute.xlu0 %5215
        %5218 = vset.pattern.permute.xlu0 1
        %5219 = vperm.xlu0 %5218, %v4894
        %v5220 = vpop.permute.xlu0 %5219
        %5222 = vset.pattern.permute.xlu0 1
        %5223 = vperm.xlu0 %5222, %v4895
        %v5224 = vpop.permute.xlu0 %5223
        %5226 = vset.pattern.permute.xlu0 1
        %5227 = vperm.xlu0 %5226, %v4896
        %v5228 = vpop.permute.xlu0 %5227
        %5230 = vset.pattern.permute.xlu0 1
        %5231 = vperm.xlu0 %5230, %v4897
        %v5232 = vpop.permute.xlu0 %5231
        %5234 = vset.pattern.permute.xlu0 1
        %5235 = vperm.xlu0 %5234, %v4898
        %v5236 = vpop.permute.xlu0 %5235
        %5238 = vset.pattern.permute.xlu0 1
        %5239 = vperm.xlu0 %5238, %v4899
        %v5240 = vpop.permute.xlu0 %5239
        %5242 = vset.pattern.permute.xlu0 1
        %5243 = vperm.xlu0 %5242, %v4900
        %v5244 = vpop.permute.xlu0 %5243
        %5246 = vset.pattern.permute.xlu0 1
        %5247 = vperm.xlu0 %5246, %v4901
        %v5248 = vpop.permute.xlu0 %5247
        %5250 = vset.pattern.permute.xlu0 1
        %5251 = vperm.xlu0 %5250, %v4902
        %v5252 = vpop.permute.xlu0 %5251
        %5254 = vset.pattern.permute.xlu0 1
        %5255 = vperm.xlu0 %5254, %v4903
        %v5256 = vpop.permute.xlu0 %5255
        %5258 = vset.pattern.permute.xlu0 1
        %5259 = vperm.xlu0 %5258, %v4904
        %v5260 = vpop.permute.xlu0 %5259
        %5262 = vset.pattern.permute.xlu0 1
        %5263 = vperm.xlu0 %5262, %v4905
        %v5264 = vpop.permute.xlu0 %5263
        %5266 = vset.pattern.permute.xlu0 1
        %5267 = vperm.xlu0 %5266, %v4906
        %v5268 = vpop.permute.xlu0 %5267
        %5270 = vset.pattern.permute.xlu0 1
        %5271 = vperm.xlu0 %5270, %v4907
        %v5272 = vpop.permute.xlu0 %5271
        %5274 = vset.pattern.permute.xlu0 1
        %5275 = vperm.xlu0 %5274, %v4908
        %v5276 = vpop.permute.xlu0 %5275
        %5278 = vset.pattern.permute.xlu0 1
        %5279 = vperm.xlu0 %5278, %v4909
        %v5280 = vpop.permute.xlu0 %5279
        %5282 = vset.pattern.permute.xlu0 1
        %5283 = vperm.xlu0 %5282, %v4910
        %v5284 = vpop.permute.xlu0 %5283
        %5286 = vset.pattern.permute.xlu0 1
        %5287 = vperm.xlu0 %5286, %v4911
        %v5288 = vpop.permute.xlu0 %5287
        %5290 = vset.pattern.permute.xlu0 1
        %5291 = vperm.xlu0 %5290, %v4912
        %v5292 = vpop.permute.xlu0 %5291
        %5294 = vset.pattern.permute.xlu0 1
        %5295 = vperm.xlu0 %5294, %v4913
        %v5296 = vpop.permute.xlu0 %5295
        %5298 = vset.pattern.permute.xlu0 1
        %5299 = vperm.xlu0 %5298, %v4914
        %v5300 = vpop.permute.xlu0 %5299
        %5302 = vset.pattern.permute.xlu0 1
        %5303 = vperm.xlu0 %5302, %v4915
        %v5304 = vpop.permute.xlu0 %5303
        %5306 = vset.pattern.permute.xlu0 1
        %5307 = vperm.xlu0 %5306, %v4916
        %v5308 = vpop.permute.xlu0 %5307
        %5310 = vset.pattern.permute.xlu0 1
        %5311 = vperm.xlu0 %5310, %v4917
        %v5312 = vpop.permute.xlu0 %5311
        %5314 = vset.pattern.permute.xlu0 1
        %5315 = vperm.xlu0 %5314, %v4918
        %v5316 = vpop.permute.xlu0 %5315
        %5318 = vset.pattern.permute.xlu0 1
        %5319 = vperm.xlu0 %5318, %v4919
        %v5320 = vpop.permute.xlu0 %5319
        %5322 = vset.pattern.permute.xlu0 1
        %5323 = vperm.xlu0 %5322, %v4920
        %v5324 = vpop.permute.xlu0 %5323
        %5326 = vset.pattern.permute.xlu0 1
        %5327 = vperm.xlu0 %5326, %v4921
        %v5328 = vpop.permute.xlu0 %5327
        %5330 = vset.pattern.permute.xlu0 1
        %5331 = vperm.xlu0 %5330, %v4922
        %v5332 = vpop.permute.xlu0 %5331
        %5334 = vset.pattern.permute.xlu0 1
        %5335 = vperm.xlu0 %5334, %v4923
        %v5336 = vpop.permute.xlu0 %5335
        %5338 = vset.pattern.permute.xlu0 1
        %5339 = vperm.xlu0 %5338, %v4924
        %v5340 = vpop.permute.xlu0 %5339
        %v5342 = vmul.f32 %v5216, %v5182
        %v5343 = vmul.f32 %v5220, %v5183
        %v5344 = vmul.f32 %v5224, %v5184
        %v5345 = vmul.f32 %v5228, %v5185
        %v5346 = vmul.f32 %v5232, %v5186
        %v5347 = vmul.f32 %v5236, %v5187
        %v5348 = vmul.f32 %v5240, %v5188
        %v5349 = vmul.f32 %v5244, %v5189
        %v5350 = vmul.f32 %v5248, %v5190
        %v5351 = vmul.f32 %v5252, %v5191
        %v5352 = vmul.f32 %v5256, %v5192
        %v5353 = vmul.f32 %v5260, %v5193
        %v5354 = vmul.f32 %v5264, %v5194
        %v5355 = vmul.f32 %v5268, %v5195
        %v5356 = vmul.f32 %v5272, %v5196
        %v5357 = vmul.f32 %v5276, %v5197
        %v5358 = vmul.f32 %v5280, %v5198
        %v5359 = vmul.f32 %v5284, %v5199
        %v5360 = vmul.f32 %v5288, %v5200
        %v5361 = vmul.f32 %v5292, %v5201
        %v5362 = vmul.f32 %v5296, %v5202
        %v5363 = vmul.f32 %v5300, %v5203
        %v5364 = vmul.f32 %v5304, %v5204
        %v5365 = vmul.f32 %v5308, %v5205
        %v5366 = vmul.f32 %v5312, %v5206
        %v5367 = vmul.f32 %v5316, %v5207
        %v5368 = vmul.f32 %v5320, %v5208
        %v5369 = vmul.f32 %v5324, %v5209
        %v5370 = vmul.f32 %v5328, %v5210
        %v5371 = vmul.f32 %v5332, %v5211
        %v5372 = vmul.f32 %v5336, %v5212
        %v5373 = vmul.f32 %v5340, %v5213
        %v5374 = vadd.f32 %v5149, %v5342
        %v5375 = vadd.f32 %v5150, %v5343
        %v5376 = vadd.f32 %v5151, %v5344
        %v5377 = vadd.f32 %v5152, %v5345
        %v5378 = vadd.f32 %v5153, %v5346
        %v5379 = vadd.f32 %v5154, %v5347
        %v5380 = vadd.f32 %v5155, %v5348
        %v5381 = vadd.f32 %v5156, %v5349
        %v5382 = vadd.f32 %v5157, %v5350
        %v5383 = vadd.f32 %v5158, %v5351
        %v5384 = vadd.f32 %v5159, %v5352
        %v5385 = vadd.f32 %v5160, %v5353
        %v5386 = vadd.f32 %v5161, %v5354
        %v5387 = vadd.f32 %v5162, %v5355
        %v5388 = vadd.f32 %v5163, %v5356
        %v5389 = vadd.f32 %v5164, %v5357
        %v5390 = vadd.f32 %v5165, %v5358
        %v5391 = vadd.f32 %v5166, %v5359
        %v5392 = vadd.f32 %v5167, %v5360
        %v5393 = vadd.f32 %v5168, %v5361
        %v5394 = vadd.f32 %v5169, %v5362
        %v5395 = vadd.f32 %v5170, %v5363
        %v5396 = vadd.f32 %v5171, %v5364
        %v5397 = vadd.f32 %v5172, %v5365
        %v5398 = vadd.f32 %v5173, %v5366
        %v5399 = vadd.f32 %v5174, %v5367
        %v5400 = vadd.f32 %v5175, %v5368
        %v5401 = vadd.f32 %v5176, %v5369
        %v5402 = vadd.f32 %v5177, %v5370
        %v5403 = vadd.f32 %v5178, %v5371
        %v5404 = vadd.f32 %v5179, %v5372
        %v5405 = vadd.f32 %v5180, %v5373
        %s5406 = scalar_lea.vmem %s8, 512
        %v5407 = vld [vmem:[%s5406] sm:$0xff]
        %v5408 = vld [vmem:[%s5406 + $0x8] sm:$0xff]
        %v5409 = vld [vmem:[%s5406 + $0x10] sm:$0xff]
        %v5410 = vld [vmem:[%s5406 + $0x18] sm:$0xff]
        %v5411 = vld [vmem:[%s5406 + $0x20] sm:$0xff]
        %v5412 = vld [vmem:[%s5406 + $0x28] sm:$0xff]
        %v5413 = vld [vmem:[%s5406 + $0x30] sm:$0xff]
        %v5414 = vld [vmem:[%s5406 + $0x38] sm:$0xff]
        %v5415 = vld [vmem:[%s5406 + $0x40] sm:$0xff]
        %v5416 = vld [vmem:[%s5406 + $0x48] sm:$0xff]
        %v5417 = vld [vmem:[%s5406 + $0x50] sm:$0xff]
        %v5418 = vld [vmem:[%s5406 + $0x58] sm:$0xff]
        %v5419 = vld [vmem:[%s5406 + $0x60] sm:$0xff]
        %v5420 = vld [vmem:[%s5406 + $0x68] sm:$0xff]
        %v5421 = vld [vmem:[%s5406 + $0x70] sm:$0xff]
        %v5422 = vld [vmem:[%s5406 + $0x78] sm:$0xff]
        %v5423 = vld [vmem:[%s5406 + $0x80] sm:$0xff]
        %v5424 = vld [vmem:[%s5406 + $0x88] sm:$0xff]
        %v5425 = vld [vmem:[%s5406 + $0x90] sm:$0xff]
        %v5426 = vld [vmem:[%s5406 + $0x98] sm:$0xff]
        %v5427 = vld [vmem:[%s5406 + $0xa0] sm:$0xff]
        %v5428 = vld [vmem:[%s5406 + $0xa8] sm:$0xff]
        %v5429 = vld [vmem:[%s5406 + $0xb0] sm:$0xff]
        %v5430 = vld [vmem:[%s5406 + $0xb8] sm:$0xff]
        %v5431 = vld [vmem:[%s5406 + $0xc0] sm:$0xff]
        %v5432 = vld [vmem:[%s5406 + $0xc8] sm:$0xff]
        %v5433 = vld [vmem:[%s5406 + $0xd0] sm:$0xff]
        %v5434 = vld [vmem:[%s5406 + $0xd8] sm:$0xff]
        %v5435 = vld [vmem:[%s5406 + $0xe0] sm:$0xff]
        %v5436 = vld [vmem:[%s5406 + $0xe8] sm:$0xff]
        %v5437 = vld [vmem:[%s5406 + $0xf0] sm:$0xff]
        %v5438 = vld [vmem:[%s5406 + $0xf8] sm:$0xff]
        %5439 = vset.pattern.permute.xlu0 2
        %5440 = vperm.xlu0 %5439, %v4893
        %v5441 = vpop.permute.xlu0 %5440
        %5443 = vset.pattern.permute.xlu0 2
        %5444 = vperm.xlu0 %5443, %v4894
        %v5445 = vpop.permute.xlu0 %5444
        %5447 = vset.pattern.permute.xlu0 2
        %5448 = vperm.xlu0 %5447, %v4895
        %v5449 = vpop.permute.xlu0 %5448
        %5451 = vset.pattern.permute.xlu0 2
        %5452 = vperm.xlu0 %5451, %v4896
        %v5453 = vpop.permute.xlu0 %5452
        %5455 = vset.pattern.permute.xlu0 2
        %5456 = vperm.xlu0 %5455, %v4897
        %v5457 = vpop.permute.xlu0 %5456
        %5459 = vset.pattern.permute.xlu0 2
        %5460 = vperm.xlu0 %5459, %v4898
        %v5461 = vpop.permute.xlu0 %5460
        %5463 = vset.pattern.permute.xlu0 2
        %5464 = vperm.xlu0 %5463, %v4899
        %v5465 = vpop.permute.xlu0 %5464
        %5467 = vset.pattern.permute.xlu0 2
        %5468 = vperm.xlu0 %5467, %v4900
        %v5469 = vpop.permute.xlu0 %5468
        %5471 = vset.pattern.permute.xlu0 2
        %5472 = vperm.xlu0 %5471, %v4901
        %v5473 = vpop.permute.xlu0 %5472
        %5475 = vset.pattern.permute.xlu0 2
        %5476 = vperm.xlu0 %5475, %v4902
        %v5477 = vpop.permute.xlu0 %5476
        %5479 = vset.pattern.permute.xlu0 2
        %5480 = vperm.xlu0 %5479, %v4903
        %v5481 = vpop.permute.xlu0 %5480
        %5483 = vset.pattern.permute.xlu0 2
        %5484 = vperm.xlu0 %5483, %v4904
        %v5485 = vpop.permute.xlu0 %5484
        %5487 = vset.pattern.permute.xlu0 2
        %5488 = vperm.xlu0 %5487, %v4905
        %v5489 = vpop.permute.xlu0 %5488
        %5491 = vset.pattern.permute.xlu0 2
        %5492 = vperm.xlu0 %5491, %v4906
        %v5493 = vpop.permute.xlu0 %5492
        %5495 = vset.pattern.permute.xlu0 2
        %5496 = vperm.xlu0 %5495, %v4907
        %v5497 = vpop.permute.xlu0 %5496
        %5499 = vset.pattern.permute.xlu0 2
        %5500 = vperm.xlu0 %5499, %v4908
        %v5501 = vpop.permute.xlu0 %5500
        %5503 = vset.pattern.permute.xlu0 2
        %5504 = vperm.xlu0 %5503, %v4909
        %v5505 = vpop.permute.xlu0 %5504
        %5507 = vset.pattern.permute.xlu0 2
        %5508 = vperm.xlu0 %5507, %v4910
        %v5509 = vpop.permute.xlu0 %5508
        %5511 = vset.pattern.permute.xlu0 2
        %5512 = vperm.xlu0 %5511, %v4911
        %v5513 = vpop.permute.xlu0 %5512
        %5515 = vset.pattern.permute.xlu0 2
        %5516 = vperm.xlu0 %5515, %v4912
        %v5517 = vpop.permute.xlu0 %5516
        %5519 = vset.pattern.permute.xlu0 2
        %5520 = vperm.xlu0 %5519, %v4913
        %v5521 = vpop.permute.xlu0 %5520
        %5523 = vset.pattern.permute.xlu0 2
        %5524 = vperm.xlu0 %5523, %v4914
        %v5525 = vpop.permute.xlu0 %5524
        %5527 = vset.pattern.permute.xlu0 2
        %5528 = vperm.xlu0 %5527, %v4915
        %v5529 = vpop.permute.xlu0 %5528
        %5531 = vset.pattern.permute.xlu0 2
        %5532 = vperm.xlu0 %5531, %v4916
        %v5533 = vpop.permute.xlu0 %5532
        %5535 = vset.pattern.permute.xlu0 2
        %5536 = vperm.xlu0 %5535, %v4917
        %v5537 = vpop.permute.xlu0 %5536
        %5539 = vset.pattern.permute.xlu0 2
        %5540 = vperm.xlu0 %5539, %v4918
        %v5541 = vpop.permute.xlu0 %5540
        %5543 = vset.pattern.permute.xlu0 2
        %5544 = vperm.xlu0 %5543, %v4919
        %v5545 = vpop.permute.xlu0 %5544
        %5547 = vset.pattern.permute.xlu0 2
        %5548 = vperm.xlu0 %5547, %v4920
        %v5549 = vpop.permute.xlu0 %5548
        %5551 = vset.pattern.permute.xlu0 2
        %5552 = vperm.xlu0 %5551, %v4921
        %v5553 = vpop.permute.xlu0 %5552
        %5555 = vset.pattern.permute.xlu0 2
        %5556 = vperm.xlu0 %5555, %v4922
        %v5557 = vpop.permute.xlu0 %5556
        %5559 = vset.pattern.permute.xlu0 2
        %5560 = vperm.xlu0 %5559, %v4923
        %v5561 = vpop.permute.xlu0 %5560
        %5563 = vset.pattern.permute.xlu0 2
        %5564 = vperm.xlu0 %5563, %v4924
        %v5565 = vpop.permute.xlu0 %5564
        %v5567 = vmul.f32 %v5441, %v5407
        %v5568 = vmul.f32 %v5445, %v5408
        %v5569 = vmul.f32 %v5449, %v5409
        %v5570 = vmul.f32 %v5453, %v5410
        %v5571 = vmul.f32 %v5457, %v5411
        %v5572 = vmul.f32 %v5461, %v5412
        %v5573 = vmul.f32 %v5465, %v5413
        %v5574 = vmul.f32 %v5469, %v5414
        %v5575 = vmul.f32 %v5473, %v5415
        %v5576 = vmul.f32 %v5477, %v5416
        %v5577 = vmul.f32 %v5481, %v5417
        %v5578 = vmul.f32 %v5485, %v5418
        %v5579 = vmul.f32 %v5489, %v5419
        %v5580 = vmul.f32 %v5493, %v5420
        %v5581 = vmul.f32 %v5497, %v5421
        %v5582 = vmul.f32 %v5501, %v5422
        %v5583 = vmul.f32 %v5505, %v5423
        %v5584 = vmul.f32 %v5509, %v5424
        %v5585 = vmul.f32 %v5513, %v5425
        %v5586 = vmul.f32 %v5517, %v5426
        %v5587 = vmul.f32 %v5521, %v5427
        %v5588 = vmul.f32 %v5525, %v5428
        %v5589 = vmul.f32 %v5529, %v5429
        %v5590 = vmul.f32 %v5533, %v5430
        %v5591 = vmul.f32 %v5537, %v5431
        %v5592 = vmul.f32 %v5541, %v5432
        %v5593 = vmul.f32 %v5545, %v5433
        %v5594 = vmul.f32 %v5549, %v5434
        %v5595 = vmul.f32 %v5553, %v5435
        %v5596 = vmul.f32 %v5557, %v5436
        %v5597 = vmul.f32 %v5561, %v5437
        %v5598 = vmul.f32 %v5565, %v5438
        %v5599 = vadd.f32 %v5374, %v5567
        %v5600 = vadd.f32 %v5375, %v5568
        %v5601 = vadd.f32 %v5376, %v5569
        %v5602 = vadd.f32 %v5377, %v5570
        %v5603 = vadd.f32 %v5378, %v5571
        %v5604 = vadd.f32 %v5379, %v5572
        %v5605 = vadd.f32 %v5380, %v5573
        %v5606 = vadd.f32 %v5381, %v5574
        %v5607 = vadd.f32 %v5382, %v5575
        %v5608 = vadd.f32 %v5383, %v5576
        %v5609 = vadd.f32 %v5384, %v5577
        %v5610 = vadd.f32 %v5385, %v5578
        %v5611 = vadd.f32 %v5386, %v5579
        %v5612 = vadd.f32 %v5387, %v5580
        %v5613 = vadd.f32 %v5388, %v5581
        %v5614 = vadd.f32 %v5389, %v5582
        %v5615 = vadd.f32 %v5390, %v5583
        %v5616 = vadd.f32 %v5391, %v5584
        %v5617 = vadd.f32 %v5392, %v5585
        %v5618 = vadd.f32 %v5393, %v5586
        %v5619 = vadd.f32 %v5394, %v5587
        %v5620 = vadd.f32 %v5395, %v5588
        %v5621 = vadd.f32 %v5396, %v5589
        %v5622 = vadd.f32 %v5397, %v5590
        %v5623 = vadd.f32 %v5398, %v5591
        %v5624 = vadd.f32 %v5399, %v5592
        %v5625 = vadd.f32 %v5400, %v5593
        %v5626 = vadd.f32 %v5401, %v5594
        %v5627 = vadd.f32 %v5402, %v5595
        %v5628 = vadd.f32 %v5403, %v5596
        %v5629 = vadd.f32 %v5404, %v5597
        %v5630 = vadd.f32 %v5405, %v5598
        %s5631 = scalar_lea.vmem %s8, 768
        %v5632 = vld [vmem:[%s5631] sm:$0xff]
        %v5633 = vld [vmem:[%s5631 + $0x8] sm:$0xff]
        %v5634 = vld [vmem:[%s5631 + $0x10] sm:$0xff]
        %v5635 = vld [vmem:[%s5631 + $0x18] sm:$0xff]
        %v5636 = vld [vmem:[%s5631 + $0x20] sm:$0xff]
        %v5637 = vld [vmem:[%s5631 + $0x28] sm:$0xff]
        %v5638 = vld [vmem:[%s5631 + $0x30] sm:$0xff]
        %v5639 = vld [vmem:[%s5631 + $0x38] sm:$0xff]
        %v5640 = vld [vmem:[%s5631 + $0x40] sm:$0xff]
        %v5641 = vld [vmem:[%s5631 + $0x48] sm:$0xff]
        %v5642 = vld [vmem:[%s5631 + $0x50] sm:$0xff]
        %v5643 = vld [vmem:[%s5631 + $0x58] sm:$0xff]
        %v5644 = vld [vmem:[%s5631 + $0x60] sm:$0xff]
        %v5645 = vld [vmem:[%s5631 + $0x68] sm:$0xff]
        %v5646 = vld [vmem:[%s5631 + $0x70] sm:$0xff]
        %v5647 = vld [vmem:[%s5631 + $0x78] sm:$0xff]
        %v5648 = vld [vmem:[%s5631 + $0x80] sm:$0xff]
        %v5649 = vld [vmem:[%s5631 + $0x88] sm:$0xff]
        %v5650 = vld [vmem:[%s5631 + $0x90] sm:$0xff]
        %v5651 = vld [vmem:[%s5631 + $0x98] sm:$0xff]
        %v5652 = vld [vmem:[%s5631 + $0xa0] sm:$0xff]
        %v5653 = vld [vmem:[%s5631 + $0xa8] sm:$0xff]
        %v5654 = vld [vmem:[%s5631 + $0xb0] sm:$0xff]
        %v5655 = vld [vmem:[%s5631 + $0xb8] sm:$0xff]
        %v5656 = vld [vmem:[%s5631 + $0xc0] sm:$0xff]
        %v5657 = vld [vmem:[%s5631 + $0xc8] sm:$0xff]
        %v5658 = vld [vmem:[%s5631 + $0xd0] sm:$0xff]
        %v5659 = vld [vmem:[%s5631 + $0xd8] sm:$0xff]
        %v5660 = vld [vmem:[%s5631 + $0xe0] sm:$0xff]
        %v5661 = vld [vmem:[%s5631 + $0xe8] sm:$0xff]
        %v5662 = vld [vmem:[%s5631 + $0xf0] sm:$0xff]
        %v5663 = vld [vmem:[%s5631 + $0xf8] sm:$0xff]
        %5664 = vset.pattern.permute.xlu0 3
        %5665 = vperm.xlu0 %5664, %v4893
        %v5666 = vpop.permute.xlu0 %5665
        %5668 = vset.pattern.permute.xlu0 3
        %5669 = vperm.xlu0 %5668, %v4894
        %v5670 = vpop.permute.xlu0 %5669
        %5672 = vset.pattern.permute.xlu0 3
        %5673 = vperm.xlu0 %5672, %v4895
        %v5674 = vpop.permute.xlu0 %5673
        %5676 = vset.pattern.permute.xlu0 3
        %5677 = vperm.xlu0 %5676, %v4896
        %v5678 = vpop.permute.xlu0 %5677
        %5680 = vset.pattern.permute.xlu0 3
        %5681 = vperm.xlu0 %5680, %v4897
        %v5682 = vpop.permute.xlu0 %5681
        %5684 = vset.pattern.permute.xlu0 3
        %5685 = vperm.xlu0 %5684, %v4898
        %v5686 = vpop.permute.xlu0 %5685
        %5688 = vset.pattern.permute.xlu0 3
        %5689 = vperm.xlu0 %5688, %v4899
        %v5690 = vpop.permute.xlu0 %5689
        %5692 = vset.pattern.permute.xlu0 3
        %5693 = vperm.xlu0 %5692, %v4900
        %v5694 = vpop.permute.xlu0 %5693
        %5696 = vset.pattern.permute.xlu0 3
        %5697 = vperm.xlu0 %5696, %v4901
        %v5698 = vpop.permute.xlu0 %5697
        %5700 = vset.pattern.permute.xlu0 3
        %5701 = vperm.xlu0 %5700, %v4902
        %v5702 = vpop.permute.xlu0 %5701
        %5704 = vset.pattern.permute.xlu0 3
        %5705 = vperm.xlu0 %5704, %v4903
        %v5706 = vpop.permute.xlu0 %5705
        %5708 = vset.pattern.permute.xlu0 3
        %5709 = vperm.xlu0 %5708, %v4904
        %v5710 = vpop.permute.xlu0 %5709
        %5712 = vset.pattern.permute.xlu0 3
        %5713 = vperm.xlu0 %5712, %v4905
        %v5714 = vpop.permute.xlu0 %5713
        %5716 = vset.pattern.permute.xlu0 3
        %5717 = vperm.xlu0 %5716, %v4906
        %v5718 = vpop.permute.xlu0 %5717
        %5720 = vset.pattern.permute.xlu0 3
        %5721 = vperm.xlu0 %5720, %v4907
        %v5722 = vpop.permute.xlu0 %5721
        %5724 = vset.pattern.permute.xlu0 3
        %5725 = vperm.xlu0 %5724, %v4908
        %v5726 = vpop.permute.xlu0 %5725
        %5728 = vset.pattern.permute.xlu0 3
        %5729 = vperm.xlu0 %5728, %v4909
        %v5730 = vpop.permute.xlu0 %5729
        %5732 = vset.pattern.permute.xlu0 3
        %5733 = vperm.xlu0 %5732, %v4910
        %v5734 = vpop.permute.xlu0 %5733
        %5736 = vset.pattern.permute.xlu0 3
        %5737 = vperm.xlu0 %5736, %v4911
        %v5738 = vpop.permute.xlu0 %5737
        %5740 = vset.pattern.permute.xlu0 3
        %5741 = vperm.xlu0 %5740, %v4912
        %v5742 = vpop.permute.xlu0 %5741
        %5744 = vset.pattern.permute.xlu0 3
        %5745 = vperm.xlu0 %5744, %v4913
        %v5746 = vpop.permute.xlu0 %5745
        %5748 = vset.pattern.permute.xlu0 3
        %5749 = vperm.xlu0 %5748, %v4914
        %v5750 = vpop.permute.xlu0 %5749
        %5752 = vset.pattern.permute.xlu0 3
        %5753 = vperm.xlu0 %5752, %v4915
        %v5754 = vpop.permute.xlu0 %5753
        %5756 = vset.pattern.permute.xlu0 3
        %5757 = vperm.xlu0 %5756, %v4916
        %v5758 = vpop.permute.xlu0 %5757
        %5760 = vset.pattern.permute.xlu0 3
        %5761 = vperm.xlu0 %5760, %v4917
        %v5762 = vpop.permute.xlu0 %5761
        %5764 = vset.pattern.permute.xlu0 3
        %5765 = vperm.xlu0 %5764, %v4918
        %v5766 = vpop.permute.xlu0 %5765
        %5768 = vset.pattern.permute.xlu0 3
        %5769 = vperm.xlu0 %5768, %v4919
        %v5770 = vpop.permute.xlu0 %5769
        %5772 = vset.pattern.permute.xlu0 3
        %5773 = vperm.xlu0 %5772, %v4920
        %v5774 = vpop.permute.xlu0 %5773
        %5776 = vset.pattern.permute.xlu0 3
        %5777 = vperm.xlu0 %5776, %v4921
        %v5778 = vpop.permute.xlu0 %5777
        %5780 = vset.pattern.permute.xlu0 3
        %5781 = vperm.xlu0 %5780, %v4922
        %v5782 = vpop.permute.xlu0 %5781
        %5784 = vset.pattern.permute.xlu0 3
        %5785 = vperm.xlu0 %5784, %v4923
        %v5786 = vpop.permute.xlu0 %5785
        %5788 = vset.pattern.permute.xlu0 3
        %5789 = vperm.xlu0 %5788, %v4924
        %v5790 = vpop.permute.xlu0 %5789
        %v5792 = vmul.f32 %v5666, %v5632
        %v5793 = vmul.f32 %v5670, %v5633
        %v5794 = vmul.f32 %v5674, %v5634
        %v5795 = vmul.f32 %v5678, %v5635
        %v5796 = vmul.f32 %v5682, %v5636
        %v5797 = vmul.f32 %v5686, %v5637
        %v5798 = vmul.f32 %v5690, %v5638
        %v5799 = vmul.f32 %v5694, %v5639
        %v5800 = vmul.f32 %v5698, %v5640
        %v5801 = vmul.f32 %v5702, %v5641
        %v5802 = vmul.f32 %v5706, %v5642
        %v5803 = vmul.f32 %v5710, %v5643
        %v5804 = vmul.f32 %v5714, %v5644
        %v5805 = vmul.f32 %v5718, %v5645
        %v5806 = vmul.f32 %v5722, %v5646
        %v5807 = vmul.f32 %v5726, %v5647
        %v5808 = vmul.f32 %v5730, %v5648
        %v5809 = vmul.f32 %v5734, %v5649
        %v5810 = vmul.f32 %v5738, %v5650
        %v5811 = vmul.f32 %v5742, %v5651
        %v5812 = vmul.f32 %v5746, %v5652
        %v5813 = vmul.f32 %v5750, %v5653
        %v5814 = vmul.f32 %v5754, %v5654
        %v5815 = vmul.f32 %v5758, %v5655
        %v5816 = vmul.f32 %v5762, %v5656
        %v5817 = vmul.f32 %v5766, %v5657
        %v5818 = vmul.f32 %v5770, %v5658
        %v5819 = vmul.f32 %v5774, %v5659
        %v5820 = vmul.f32 %v5778, %v5660
        %v5821 = vmul.f32 %v5782, %v5661
        %v5822 = vmul.f32 %v5786, %v5662
        %v5823 = vmul.f32 %v5790, %v5663
        %v5824 = vadd.f32 %v5599, %v5792
        %v5825 = vadd.f32 %v5600, %v5793
        %v5826 = vadd.f32 %v5601, %v5794
        %v5827 = vadd.f32 %v5602, %v5795
        %v5828 = vadd.f32 %v5603, %v5796
        %v5829 = vadd.f32 %v5604, %v5797
        %v5830 = vadd.f32 %v5605, %v5798
        %v5831 = vadd.f32 %v5606, %v5799
        %v5832 = vadd.f32 %v5607, %v5800
        %v5833 = vadd.f32 %v5608, %v5801
        %v5834 = vadd.f32 %v5609, %v5802
        %v5835 = vadd.f32 %v5610, %v5803
        %v5836 = vadd.f32 %v5611, %v5804
        %v5837 = vadd.f32 %v5612, %v5805
        %v5838 = vadd.f32 %v5613, %v5806
        %v5839 = vadd.f32 %v5614, %v5807
        %v5840 = vadd.f32 %v5615, %v5808
        %v5841 = vadd.f32 %v5616, %v5809
        %v5842 = vadd.f32 %v5617, %v5810
        %v5843 = vadd.f32 %v5618, %v5811
        %v5844 = vadd.f32 %v5619, %v5812
        %v5845 = vadd.f32 %v5620, %v5813
        %v5846 = vadd.f32 %v5621, %v5814
        %v5847 = vadd.f32 %v5622, %v5815
        %v5848 = vadd.f32 %v5623, %v5816
        %v5849 = vadd.f32 %v5624, %v5817
        %v5850 = vadd.f32 %v5625, %v5818
        %v5851 = vadd.f32 %v5626, %v5819
        %v5852 = vadd.f32 %v5627, %v5820
        %v5853 = vadd.f32 %v5628, %v5821
        %v5854 = vadd.f32 %v5629, %v5822
        %v5855 = vadd.f32 %v5630, %v5823
        %v5856 = vsel %vm399, %v5824, 0.0
        %v5857 = vsel %vm399, %v5825, 0.0
        %v5858 = vadd.f32 %v5856, %v5857
        %v5859 = vsel %vm399, %v5826, 0.0
        %v5860 = vadd.f32 %v5858, %v5859
        %v5861 = vsel %vm399, %v5827, 0.0
        %v5862 = vadd.f32 %v5860, %v5861
        %v5863 = vsel %vm399, %v5828, 0.0
        %v5864 = vadd.f32 %v5862, %v5863
        %v5865 = vsel %vm399, %v5829, 0.0
        %v5866 = vadd.f32 %v5864, %v5865
        %v5867 = vsel %vm399, %v5830, 0.0
        %v5868 = vadd.f32 %v5866, %v5867
        %v5869 = vsel %vm399, %v5831, 0.0
        %v5870 = vadd.f32 %v5868, %v5869
        %v5871 = vsel %vm399, %v5832, 0.0
        %v5872 = vadd.f32 %v5870, %v5871
        %v5873 = vsel %vm399, %v5833, 0.0
        %v5874 = vadd.f32 %v5872, %v5873
        %v5875 = vsel %vm399, %v5834, 0.0
        %v5876 = vadd.f32 %v5874, %v5875
        %v5877 = vsel %vm399, %v5835, 0.0
        %v5878 = vadd.f32 %v5876, %v5877
        %v5879 = vsel %vm399, %v5836, 0.0
        %v5880 = vadd.f32 %v5878, %v5879
        %v5881 = vsel %vm399, %v5837, 0.0
        %v5882 = vadd.f32 %v5880, %v5881
        %v5883 = vsel %vm399, %v5838, 0.0
        %v5884 = vadd.f32 %v5882, %v5883
        %v5885 = vsel %vm399, %v5839, 0.0
        %v5886 = vadd.f32 %v5884, %v5885
        %v5887 = vsel %vm399, %v5840, 0.0
        %v5888 = vadd.f32 %v5886, %v5887
        %v5889 = vsel %vm399, %v5841, 0.0
        %v5890 = vadd.f32 %v5888, %v5889
        %v5891 = vsel %vm399, %v5842, 0.0
        %v5892 = vadd.f32 %v5890, %v5891
        %v5893 = vsel %vm399, %v5843, 0.0
        %v5894 = vadd.f32 %v5892, %v5893
        %v5895 = vsel %vm399, %v5844, 0.0
        %v5896 = vadd.f32 %v5894, %v5895
        %v5897 = vsel %vm399, %v5845, 0.0
        %v5898 = vadd.f32 %v5896, %v5897
        %v5899 = vsel %vm399, %v5846, 0.0
        %v5900 = vadd.f32 %v5898, %v5899
        %v5901 = vsel %vm399, %v5847, 0.0
        %v5902 = vadd.f32 %v5900, %v5901
        %v5903 = vsel %vm399, %v5848, 0.0
        %v5904 = vadd.f32 %v5902, %v5903
        %v5905 = vsel %vm399, %v5849, 0.0
        %v5906 = vadd.f32 %v5904, %v5905
        %v5907 = vsel %vm399, %v5850, 0.0
        %v5908 = vadd.f32 %v5906, %v5907
        %v5909 = vsel %vm399, %v5851, 0.0
        %v5910 = vadd.f32 %v5908, %v5909
        %v5911 = vsel %vm399, %v5852, 0.0
        %v5912 = vadd.f32 %v5910, %v5911
        %v5913 = vsel %vm399, %v5853, 0.0
        %v5914 = vadd.f32 %v5912, %v5913
        %v5915 = vsel %vm399, %v5854, 0.0
        %v5916 = vadd.f32 %v5914, %v5915
        %v5917 = vsel %vm399, %v5855, 0.0
        %v5918 = vadd.f32 %v5916, %v5917
        %v5919 = vrot.slane %v5918, 4
        %v5920 = vadd.f32 %v5918, %v5919
        %v5921 = vrot.slane %v5920, 2
        %v5922 = vadd.f32 %v5920, %v5921
        %v5923 = vrot.slane %v5922, 1
        %v5924 = vadd.f32 %v5922, %v5923
        %v5925 = vld [vmem:[%s9] sm:$0x1]
        %v5926 = vadd.f32 %v5924, %v5925
        %5927 = vst.msk [vmem:[%s379] sm:$0x1] %vm410, %v5926
        %s5928 = sand.u32 %s249, 1
        %s5929 = scalar_lea.sflag [#allocation5], %s5928
        %s5930 = sand.u32 %s249, 1
        %s5931 = scalar_lea.vmem [#allocation4], %s5930
        %s5932 = smul.u32 32, %s26
        %p5933 = scmp.lt.s32.totalorder %s5932, 63
        %s5934 = scalar_select %p5933, %s5932, 63
        %s5935 = smul.addr %s5934, 8
        %s5936 = scalar_lea.vmem %s11, %s5935
        // Predicated region
        $region61: #{_fused_forward.1} parent=59 // pred_check
          %p5937 = pneg %p259
        $region62: #{_fused_forward.1} parent=59 // pred_check_branch
          %5939 = sbr.rel (%p5937) target = $region64
        $region63: #{_fused_forward.1} parent=59 // pred_region
          %s5941 = ssub.s32 16, 16
          %5942 = vsyncadd %s5929, %s5941
          %s5943 = smul.addr %s26, 16
          %s5944 = scalar_lea.hbm %s10, %s5943
          %s5946 = sshll.u32 %s5931, 4
          %s5947 = int_to_ptr.vmem [resolvable:$true] %s5946
          %5949 = dma.vmem_to_hbm [thread:$0]  %s5947, 16, %s5944, %s5929
        $region64: #{_fused_forward.1} parent=59 // pred_fallthru
          _
        // Predicated region
        $region65: #{_fused_forward.1} parent=59 // pred_check
          %p5950 = pneg %p285
        $region66: #{_fused_forward.1} parent=59 // pred_check_branch
          %5952 = sbr.rel (%p5950) target = $region68
        $region67: #{_fused_forward.1} parent=59 // pred_region
          %s5953 = smul.u32 32, %s26
        $region68: #{_fused_forward.1} parent=59 // pred_fallthru
          _
      $region60: #{_fused_forward.1} parent=5 // pred_fallthru
        _
      %p5954 = scmp.le.s32.totalorder 2, %s21
      // Predicated region
      $region69: #{_fused_forward.1} parent=5 // pred_check
        %p5955 = pneg %p5954
      $region70: #{_fused_forward.1} parent=5 // pred_check_branch
        %5957 = sbr.rel (%p5955) target = $region72
      $region71: #{_fused_forward.1} parent=5 // pred_region
        %s5958 = ssub.s32 %s21, 2
        // Predicated region
        $region73: #{_fused_forward.1} parent=71 // pred_check
          %p5959 = pneg %p265
        $region74: #{_fused_forward.1} parent=71 // pred_check_branch
          %5961 = sbr.rel (%p5959) target = $region76
        $region75: #{_fused_forward.1} parent=71 // pred_region
          %s5962 = sand.u32 %s250, 1
          %s5963 = scalar_lea.sflag [#allocation5], %s5962
          %s5964 = sand.u32 %s250, 1
          %s5965 = scalar_lea.vmem [#allocation4], %s5964
          %5966 = dma.done %s5963, 16
        $region76: #{_fused_forward.1} parent=71 // pred_fallthru
          _
        // Predicated region
        $region77: #{_fused_forward.1} parent=71 // pred_check
          %p5967 = pneg %p291
        $region78: #{_fused_forward.1} parent=71 // pred_check_branch
          %5969 = sbr.rel (%p5967) target = $region80
        $region79: #{_fused_forward.1} parent=71 // pred_region
          %s5970 = smul.u32 32, %s27
          %p5971 = scmp.lt.s32.totalorder %s5970, 63
          %s5972 = scalar_select %p5971, %s5970, 63
          %s5973 = smul.addr %s5972, 8
          %s5974 = scalar_lea.vmem %s11, %s5973
        $region80: #{_fused_forward.1} parent=71 // pred_fallthru
          _
      $region72: #{_fused_forward.1} parent=5 // pred_fallthru
        _
    $region6: #{_fused_forward.1} parent=1 // loop_footer
      %s25 = sadd.s32 1, %s21
    $region7: #{_fused_forward.1} parent=1 // loop_footer_branch
      %20 = sbr.rel target = $region3
    $region8: #{_fused_forward.1} parent=1 // loop_exit
      _
    %5975 = vsyncpa [#allocation5], 1
    %s5976 = scalar_lea.sflag [#allocation5], 1
    %5977 = vsyncpa %s5976, 1

</llo_original>
